<compile_context>
chip_gen: v7x
topology: tpu7x:2x2x1
jax: 0.10.0
libtpu: 0.0.40
codegen_flags: <defaults>
</compile_context>

<pallas_src>
import functools

import jax
import jax.numpy as jnp
from jax.experimental import pallas as pl
from jax.experimental.pallas import tpu as pltpu


_BP = 8       # padded batch (sublane multiple)
_LANE = 128   # lane width: input / hidden / output dims padded to this


# ------------------------------------------------------------------ kernel

def _fused_lstm_kernel(x_ref, wih1_ref, whh1_ref, b1_ref,
                       wih2_ref, whh2_ref, b2_ref,
                       wout_ref, bout_ref, o_ref,
                       xg_scr, h1_scr, h2_scr, *, seq_len, b_pad):
    """Fused 2-layer LSTM + Linear.  Everything lives in VMEM.

    Packed gate layout (lane-aligned, width Hp=128 per gate): [i, f, o, g].
    """
    Hp = h1_scr.shape[-1]

    def input_proj(x2d, wih_ref, b_ref):
        # Batched over all seq*batch rows: (S*Bp, K) @ (K, 4*Hp) + bias.
        xg_scr[...] = (jnp.dot(x2d, wih_ref[...],
                               preferred_element_type=jnp.float32)
                       + b_ref[...])

    def recurrence(whh_ref, h_out_scr):
        h = jnp.zeros((b_pad, Hp), jnp.float32)
        c = jnp.zeros((b_pad, Hp), jnp.float32)
        for t in range(seq_len):                 # static unroll (S is small)
            row = t * b_pad                      # static, sublane-aligned
            gates = (xg_scr[row:row + b_pad, :]
                     + jnp.dot(h, whh_ref[...],
                               preferred_element_type=jnp.float32))
            sig = jax.nn.sigmoid(gates[:, :3 * Hp])      # i, f, o together
            i_g = sig[:, 0 * Hp:1 * Hp]
            f_g = sig[:, 1 * Hp:2 * Hp]
            o_g = sig[:, 2 * Hp:3 * Hp]
            g_g = jnp.tanh(gates[:, 3 * Hp:4 * Hp])
            c = f_g * c + i_g * g_g
            h = o_g * jnp.tanh(c)
            h_out_scr[row:row + b_pad, :] = h

    # ---- layer 1: hoisted batched input projection, then serial recurrence
    input_proj(x_ref[...], wih1_ref, b1_ref)
    recurrence(whh1_ref, h1_scr)

    # ---- layer 2: consumes layer-1 output straight from VMEM scratch
    input_proj(h1_scr[...], wih2_ref, b2_ref)
    recurrence(whh2_ref, h2_scr)

    # ---- final Linear over all seq*batch rows at once (lane-dense store)
    o_ref[...] = (jnp.dot(h2_scr[...], wout_ref[...],
                          preferred_element_type=jnp.float32)
                  + bout_ref[...])


# ------------------------------------------------------------------ param prep

def prepare_params(params):
    """One-time packing: transpose, pad to lane width, reorder gates from
    PyTorch (i,f,g,o) to (i,f,o,g), fold b_ih + b_hh into a single bias."""
    Hp = _LANE
    H = params["lstm"][0]["w_hh"].shape[1]
    order = (0, 1, 3, 2)   # packed gate block g <- PyTorch gate index order[g]

    def pack_w(w):         # w: (4H, d_in) PyTorch layout -> (LANE, 4*Hp)
        d_in = w.shape[1]
        out = jnp.zeros((_LANE, 4 * Hp), jnp.float32)
        for dst, src in enumerate(order):
            blk = jnp.asarray(w[src * H:(src + 1) * H, :], jnp.float32).T
            out = out.at[:d_in, dst * Hp:dst * Hp + H].set(blk)
        return out

    def pack_b(b_ih, b_hh):
        b = jnp.asarray(b_ih, jnp.float32) + jnp.asarray(b_hh, jnp.float32)
        out = jnp.zeros((1, 4 * Hp), jnp.float32)
        for dst, src in enumerate(order):
            out = out.at[0, dst * Hp:dst * Hp + H].set(b[src * H:(src + 1) * H])
        return out

    l1, l2 = params["lstm"]
    out_w = jnp.asarray(params["out_w"], jnp.float32)      # (out, H)
    out_b = jnp.asarray(params["out_b"], jnp.float32)      # (out,)
    out_sz = out_w.shape[0]
    wout = jnp.zeros((Hp, _LANE), jnp.float32).at[:H, :out_sz].set(out_w.T)
    bout = jnp.zeros((1, _LANE), jnp.float32).at[0, :out_sz].set(out_b)

    return {
        "wih1": pack_w(l1["w_ih"]), "whh1": pack_w(l1["w_hh"]),
        "b1": pack_b(l1["b_ih"], l1["b_hh"]),
        "wih2": pack_w(l2["w_ih"]), "whh2": pack_w(l2["w_hh"]),
        "b2": pack_b(l2["b_ih"], l2["b_hh"]),
        "wout": wout, "bout": bout,
        "out_size": out_sz,
    }


# ------------------------------------------------------------------ wrapper

def lstm_forward_pallas(x, prep):
    """x: (S, B, Din) time-major, as in the PyTorch module (batch_first=False)."""
    S, B, Din = x.shape
    Bp = _BP
    Dp = prep["wih1"].shape[0]
    Hp = prep["whh1"].shape[0]
    G = prep["whh1"].shape[1]          # 4*Hp
    Np = prep["wout"].shape[1]
    out_sz = prep["out_size"]

    # Pad input to (S*Bp, Dp): batch -> 8 sublanes, features -> 128 lanes.
    x_p = jnp.zeros((S, Bp, Dp), jnp.float32)
    x_p = x_p.at[:, :B, :Din].set(jnp.asarray(x, jnp.float32))
    x_p = x_p.reshape(S * Bp, Dp)

    y = pl.pallas_call(
        functools.partial(_fused_lstm_kernel, seq_len=S, b_pad=Bp),
        out_shape=jax.ShapeDtypeStruct((S * Bp, Np), jnp.float32),
        grid_spec=pltpu.PrefetchScalarGridSpec(
            num_scalar_prefetch=0,
            grid=(1,),
            in_specs=[
                pl.BlockSpec((S * Bp, Dp), lambda i: (0, 0)),   # x
                pl.BlockSpec((Dp, G), lambda i: (0, 0)),        # W_ih layer 1
                pl.BlockSpec((Hp, G), lambda i: (0, 0)),        # W_hh layer 1
                pl.BlockSpec((1, G), lambda i: (0, 0)),         # bias layer 1
                pl.BlockSpec((Hp, G), lambda i: (0, 0)),        # W_ih layer 2
                pl.BlockSpec((Hp, G), lambda i: (0, 0)),        # W_hh layer 2
                pl.BlockSpec((1, G), lambda i: (0, 0)),         # bias layer 2
                pl.BlockSpec((Hp, Np), lambda i: (0, 0)),       # W_out
                pl.BlockSpec((1, Np), lambda i: (0, 0)),        # b_out
            ],
            out_specs=pl.BlockSpec((S * Bp, Np), lambda i: (0, 0)),
            scratch_shapes=[
                pltpu.VMEM((S * Bp, G), jnp.float32),   # precomputed x-gates
                pltpu.VMEM((S * Bp, Hp), jnp.float32),  # layer-1 h sequence
                pltpu.VMEM((S * Bp, Hp), jnp.float32),  # layer-2 h sequence
            ],
        ),
        compiler_params=pltpu.CompilerParams(
            dimension_semantics=("arbitrary",)),
    )(x_p, prep["wih1"], prep["whh1"], prep["b1"],
      prep["wih2"], prep["whh2"], prep["b2"],
      prep["wout"], prep["bout"])

    # Strip batch / output-lane padding -> (S, B, out_size)
    return y.reshape(S, Bp, Np)[:, :B, :out_sz]


# ------------------------------------------------------------------ reference

def lstm_forward_ref(x, params):
    h = jnp.asarray(x, jnp.float32)
    for layer in params["lstm"]:
        w_ih, w_hh = layer["w_ih"], layer["w_hh"]
        b = layer["b_ih"] + layer["b_hh"]
        S, B, _ = h.shape
        H = w_hh.shape[1]

        def step(carry, x_t, w_ih=w_ih, w_hh=w_hh, b=b):
            hp, cp = carry
            gates = x_t @ w_ih.T + hp @ w_hh.T + b
            i, f, g, o = jnp.split(gates, 4, axis=-1)
            c = jax.nn.sigmoid(f) * cp + jax.nn.sigmoid(i) * jnp.tanh(g)
            hn = jax.nn.sigmoid(o) * jnp.tanh(c)
            return (hn, c), hn

        init = (jnp.zeros((B, H), jnp.float32), jnp.zeros((B, H), jnp.float32))
        _, h = jax.lax.scan(step, init, h)
    S, B, H = h.shape
    y = h.reshape(S * B, H) @ params["out_w"].T + params["out_b"]
    return y.reshape(S, B, -1)


# ------------------------------------------------------------------ params

def init_params(key, input_size=21, hidden_size=42, output_size=1, num_layer=2):
    bound = 1.0 / jnp.sqrt(hidden_size)
    params = {"lstm": []}
    d_in = input_size
    for _ in range(num_layer):
        key, k1, k2, k3, k4 = jax.random.split(key, 5)
        params["lstm"].append({
            "w_ih": jax.random.uniform(k1, (4 * hidden_size, d_in),
                                       jnp.float32, -bound, bound),
            "w_hh": jax.random.uniform(k2, (4 * hidden_size, hidden_size),
                                       jnp.float32, -bound, bound),
            "b_ih": jax.random.uniform(k3, (4 * hidden_size,),
                                       jnp.float32, -bound, bound),
            "b_hh": jax.random.uniform(k4, (4 * hidden_size,),
                                       jnp.float32, -bound, bound),
        })
        d_in = hidden_size
    key, k5, k6 = jax.random.split(key, 3)
    params["out_w"] = jax.random.uniform(k5, (output_size, hidden_size),
                                         jnp.float32, -bound, bound)
    params["out_b"] = jax.random.uniform(k6, (output_size,),
                                         jnp.float32, -bound, bound)
    return params


# ------------------------------------------------------------------ main

if __name__ == "__main__":
    key = jax.random.PRNGKey(0)
    key, kx = jax.random.split(key)

    seq, batch, input_size = 8, 2, 21
    x = jax.random.normal(kx, (seq, batch, input_size), jnp.float32)

    params = init_params(key)
    prep = prepare_params(params)           # one-time weight packing

    y_pallas = jax.block_until_ready(lstm_forward_pallas(x, prep))
    y_ref = jax.block_until_ready(lstm_forward_ref(x, params))

    assert y_pallas.shape == (seq, batch, 1), y_pallas.shape
    max_err = float(jnp.max(jnp.abs(y_pallas - y_ref)))
    assert jnp.allclose(y_pallas, y_ref, atol=1e-4, rtol=1e-4), max_err

    print("KERNEL_OK")
</pallas_src>

<mosaic_0001>
module attributes {stable_mosaic.version = 11 : i64} {
  func.func @_fused_lstm_kernel(%arg0: i32, %arg1: memref<64x128xf32, #tpu.memory_space<vmem>>, %arg2: memref<128x512xf32, #tpu.memory_space<vmem>>, %arg3: memref<128x512xf32, #tpu.memory_space<vmem>>, %arg4: memref<1x512xf32, #tpu.memory_space<vmem>>, %arg5: memref<128x512xf32, #tpu.memory_space<vmem>>, %arg6: memref<128x512xf32, #tpu.memory_space<vmem>>, %arg7: memref<1x512xf32, #tpu.memory_space<vmem>>, %arg8: memref<128x128xf32, #tpu.memory_space<vmem>>, %arg9: memref<1x128xf32, #tpu.memory_space<vmem>>, %arg10: memref<64x128xf32, #tpu.memory_space<vmem>>, %arg11: memref<64x512xf32, #tpu.memory_space<vmem>>, %arg12: memref<64x128xf32, #tpu.memory_space<vmem>>, %arg13: memref<64x128xf32, #tpu.memory_space<vmem>>) attributes {dimension_semantics = [#tpu.dimension_semantics<arbitrary>], iteration_bounds = array<i64: 1>, scalar_prefetch = 0 : i64, scratch_operands = 3 : i64, tpu.core_type = #tpu.core_type<tc>, window_params = [{pipeline_mode = #tpu.pipeline_mode<synchronous>, transform_indices = @transform_0, window_bounds = array<i64: 64, 128>}, {pipeline_mode = #tpu.pipeline_mode<synchronous>, transform_indices = @transform_1, window_bounds = array<i64: 128, 512>}, {pipeline_mode = #tpu.pipeline_mode<synchronous>, transform_indices = @transform_2, window_bounds = array<i64: 128, 512>}, {pipeline_mode = #tpu.pipeline_mode<synchronous>, transform_indices = @transform_3, window_bounds = array<i64: 1, 512>}, {pipeline_mode = #tpu.pipeline_mode<synchronous>, transform_indices = @transform_4, window_bounds = array<i64: 128, 512>}, {pipeline_mode = #tpu.pipeline_mode<synchronous>, transform_indices = @transform_5, window_bounds = array<i64: 128, 512>}, {pipeline_mode = #tpu.pipeline_mode<synchronous>, transform_indices = @transform_6, window_bounds = array<i64: 1, 512>}, {pipeline_mode = #tpu.pipeline_mode<synchronous>, transform_indices = @transform_7, window_bounds = array<i64: 128, 128>}, {pipeline_mode = #tpu.pipeline_mode<synchronous>, transform_indices = @transform_8, window_bounds = array<i64: 1, 128>}, {pipeline_mode = #tpu.pipeline_mode<synchronous>, transform_indices = @transform_9, window_bounds = array<i64: 64, 128>}]} {
    %c0 = arith.constant 0 : index
    %c0_0 = arith.constant 0 : index
    %0 = vector.load %arg1[%c0, %c0_0] : memref<64x128xf32, #tpu.memory_space<vmem>>, vector<64x128xf32>
    %c0_1 = arith.constant 0 : index
    %c0_2 = arith.constant 0 : index
    %1 = vector.load %arg2[%c0_1, %c0_2] : memref<128x512xf32, #tpu.memory_space<vmem>>, vector<128x512xf32>
    %cst = arith.constant dense<0.000000e+00> : vector<64x512xf32>
    %2 = tpu.matmul %0, %1, %cst {dimension_numbers = #tpu.dot_dimension_numbers<[1], [0], [0], [1], [0, 0, 1, 1], [], []>} : vector<64x128xf32>, vector<128x512xf32>, vector<64x512xf32> -> vector<64x512xf32>
    %c0_3 = arith.constant 0 : index
    %c0_4 = arith.constant 0 : index
    %3 = vector.load %arg4[%c0_3, %c0_4] : memref<1x512xf32, #tpu.memory_space<vmem>>, vector<1x512xf32>
    %4 = vector.broadcast %3 : vector<1x512xf32> to vector<64x512xf32>
    %5 = arith.addf %2, %4 : vector<64x512xf32>
    %c0_5 = arith.constant 0 : index
    %c0_6 = arith.constant 0 : index
    %6 = vector.load %arg11[%c0_5, %c0_6] : memref<64x512xf32, #tpu.memory_space<vmem>>, vector<64x512xf32>
    tpu.vector_store %arg11[%c0_5, %c0_6], %5 {strides = array<i32>} : memref<64x512xf32, #tpu.memory_space<vmem>>, vector<64x512xf32>,
    %cst_7 = arith.constant 0.000000e+00 : f32
    %7 = vector.broadcast %cst_7 : f32 to vector<8x128xf32>
    %cst_8 = arith.constant 0.000000e+00 : f32
    %8 = vector.broadcast %cst_8 : f32 to vector<8x128xf32>
    %c0_9 = arith.constant 0 : index
    %c0_10 = arith.constant 0 : index
    %9 = vector.load %arg11[%c0_9, %c0_10] : memref<64x512xf32, #tpu.memory_space<vmem>>, vector<8x512xf32>
    %c0_11 = arith.constant 0 : index
    %c0_12 = arith.constant 0 : index
    %10 = vector.load %arg3[%c0_11, %c0_12] : memref<128x512xf32, #tpu.memory_space<vmem>>, vector<128x512xf32>
    %cst_13 = arith.constant dense<0.000000e+00> : vector<8x512xf32>
    %11 = tpu.matmul %7, %10, %cst_13 {dimension_numbers = #tpu.dot_dimension_numbers<[1], [0], [0], [1], [0, 0, 1, 1], [], []>} : vector<8x128xf32>, vector<128x512xf32>, vector<8x512xf32> -> vector<8x512xf32>
    %12 = arith.addf %9, %11 : vector<8x512xf32>
    %13 = vector.extract_strided_slice %12 {offsets = [0, 0], sizes = [8, 384], strides = [1, 1]} : vector<8x512xf32> to vector<8x384xf32>
    %14 = arith.negf %13 : vector<8x384xf32>
    %15 = math.exp %14 : vector<8x384xf32>
    %cst_14 = arith.constant 1.000000e+00 : f32
    %16 = vector.broadcast %cst_14 : f32 to vector<8x384xf32>
    %17 = arith.addf %16, %15 : vector<8x384xf32>
    %18 = arith.divf %16, %17 : vector<8x384xf32>
    %19 = vector.extract_strided_slice %18 {offsets = [0, 0], sizes = [8, 128], strides = [1, 1]} : vector<8x384xf32> to vector<8x128xf32>
    %20 = vector.extract_strided_slice %18 {offsets = [0, 128], sizes = [8, 128], strides = [1, 1]} : vector<8x384xf32> to vector<8x128xf32>
    %21 = vector.extract_strided_slice %18 {offsets = [0, 256], sizes = [8, 128], strides = [1, 1]} : vector<8x384xf32> to vector<8x128xf32>
    %22 = vector.extract_strided_slice %12 {offsets = [0, 384], sizes = [8, 128], strides = [1, 1]} : vector<8x512xf32> to vector<8x128xf32>
    %23 = math.tanh %22 : vector<8x128xf32>
    %24 = arith.mulf %20, %8 : vector<8x128xf32>
    %25 = arith.mulf %19, %23 : vector<8x128xf32>
    %26 = arith.addf %24, %25 : vector<8x128xf32>
    %27 = math.tanh %26 : vector<8x128xf32>
    %28 = arith.mulf %21, %27 : vector<8x128xf32>
    %c0_15 = arith.constant 0 : index
    %c0_16 = arith.constant 0 : index
    %29 = vector.load %arg12[%c0_15, %c0_16] : memref<64x128xf32, #tpu.memory_space<vmem>>, vector<8x128xf32>
    tpu.vector_store %arg12[%c0_15, %c0_16], %28 {strides = array<i32>} : memref<64x128xf32, #tpu.memory_space<vmem>>, vector<8x128xf32>,
    %c8 = arith.constant 8 : index
    %c0_17 = arith.constant 0 : index
    %30 = vector.load %arg11[%c8, %c0_17] : memref<64x512xf32, #tpu.memory_space<vmem>>, vector<8x512xf32>
    %c0_18 = arith.constant 0 : index
    %c0_19 = arith.constant 0 : index
    %31 = vector.load %arg3[%c0_18, %c0_19] : memref<128x512xf32, #tpu.memory_space<vmem>>, vector<128x512xf32>
    %cst_20 = arith.constant dense<0.000000e+00> : vector<8x512xf32>
    %32 = tpu.matmul %28, %31, %cst_20 {dimension_numbers = #tpu.dot_dimension_numbers<[1], [0], [0], [1], [0, 0, 1, 1], [], []>} : vector<8x128xf32>, vector<128x512xf32>, vector<8x512xf32> -> vector<8x512xf32>
    %33 = arith.addf %30, %32 : vector<8x512xf32>
    %34 = vector.extract_strided_slice %33 {offsets = [0, 0], sizes = [8, 384], strides = [1, 1]} : vector<8x512xf32> to vector<8x384xf32>
    %35 = arith.negf %34 : vector<8x384xf32>
    %36 = math.exp %35 : vector<8x384xf32>
    %cst_21 = arith.constant 1.000000e+00 : f32
    %37 = vector.broadcast %cst_21 : f32 to vector<8x384xf32>
    %38 = arith.addf %37, %36 : vector<8x384xf32>
    %39 = arith.divf %37, %38 : vector<8x384xf32>
    %40 = vector.extract_strided_slice %39 {offsets = [0, 0], sizes = [8, 128], strides = [1, 1]} : vector<8x384xf32> to vector<8x128xf32>
    %41 = vector.extract_strided_slice %39 {offsets = [0, 128], sizes = [8, 128], strides = [1, 1]} : vector<8x384xf32> to vector<8x128xf32>
    %42 = vector.extract_strided_slice %39 {offsets = [0, 256], sizes = [8, 128], strides = [1, 1]} : vector<8x384xf32> to vector<8x128xf32>
    %43 = vector.extract_strided_slice %33 {offsets = [0, 384], sizes = [8, 128], strides = [1, 1]} : vector<8x512xf32> to vector<8x128xf32>
    %44 = math.tanh %43 : vector<8x128xf32>
    %45 = arith.mulf %41, %26 : vector<8x128xf32>
    %46 = arith.mulf %40, %44 : vector<8x128xf32>
    %47 = arith.addf %45, %46 : vector<8x128xf32>
    %48 = math.tanh %47 : vector<8x128xf32>
    %49 = arith.mulf %42, %48 : vector<8x128xf32>
    %c8_22 = arith.constant 8 : index
    %c0_23 = arith.constant 0 : index
    %50 = vector.load %arg12[%c8_22, %c0_23] : memref<64x128xf32, #tpu.memory_space<vmem>>, vector<8x128xf32>
    tpu.vector_store %arg12[%c8_22, %c0_23], %49 {strides = array<i32>} : memref<64x128xf32, #tpu.memory_space<vmem>>, vector<8x128xf32>,
    %c16 = arith.constant 16 : index
    %c0_24 = arith.constant 0 : index
    %51 = vector.load %arg11[%c16, %c0_24] : memref<64x512xf32, #tpu.memory_space<vmem>>, vector<8x512xf32>
    %c0_25 = arith.constant 0 : index
    %c0_26 = arith.constant 0 : index
    %52 = vector.load %arg3[%c0_25, %c0_26] : memref<128x512xf32, #tpu.memory_space<vmem>>, vector<128x512xf32>
    %cst_27 = arith.constant dense<0.000000e+00> : vector<8x512xf32>
    %53 = tpu.matmul %49, %52, %cst_27 {dimension_numbers = #tpu.dot_dimension_numbers<[1], [0], [0], [1], [0, 0, 1, 1], [], []>} : vector<8x128xf32>, vector<128x512xf32>, vector<8x512xf32> -> vector<8x512xf32>
    %54 = arith.addf %51, %53 : vector<8x512xf32>
    %55 = vector.extract_strided_slice %54 {offsets = [0, 0], sizes = [8, 384], strides = [1, 1]} : vector<8x512xf32> to vector<8x384xf32>
    %56 = arith.negf %55 : vector<8x384xf32>
    %57 = math.exp %56 : vector<8x384xf32>
    %cst_28 = arith.constant 1.000000e+00 : f32
    %58 = vector.broadcast %cst_28 : f32 to vector<8x384xf32>
    %59 = arith.addf %58, %57 : vector<8x384xf32>
    %60 = arith.divf %58, %59 : vector<8x384xf32>
    %61 = vector.extract_strided_slice %60 {offsets = [0, 0], sizes = [8, 128], strides = [1, 1]} : vector<8x384xf32> to vector<8x128xf32>
    %62 = vector.extract_strided_slice %60 {offsets = [0, 128], sizes = [8, 128], strides = [1, 1]} : vector<8x384xf32> to vector<8x128xf32>
    %63 = vector.extract_strided_slice %60 {offsets = [0, 256], sizes = [8, 128], strides = [1, 1]} : vector<8x384xf32> to vector<8x128xf32>
    %64 = vector.extract_strided_slice %54 {offsets = [0, 384], sizes = [8, 128], strides = [1, 1]} : vector<8x512xf32> to vector<8x128xf32>
    %65 = math.tanh %64 : vector<8x128xf32>
    %66 = arith.mulf %62, %47 : vector<8x128xf32>
    %67 = arith.mulf %61, %65 : vector<8x128xf32>
    %68 = arith.addf %66, %67 : vector<8x128xf32>
    %69 = math.tanh %68 : vector<8x128xf32>
    %70 = arith.mulf %63, %69 : vector<8x128xf32>
    %c16_29 = arith.constant 16 : index
    %c0_30 = arith.constant 0 : index
    %71 = vector.load %arg12[%c16_29, %c0_30] : memref<64x128xf32, #tpu.memory_space<vmem>>, vector<8x128xf32>
    tpu.vector_store %arg12[%c16_29, %c0_30], %70 {strides = array<i32>} : memref<64x128xf32, #tpu.memory_space<vmem>>, vector<8x128xf32>,
    %c24 = arith.constant 24 : index
    %c0_31 = arith.constant 0 : index
    %72 = vector.load %arg11[%c24, %c0_31] : memref<64x512xf32, #tpu.memory_space<vmem>>, vector<8x512xf32>
    %c0_32 = arith.constant 0 : index
    %c0_33 = arith.constant 0 : index
    %73 = vector.load %arg3[%c0_32, %c0_33] : memref<128x512xf32, #tpu.memory_space<vmem>>, vector<128x512xf32>
    %cst_34 = arith.constant dense<0.000000e+00> : vector<8x512xf32>
    %74 = tpu.matmul %70, %73, %cst_34 {dimension_numbers = #tpu.dot_dimension_numbers<[1], [0], [0], [1], [0, 0, 1, 1], [], []>} : vector<8x128xf32>, vector<128x512xf32>, vector<8x512xf32> -> vector<8x512xf32>
    %75 = arith.addf %72, %74 : vector<8x512xf32>
    %76 = vector.extract_strided_slice %75 {offsets = [0, 0], sizes = [8, 384], strides = [1, 1]} : vector<8x512xf32> to vector<8x384xf32>
    %77 = arith.negf %76 : vector<8x384xf32>
    %78 = math.exp %77 : vector<8x384xf32>
    %cst_35 = arith.constant 1.000000e+00 : f32
    %79 = vector.broadcast %cst_35 : f32 to vector<8x384xf32>
    %80 = arith.addf %79, %78 : vector<8x384xf32>
    %81 = arith.divf %79, %80 : vector<8x384xf32>
    %82 = vector.extract_strided_slice %81 {offsets = [0, 0], sizes = [8, 128], strides = [1, 1]} : vector<8x384xf32> to vector<8x128xf32>
    %83 = vector.extract_strided_slice %81 {offsets = [0, 128], sizes = [8, 128], strides = [1, 1]} : vector<8x384xf32> to vector<8x128xf32>
    %84 = vector.extract_strided_slice %81 {offsets = [0, 256], sizes = [8, 128], strides = [1, 1]} : vector<8x384xf32> to vector<8x128xf32>
    %85 = vector.extract_strided_slice %75 {offsets = [0, 384], sizes = [8, 128], strides = [1, 1]} : vector<8x512xf32> to vector<8x128xf32>
    %86 = math.tanh %85 : vector<8x128xf32>
    %87 = arith.mulf %83, %68 : vector<8x128xf32>
    %88 = arith.mulf %82, %86 : vector<8x128xf32>
    %89 = arith.addf %87, %88 : vector<8x128xf32>
    %90 = math.tanh %89 : vector<8x128xf32>
    %91 = arith.mulf %84, %90 : vector<8x128xf32>
    %c24_36 = arith.constant 24 : index
    %c0_37 = arith.constant 0 : index
    %92 = vector.load %arg12[%c24_36, %c0_37] : memref<64x128xf32, #tpu.memory_space<vmem>>, vector<8x128xf32>
    tpu.vector_store %arg12[%c24_36, %c0_37], %91 {strides = array<i32>} : memref<64x128xf32, #tpu.memory_space<vmem>>, vector<8x128xf32>,
    %c32 = arith.constant 32 : index
    %c0_38 = arith.constant 0 : index
    %93 = vector.load %arg11[%c32, %c0_38] : memref<64x512xf32, #tpu.memory_space<vmem>>, vector<8x512xf32>
    %c0_39 = arith.constant 0 : index
    %c0_40 = arith.constant 0 : index
    %94 = vector.load %arg3[%c0_39, %c0_40] : memref<128x512xf32, #tpu.memory_space<vmem>>, vector<128x512xf32>
    %cst_41 = arith.constant dense<0.000000e+00> : vector<8x512xf32>
    %95 = tpu.matmul %91, %94, %cst_41 {dimension_numbers = #tpu.dot_dimension_numbers<[1], [0], [0], [1], [0, 0, 1, 1], [], []>} : vector<8x128xf32>, vector<128x512xf32>, vector<8x512xf32> -> vector<8x512xf32>
    %96 = arith.addf %93, %95 : vector<8x512xf32>
    %97 = vector.extract_strided_slice %96 {offsets = [0, 0], sizes = [8, 384], strides = [1, 1]} : vector<8x512xf32> to vector<8x384xf32>
    %98 = arith.negf %97 : vector<8x384xf32>
    %99 = math.exp %98 : vector<8x384xf32>
    %cst_42 = arith.constant 1.000000e+00 : f32
    %100 = vector.broadcast %cst_42 : f32 to vector<8x384xf32>
    %101 = arith.addf %100, %99 : vector<8x384xf32>
    %102 = arith.divf %100, %101 : vector<8x384xf32>
    %103 = vector.extract_strided_slice %102 {offsets = [0, 0], sizes = [8, 128], strides = [1, 1]} : vector<8x384xf32> to vector<8x128xf32>
    %104 = vector.extract_strided_slice %102 {offsets = [0, 128], sizes = [8, 128], strides = [1, 1]} : vector<8x384xf32> to vector<8x128xf32>
    %105 = vector.extract_strided_slice %102 {offsets = [0, 256], sizes = [8, 128], strides = [1, 1]} : vector<8x384xf32> to vector<8x128xf32>
    %106 = vector.extract_strided_slice %96 {offsets = [0, 384], sizes = [8, 128], strides = [1, 1]} : vector<8x512xf32> to vector<8x128xf32>
    %107 = math.tanh %106 : vector<8x128xf32>
    %108 = arith.mulf %104, %89 : vector<8x128xf32>
    %109 = arith.mulf %103, %107 : vector<8x128xf32>
    %110 = arith.addf %108, %109 : vector<8x128xf32>
    %111 = math.tanh %110 : vector<8x128xf32>
    %112 = arith.mulf %105, %111 : vector<8x128xf32>
    %c32_43 = arith.constant 32 : index
    %c0_44 = arith.constant 0 : index
    %113 = vector.load %arg12[%c32_43, %c0_44] : memref<64x128xf32, #tpu.memory_space<vmem>>, vector<8x128xf32>
    tpu.vector_store %arg12[%c32_43, %c0_44], %112 {strides = array<i32>} : memref<64x128xf32, #tpu.memory_space<vmem>>, vector<8x128xf32>,
    %c40 = arith.constant 40 : index
    %c0_45 = arith.constant 0 : index
    %114 = vector.load %arg11[%c40, %c0_45] : memref<64x512xf32, #tpu.memory_space<vmem>>, vector<8x512xf32>
    %c0_46 = arith.constant 0 : index
    %c0_47 = arith.constant 0 : index
    %115 = vector.load %arg3[%c0_46, %c0_47] : memref<128x512xf32, #tpu.memory_space<vmem>>, vector<128x512xf32>
    %cst_48 = arith.constant dense<0.000000e+00> : vector<8x512xf32>
    %116 = tpu.matmul %112, %115, %cst_48 {dimension_numbers = #tpu.dot_dimension_numbers<[1], [0], [0], [1], [0, 0, 1, 1], [], []>} : vector<8x128xf32>, vector<128x512xf32>, vector<8x512xf32> -> vector<8x512xf32>
    %117 = arith.addf %114, %116 : vector<8x512xf32>
    %118 = vector.extract_strided_slice %117 {offsets = [0, 0], sizes = [8, 384], strides = [1, 1]} : vector<8x512xf32> to vector<8x384xf32>
    %119 = arith.negf %118 : vector<8x384xf32>
    %120 = math.exp %119 : vector<8x384xf32>
    %cst_49 = arith.constant 1.000000e+00 : f32
    %121 = vector.broadcast %cst_49 : f32 to vector<8x384xf32>
    %122 = arith.addf %121, %120 : vector<8x384xf32>
    %123 = arith.divf %121, %122 : vector<8x384xf32>
    %124 = vector.extract_strided_slice %123 {offsets = [0, 0], sizes = [8, 128], strides = [1, 1]} : vector<8x384xf32> to vector<8x128xf32>
    %125 = vector.extract_strided_slice %123 {offsets = [0, 128], sizes = [8, 128], strides = [1, 1]} : vector<8x384xf32> to vector<8x128xf32>
    %126 = vector.extract_strided_slice %123 {offsets = [0, 256], sizes = [8, 128], strides = [1, 1]} : vector<8x384xf32> to vector<8x128xf32>
    %127 = vector.extract_strided_slice %117 {offsets = [0, 384], sizes = [8, 128], strides = [1, 1]} : vector<8x512xf32> to vector<8x128xf32>
    %128 = math.tanh %127 : vector<8x128xf32>
    %129 = arith.mulf %125, %110 : vector<8x128xf32>
    %130 = arith.mulf %124, %128 : vector<8x128xf32>
    %131 = arith.addf %129, %130 : vector<8x128xf32>
    %132 = math.tanh %131 : vector<8x128xf32>
    %133 = arith.mulf %126, %132 : vector<8x128xf32>
    %c40_50 = arith.constant 40 : index
    %c0_51 = arith.constant 0 : index
    %134 = vector.load %arg12[%c40_50, %c0_51] : memref<64x128xf32, #tpu.memory_space<vmem>>, vector<8x128xf32>
    tpu.vector_store %arg12[%c40_50, %c0_51], %133 {strides = array<i32>} : memref<64x128xf32, #tpu.memory_space<vmem>>, vector<8x128xf32>,
    %c48 = arith.constant 48 : index
    %c0_52 = arith.constant 0 : index
    %135 = vector.load %arg11[%c48, %c0_52] : memref<64x512xf32, #tpu.memory_space<vmem>>, vector<8x512xf32>
    %c0_53 = arith.constant 0 : index
    %c0_54 = arith.constant 0 : index
    %136 = vector.load %arg3[%c0_53, %c0_54] : memref<128x512xf32, #tpu.memory_space<vmem>>, vector<128x512xf32>
    %cst_55 = arith.constant dense<0.000000e+00> : vector<8x512xf32>
    %137 = tpu.matmul %133, %136, %cst_55 {dimension_numbers = #tpu.dot_dimension_numbers<[1], [0], [0], [1], [0, 0, 1, 1], [], []>} : vector<8x128xf32>, vector<128x512xf32>, vector<8x512xf32> -> vector<8x512xf32>
    %138 = arith.addf %135, %137 : vector<8x512xf32>
    %139 = vector.extract_strided_slice %138 {offsets = [0, 0], sizes = [8, 384], strides = [1, 1]} : vector<8x512xf32> to vector<8x384xf32>
    %140 = arith.negf %139 : vector<8x384xf32>
    %141 = math.exp %140 : vector<8x384xf32>
    %cst_56 = arith.constant 1.000000e+00 : f32
    %142 = vector.broadcast %cst_56 : f32 to vector<8x384xf32>
    %143 = arith.addf %142, %141 : vector<8x384xf32>
    %144 = arith.divf %142, %143 : vector<8x384xf32>
    %145 = vector.extract_strided_slice %144 {offsets = [0, 0], sizes = [8, 128], strides = [1, 1]} : vector<8x384xf32> to vector<8x128xf32>
    %146 = vector.extract_strided_slice %144 {offsets = [0, 128], sizes = [8, 128], strides = [1, 1]} : vector<8x384xf32> to vector<8x128xf32>
    %147 = vector.extract_strided_slice %144 {offsets = [0, 256], sizes = [8, 128], strides = [1, 1]} : vector<8x384xf32> to vector<8x128xf32>
    %148 = vector.extract_strided_slice %138 {offsets = [0, 384], sizes = [8, 128], strides = [1, 1]} : vector<8x512xf32> to vector<8x128xf32>
    %149 = math.tanh %148 : vector<8x128xf32>
    %150 = arith.mulf %146, %131 : vector<8x128xf32>
    %151 = arith.mulf %145, %149 : vector<8x128xf32>
    %152 = arith.addf %150, %151 : vector<8x128xf32>
    %153 = math.tanh %152 : vector<8x128xf32>
    %154 = arith.mulf %147, %153 : vector<8x128xf32>
    %c48_57 = arith.constant 48 : index
    %c0_58 = arith.constant 0 : index
    %155 = vector.load %arg12[%c48_57, %c0_58] : memref<64x128xf32, #tpu.memory_space<vmem>>, vector<8x128xf32>
    tpu.vector_store %arg12[%c48_57, %c0_58], %154 {strides = array<i32>} : memref<64x128xf32, #tpu.memory_space<vmem>>, vector<8x128xf32>,
    %c56 = arith.constant 56 : index
    %c0_59 = arith.constant 0 : index
    %156 = vector.load %arg11[%c56, %c0_59] : memref<64x512xf32, #tpu.memory_space<vmem>>, vector<8x512xf32>
    %c0_60 = arith.constant 0 : index
    %c0_61 = arith.constant 0 : index
    %157 = vector.load %arg3[%c0_60, %c0_61] : memref<128x512xf32, #tpu.memory_space<vmem>>, vector<128x512xf32>
    %cst_62 = arith.constant dense<0.000000e+00> : vector<8x512xf32>
    %158 = tpu.matmul %154, %157, %cst_62 {dimension_numbers = #tpu.dot_dimension_numbers<[1], [0], [0], [1], [0, 0, 1, 1], [], []>} : vector<8x128xf32>, vector<128x512xf32>, vector<8x512xf32> -> vector<8x512xf32>
    %159 = arith.addf %156, %158 : vector<8x512xf32>
    %160 = vector.extract_strided_slice %159 {offsets = [0, 0], sizes = [8, 384], strides = [1, 1]} : vector<8x512xf32> to vector<8x384xf32>
    %161 = arith.negf %160 : vector<8x384xf32>
    %162 = math.exp %161 : vector<8x384xf32>
    %cst_63 = arith.constant 1.000000e+00 : f32
    %163 = vector.broadcast %cst_63 : f32 to vector<8x384xf32>
    %164 = arith.addf %163, %162 : vector<8x384xf32>
    %165 = arith.divf %163, %164 : vector<8x384xf32>
    %166 = vector.extract_strided_slice %165 {offsets = [0, 0], sizes = [8, 128], strides = [1, 1]} : vector<8x384xf32> to vector<8x128xf32>
    %167 = vector.extract_strided_slice %165 {offsets = [0, 128], sizes = [8, 128], strides = [1, 1]} : vector<8x384xf32> to vector<8x128xf32>
    %168 = vector.extract_strided_slice %165 {offsets = [0, 256], sizes = [8, 128], strides = [1, 1]} : vector<8x384xf32> to vector<8x128xf32>
    %169 = vector.extract_strided_slice %159 {offsets = [0, 384], sizes = [8, 128], strides = [1, 1]} : vector<8x512xf32> to vector<8x128xf32>
    %170 = math.tanh %169 : vector<8x128xf32>
    %171 = arith.mulf %167, %152 : vector<8x128xf32>
    %172 = arith.mulf %166, %170 : vector<8x128xf32>
    %173 = arith.addf %171, %172 : vector<8x128xf32>
    %174 = math.tanh %173 : vector<8x128xf32>
    %175 = arith.mulf %168, %174 : vector<8x128xf32>
    %c56_64 = arith.constant 56 : index
    %c0_65 = arith.constant 0 : index
    %176 = vector.load %arg12[%c56_64, %c0_65] : memref<64x128xf32, #tpu.memory_space<vmem>>, vector<8x128xf32>
    tpu.vector_store %arg12[%c56_64, %c0_65], %175 {strides = array<i32>} : memref<64x128xf32, #tpu.memory_space<vmem>>, vector<8x128xf32>,
    %c0_66 = arith.constant 0 : index
    %c0_67 = arith.constant 0 : index
    %177 = vector.load %arg12[%c0_66, %c0_67] : memref<64x128xf32, #tpu.memory_space<vmem>>, vector<64x128xf32>
    %c0_68 = arith.constant 0 : index
    %c0_69 = arith.constant 0 : index
    %178 = vector.load %arg5[%c0_68, %c0_69] : memref<128x512xf32, #tpu.memory_space<vmem>>, vector<128x512xf32>
    %cst_70 = arith.constant dense<0.000000e+00> : vector<64x512xf32>
    %179 = tpu.matmul %177, %178, %cst_70 {dimension_numbers = #tpu.dot_dimension_numbers<[1], [0], [0], [1], [0, 0, 1, 1], [], []>} : vector<64x128xf32>, vector<128x512xf32>, vector<64x512xf32> -> vector<64x512xf32>
    %c0_71 = arith.constant 0 : index
    %c0_72 = arith.constant 0 : index
    %180 = vector.load %arg7[%c0_71, %c0_72] : memref<1x512xf32, #tpu.memory_space<vmem>>, vector<1x512xf32>
    %181 = vector.broadcast %180 : vector<1x512xf32> to vector<64x512xf32>
    %182 = arith.addf %179, %181 : vector<64x512xf32>
    %c0_73 = arith.constant 0 : index
    %c0_74 = arith.constant 0 : index
    %183 = vector.load %arg11[%c0_73, %c0_74] : memref<64x512xf32, #tpu.memory_space<vmem>>, vector<64x512xf32>
    tpu.vector_store %arg11[%c0_73, %c0_74], %182 {strides = array<i32>} : memref<64x512xf32, #tpu.memory_space<vmem>>, vector<64x512xf32>,
    %cst_75 = arith.constant 0.000000e+00 : f32
    %184 = vector.broadcast %cst_75 : f32 to vector<8x128xf32>
    %cst_76 = arith.constant 0.000000e+00 : f32
    %185 = vector.broadcast %cst_76 : f32 to vector<8x128xf32>
    %c0_77 = arith.constant 0 : index
    %c0_78 = arith.constant 0 : index
    %186 = vector.load %arg11[%c0_77, %c0_78] : memref<64x512xf32, #tpu.memory_space<vmem>>, vector<8x512xf32>
    %c0_79 = arith.constant 0 : index
    %c0_80 = arith.constant 0 : index
    %187 = vector.load %arg6[%c0_79, %c0_80] : memref<128x512xf32, #tpu.memory_space<vmem>>, vector<128x512xf32>
    %cst_81 = arith.constant dense<0.000000e+00> : vector<8x512xf32>
    %188 = tpu.matmul %184, %187, %cst_81 {dimension_numbers = #tpu.dot_dimension_numbers<[1], [0], [0], [1], [0, 0, 1, 1], [], []>} : vector<8x128xf32>, vector<128x512xf32>, vector<8x512xf32> -> vector<8x512xf32>
    %189 = arith.addf %186, %188 : vector<8x512xf32>
    %190 = vector.extract_strided_slice %189 {offsets = [0, 0], sizes = [8, 384], strides = [1, 1]} : vector<8x512xf32> to vector<8x384xf32>
    %191 = arith.negf %190 : vector<8x384xf32>
    %192 = math.exp %191 : vector<8x384xf32>
    %cst_82 = arith.constant 1.000000e+00 : f32
    %193 = vector.broadcast %cst_82 : f32 to vector<8x384xf32>
    %194 = arith.addf %193, %192 : vector<8x384xf32>
    %195 = arith.divf %193, %194 : vector<8x384xf32>
    %196 = vector.extract_strided_slice %195 {offsets = [0, 0], sizes = [8, 128], strides = [1, 1]} : vector<8x384xf32> to vector<8x128xf32>
    %197 = vector.extract_strided_slice %195 {offsets = [0, 128], sizes = [8, 128], strides = [1, 1]} : vector<8x384xf32> to vector<8x128xf32>
    %198 = vector.extract_strided_slice %195 {offsets = [0, 256], sizes = [8, 128], strides = [1, 1]} : vector<8x384xf32> to vector<8x128xf32>
    %199 = vector.extract_strided_slice %189 {offsets = [0, 384], sizes = [8, 128], strides = [1, 1]} : vector<8x512xf32> to vector<8x128xf32>
    %200 = math.tanh %199 : vector<8x128xf32>
    %201 = arith.mulf %197, %185 : vector<8x128xf32>
    %202 = arith.mulf %196, %200 : vector<8x128xf32>
    %203 = arith.addf %201, %202 : vector<8x128xf32>
    %204 = math.tanh %203 : vector<8x128xf32>
    %205 = arith.mulf %198, %204 : vector<8x128xf32>
    %c0_83 = arith.constant 0 : index
    %c0_84 = arith.constant 0 : index
    %206 = vector.load %arg13[%c0_83, %c0_84] : memref<64x128xf32, #tpu.memory_space<vmem>>, vector<8x128xf32>
    tpu.vector_store %arg13[%c0_83, %c0_84], %205 {strides = array<i32>} : memref<64x128xf32, #tpu.memory_space<vmem>>, vector<8x128xf32>,
    %c8_85 = arith.constant 8 : index
    %c0_86 = arith.constant 0 : index
    %207 = vector.load %arg11[%c8_85, %c0_86] : memref<64x512xf32, #tpu.memory_space<vmem>>, vector<8x512xf32>
    %c0_87 = arith.constant 0 : index
    %c0_88 = arith.constant 0 : index
    %208 = vector.load %arg6[%c0_87, %c0_88] : memref<128x512xf32, #tpu.memory_space<vmem>>, vector<128x512xf32>
    %cst_89 = arith.constant dense<0.000000e+00> : vector<8x512xf32>
    %209 = tpu.matmul %205, %208, %cst_89 {dimension_numbers = #tpu.dot_dimension_numbers<[1], [0], [0], [1], [0, 0, 1, 1], [], []>} : vector<8x128xf32>, vector<128x512xf32>, vector<8x512xf32> -> vector<8x512xf32>
    %210 = arith.addf %207, %209 : vector<8x512xf32>
    %211 = vector.extract_strided_slice %210 {offsets = [0, 0], sizes = [8, 384], strides = [1, 1]} : vector<8x512xf32> to vector<8x384xf32>
    %212 = arith.negf %211 : vector<8x384xf32>
    %213 = math.exp %212 : vector<8x384xf32>
    %cst_90 = arith.constant 1.000000e+00 : f32
    %214 = vector.broadcast %cst_90 : f32 to vector<8x384xf32>
    %215 = arith.addf %214, %213 : vector<8x384xf32>
    %216 = arith.divf %214, %215 : vector<8x384xf32>
    %217 = vector.extract_strided_slice %216 {offsets = [0, 0], sizes = [8, 128], strides = [1, 1]} : vector<8x384xf32> to vector<8x128xf32>
    %218 = vector.extract_strided_slice %216 {offsets = [0, 128], sizes = [8, 128], strides = [1, 1]} : vector<8x384xf32> to vector<8x128xf32>
    %219 = vector.extract_strided_slice %216 {offsets = [0, 256], sizes = [8, 128], strides = [1, 1]} : vector<8x384xf32> to vector<8x128xf32>
    %220 = vector.extract_strided_slice %210 {offsets = [0, 384], sizes = [8, 128], strides = [1, 1]} : vector<8x512xf32> to vector<8x128xf32>
    %221 = math.tanh %220 : vector<8x128xf32>
    %222 = arith.mulf %218, %203 : vector<8x128xf32>
    %223 = arith.mulf %217, %221 : vector<8x128xf32>
    %224 = arith.addf %222, %223 : vector<8x128xf32>
    %225 = math.tanh %224 : vector<8x128xf32>
    %226 = arith.mulf %219, %225 : vector<8x128xf32>
    %c8_91 = arith.constant 8 : index
    %c0_92 = arith.constant 0 : index
    %227 = vector.load %arg13[%c8_91, %c0_92] : memref<64x128xf32, #tpu.memory_space<vmem>>, vector<8x128xf32>
    tpu.vector_store %arg13[%c8_91, %c0_92], %226 {strides = array<i32>} : memref<64x128xf32, #tpu.memory_space<vmem>>, vector<8x128xf32>,
    %c16_93 = arith.constant 16 : index
    %c0_94 = arith.constant 0 : index
    %228 = vector.load %arg11[%c16_93, %c0_94] : memref<64x512xf32, #tpu.memory_space<vmem>>, vector<8x512xf32>
    %c0_95 = arith.constant 0 : index
    %c0_96 = arith.constant 0 : index
    %229 = vector.load %arg6[%c0_95, %c0_96] : memref<128x512xf32, #tpu.memory_space<vmem>>, vector<128x512xf32>
    %cst_97 = arith.constant dense<0.000000e+00> : vector<8x512xf32>
    %230 = tpu.matmul %226, %229, %cst_97 {dimension_numbers = #tpu.dot_dimension_numbers<[1], [0], [0], [1], [0, 0, 1, 1], [], []>} : vector<8x128xf32>, vector<128x512xf32>, vector<8x512xf32> -> vector<8x512xf32>
    %231 = arith.addf %228, %230 : vector<8x512xf32>
    %232 = vector.extract_strided_slice %231 {offsets = [0, 0], sizes = [8, 384], strides = [1, 1]} : vector<8x512xf32> to vector<8x384xf32>
    %233 = arith.negf %232 : vector<8x384xf32>
    %234 = math.exp %233 : vector<8x384xf32>
    %cst_98 = arith.constant 1.000000e+00 : f32
    %235 = vector.broadcast %cst_98 : f32 to vector<8x384xf32>
    %236 = arith.addf %235, %234 : vector<8x384xf32>
    %237 = arith.divf %235, %236 : vector<8x384xf32>
    %238 = vector.extract_strided_slice %237 {offsets = [0, 0], sizes = [8, 128], strides = [1, 1]} : vector<8x384xf32> to vector<8x128xf32>
    %239 = vector.extract_strided_slice %237 {offsets = [0, 128], sizes = [8, 128], strides = [1, 1]} : vector<8x384xf32> to vector<8x128xf32>
    %240 = vector.extract_strided_slice %237 {offsets = [0, 256], sizes = [8, 128], strides = [1, 1]} : vector<8x384xf32> to vector<8x128xf32>
    %241 = vector.extract_strided_slice %231 {offsets = [0, 384], sizes = [8, 128], strides = [1, 1]} : vector<8x512xf32> to vector<8x128xf32>
    %242 = math.tanh %241 : vector<8x128xf32>
    %243 = arith.mulf %239, %224 : vector<8x128xf32>
    %244 = arith.mulf %238, %242 : vector<8x128xf32>
    %245 = arith.addf %243, %244 : vector<8x128xf32>
    %246 = math.tanh %245 : vector<8x128xf32>
    %247 = arith.mulf %240, %246 : vector<8x128xf32>
    %c16_99 = arith.constant 16 : index
    %c0_100 = arith.constant 0 : index
    %248 = vector.load %arg13[%c16_99, %c0_100] : memref<64x128xf32, #tpu.memory_space<vmem>>, vector<8x128xf32>
    tpu.vector_store %arg13[%c16_99, %c0_100], %247 {strides = array<i32>} : memref<64x128xf32, #tpu.memory_space<vmem>>, vector<8x128xf32>,
    %c24_101 = arith.constant 24 : index
    %c0_102 = arith.constant 0 : index
    %249 = vector.load %arg11[%c24_101, %c0_102] : memref<64x512xf32, #tpu.memory_space<vmem>>, vector<8x512xf32>
    %c0_103 = arith.constant 0 : index
    %c0_104 = arith.constant 0 : index
    %250 = vector.load %arg6[%c0_103, %c0_104] : memref<128x512xf32, #tpu.memory_space<vmem>>, vector<128x512xf32>
    %cst_105 = arith.constant dense<0.000000e+00> : vector<8x512xf32>
    %251 = tpu.matmul %247, %250, %cst_105 {dimension_numbers = #tpu.dot_dimension_numbers<[1], [0], [0], [1], [0, 0, 1, 1], [], []>} : vector<8x128xf32>, vector<128x512xf32>, vector<8x512xf32> -> vector<8x512xf32>
    %252 = arith.addf %249, %251 : vector<8x512xf32>
    %253 = vector.extract_strided_slice %252 {offsets = [0, 0], sizes = [8, 384], strides = [1, 1]} : vector<8x512xf32> to vector<8x384xf32>
    %254 = arith.negf %253 : vector<8x384xf32>
    %255 = math.exp %254 : vector<8x384xf32>
    %cst_106 = arith.constant 1.000000e+00 : f32
    %256 = vector.broadcast %cst_106 : f32 to vector<8x384xf32>
    %257 = arith.addf %256, %255 : vector<8x384xf32>
    %258 = arith.divf %256, %257 : vector<8x384xf32>
    %259 = vector.extract_strided_slice %258 {offsets = [0, 0], sizes = [8, 128], strides = [1, 1]} : vector<8x384xf32> to vector<8x128xf32>
    %260 = vector.extract_strided_slice %258 {offsets = [0, 128], sizes = [8, 128], strides = [1, 1]} : vector<8x384xf32> to vector<8x128xf32>
    %261 = vector.extract_strided_slice %258 {offsets = [0, 256], sizes = [8, 128], strides = [1, 1]} : vector<8x384xf32> to vector<8x128xf32>
    %262 = vector.extract_strided_slice %252 {offsets = [0, 384], sizes = [8, 128], strides = [1, 1]} : vector<8x512xf32> to vector<8x128xf32>
    %263 = math.tanh %262 : vector<8x128xf32>
    %264 = arith.mulf %260, %245 : vector<8x128xf32>
    %265 = arith.mulf %259, %263 : vector<8x128xf32>
    %266 = arith.addf %264, %265 : vector<8x128xf32>
    %267 = math.tanh %266 : vector<8x128xf32>
    %268 = arith.mulf %261, %267 : vector<8x128xf32>
    %c24_107 = arith.constant 24 : index
    %c0_108 = arith.constant 0 : index
    %269 = vector.load %arg13[%c24_107, %c0_108] : memref<64x128xf32, #tpu.memory_space<vmem>>, vector<8x128xf32>
    tpu.vector_store %arg13[%c24_107, %c0_108], %268 {strides = array<i32>} : memref<64x128xf32, #tpu.memory_space<vmem>>, vector<8x128xf32>,
    %c32_109 = arith.constant 32 : index
    %c0_110 = arith.constant 0 : index
    %270 = vector.load %arg11[%c32_109, %c0_110] : memref<64x512xf32, #tpu.memory_space<vmem>>, vector<8x512xf32>
    %c0_111 = arith.constant 0 : index
    %c0_112 = arith.constant 0 : index
    %271 = vector.load %arg6[%c0_111, %c0_112] : memref<128x512xf32, #tpu.memory_space<vmem>>, vector<128x512xf32>
    %cst_113 = arith.constant dense<0.000000e+00> : vector<8x512xf32>
    %272 = tpu.matmul %268, %271, %cst_113 {dimension_numbers = #tpu.dot_dimension_numbers<[1], [0], [0], [1], [0, 0, 1, 1], [], []>} : vector<8x128xf32>, vector<128x512xf32>, vector<8x512xf32> -> vector<8x512xf32>
    %273 = arith.addf %270, %272 : vector<8x512xf32>
    %274 = vector.extract_strided_slice %273 {offsets = [0, 0], sizes = [8, 384], strides = [1, 1]} : vector<8x512xf32> to vector<8x384xf32>
    %275 = arith.negf %274 : vector<8x384xf32>
    %276 = math.exp %275 : vector<8x384xf32>
    %cst_114 = arith.constant 1.000000e+00 : f32
    %277 = vector.broadcast %cst_114 : f32 to vector<8x384xf32>
    %278 = arith.addf %277, %276 : vector<8x384xf32>
    %279 = arith.divf %277, %278 : vector<8x384xf32>
    %280 = vector.extract_strided_slice %279 {offsets = [0, 0], sizes = [8, 128], strides = [1, 1]} : vector<8x384xf32> to vector<8x128xf32>
    %281 = vector.extract_strided_slice %279 {offsets = [0, 128], sizes = [8, 128], strides = [1, 1]} : vector<8x384xf32> to vector<8x128xf32>
    %282 = vector.extract_strided_slice %279 {offsets = [0, 256], sizes = [8, 128], strides = [1, 1]} : vector<8x384xf32> to vector<8x128xf32>
    %283 = vector.extract_strided_slice %273 {offsets = [0, 384], sizes = [8, 128], strides = [1, 1]} : vector<8x512xf32> to vector<8x128xf32>
    %284 = math.tanh %283 : vector<8x128xf32>
    %285 = arith.mulf %281, %266 : vector<8x128xf32>
    %286 = arith.mulf %280, %284 : vector<8x128xf32>
    %287 = arith.addf %285, %286 : vector<8x128xf32>
    %288 = math.tanh %287 : vector<8x128xf32>
    %289 = arith.mulf %282, %288 : vector<8x128xf32>
    %c32_115 = arith.constant 32 : index
    %c0_116 = arith.constant 0 : index
    %290 = vector.load %arg13[%c32_115, %c0_116] : memref<64x128xf32, #tpu.memory_space<vmem>>, vector<8x128xf32>
    tpu.vector_store %arg13[%c32_115, %c0_116], %289 {strides = array<i32>} : memref<64x128xf32, #tpu.memory_space<vmem>>, vector<8x128xf32>,
    %c40_117 = arith.constant 40 : index
    %c0_118 = arith.constant 0 : index
    %291 = vector.load %arg11[%c40_117, %c0_118] : memref<64x512xf32, #tpu.memory_space<vmem>>, vector<8x512xf32>
    %c0_119 = arith.constant 0 : index
    %c0_120 = arith.constant 0 : index
    %292 = vector.load %arg6[%c0_119, %c0_120] : memref<128x512xf32, #tpu.memory_space<vmem>>, vector<128x512xf32>
    %cst_121 = arith.constant dense<0.000000e+00> : vector<8x512xf32>
    %293 = tpu.matmul %289, %292, %cst_121 {dimension_numbers = #tpu.dot_dimension_numbers<[1], [0], [0], [1], [0, 0, 1, 1], [], []>} : vector<8x128xf32>, vector<128x512xf32>, vector<8x512xf32> -> vector<8x512xf32>
    %294 = arith.addf %291, %293 : vector<8x512xf32>
    %295 = vector.extract_strided_slice %294 {offsets = [0, 0], sizes = [8, 384], strides = [1, 1]} : vector<8x512xf32> to vector<8x384xf32>
    %296 = arith.negf %295 : vector<8x384xf32>
    %297 = math.exp %296 : vector<8x384xf32>
    %cst_122 = arith.constant 1.000000e+00 : f32
    %298 = vector.broadcast %cst_122 : f32 to vector<8x384xf32>
    %299 = arith.addf %298, %297 : vector<8x384xf32>
    %300 = arith.divf %298, %299 : vector<8x384xf32>
    %301 = vector.extract_strided_slice %300 {offsets = [0, 0], sizes = [8, 128], strides = [1, 1]} : vector<8x384xf32> to vector<8x128xf32>
    %302 = vector.extract_strided_slice %300 {offsets = [0, 128], sizes = [8, 128], strides = [1, 1]} : vector<8x384xf32> to vector<8x128xf32>
    %303 = vector.extract_strided_slice %300 {offsets = [0, 256], sizes = [8, 128], strides = [1, 1]} : vector<8x384xf32> to vector<8x128xf32>
    %304 = vector.extract_strided_slice %294 {offsets = [0, 384], sizes = [8, 128], strides = [1, 1]} : vector<8x512xf32> to vector<8x128xf32>
    %305 = math.tanh %304 : vector<8x128xf32>
    %306 = arith.mulf %302, %287 : vector<8x128xf32>
    %307 = arith.mulf %301, %305 : vector<8x128xf32>
    %308 = arith.addf %306, %307 : vector<8x128xf32>
    %309 = math.tanh %308 : vector<8x128xf32>
    %310 = arith.mulf %303, %309 : vector<8x128xf32>
    %c40_123 = arith.constant 40 : index
    %c0_124 = arith.constant 0 : index
    %311 = vector.load %arg13[%c40_123, %c0_124] : memref<64x128xf32, #tpu.memory_space<vmem>>, vector<8x128xf32>
    tpu.vector_store %arg13[%c40_123, %c0_124], %310 {strides = array<i32>} : memref<64x128xf32, #tpu.memory_space<vmem>>, vector<8x128xf32>,
    %c48_125 = arith.constant 48 : index
    %c0_126 = arith.constant 0 : index
    %312 = vector.load %arg11[%c48_125, %c0_126] : memref<64x512xf32, #tpu.memory_space<vmem>>, vector<8x512xf32>
    %c0_127 = arith.constant 0 : index
    %c0_128 = arith.constant 0 : index
    %313 = vector.load %arg6[%c0_127, %c0_128] : memref<128x512xf32, #tpu.memory_space<vmem>>, vector<128x512xf32>
    %cst_129 = arith.constant dense<0.000000e+00> : vector<8x512xf32>
    %314 = tpu.matmul %310, %313, %cst_129 {dimension_numbers = #tpu.dot_dimension_numbers<[1], [0], [0], [1], [0, 0, 1, 1], [], []>} : vector<8x128xf32>, vector<128x512xf32>, vector<8x512xf32> -> vector<8x512xf32>
    %315 = arith.addf %312, %314 : vector<8x512xf32>
    %316 = vector.extract_strided_slice %315 {offsets = [0, 0], sizes = [8, 384], strides = [1, 1]} : vector<8x512xf32> to vector<8x384xf32>
    %317 = arith.negf %316 : vector<8x384xf32>
    %318 = math.exp %317 : vector<8x384xf32>
    %cst_130 = arith.constant 1.000000e+00 : f32
    %319 = vector.broadcast %cst_130 : f32 to vector<8x384xf32>
    %320 = arith.addf %319, %318 : vector<8x384xf32>
    %321 = arith.divf %319, %320 : vector<8x384xf32>
    %322 = vector.extract_strided_slice %321 {offsets = [0, 0], sizes = [8, 128], strides = [1, 1]} : vector<8x384xf32> to vector<8x128xf32>
    %323 = vector.extract_strided_slice %321 {offsets = [0, 128], sizes = [8, 128], strides = [1, 1]} : vector<8x384xf32> to vector<8x128xf32>
    %324 = vector.extract_strided_slice %321 {offsets = [0, 256], sizes = [8, 128], strides = [1, 1]} : vector<8x384xf32> to vector<8x128xf32>
    %325 = vector.extract_strided_slice %315 {offsets = [0, 384], sizes = [8, 128], strides = [1, 1]} : vector<8x512xf32> to vector<8x128xf32>
    %326 = math.tanh %325 : vector<8x128xf32>
    %327 = arith.mulf %323, %308 : vector<8x128xf32>
    %328 = arith.mulf %322, %326 : vector<8x128xf32>
    %329 = arith.addf %327, %328 : vector<8x128xf32>
    %330 = math.tanh %329 : vector<8x128xf32>
    %331 = arith.mulf %324, %330 : vector<8x128xf32>
    %c48_131 = arith.constant 48 : index
    %c0_132 = arith.constant 0 : index
    %332 = vector.load %arg13[%c48_131, %c0_132] : memref<64x128xf32, #tpu.memory_space<vmem>>, vector<8x128xf32>
    tpu.vector_store %arg13[%c48_131, %c0_132], %331 {strides = array<i32>} : memref<64x128xf32, #tpu.memory_space<vmem>>, vector<8x128xf32>,
    %c56_133 = arith.constant 56 : index
    %c0_134 = arith.constant 0 : index
    %333 = vector.load %arg11[%c56_133, %c0_134] : memref<64x512xf32, #tpu.memory_space<vmem>>, vector<8x512xf32>
    %c0_135 = arith.constant 0 : index
    %c0_136 = arith.constant 0 : index
    %334 = vector.load %arg6[%c0_135, %c0_136] : memref<128x512xf32, #tpu.memory_space<vmem>>, vector<128x512xf32>
    %cst_137 = arith.constant dense<0.000000e+00> : vector<8x512xf32>
    %335 = tpu.matmul %331, %334, %cst_137 {dimension_numbers = #tpu.dot_dimension_numbers<[1], [0], [0], [1], [0, 0, 1, 1], [], []>} : vector<8x128xf32>, vector<128x512xf32>, vector<8x512xf32> -> vector<8x512xf32>
    %336 = arith.addf %333, %335 : vector<8x512xf32>
    %337 = vector.extract_strided_slice %336 {offsets = [0, 0], sizes = [8, 384], strides = [1, 1]} : vector<8x512xf32> to vector<8x384xf32>
    %338 = arith.negf %337 : vector<8x384xf32>
    %339 = math.exp %338 : vector<8x384xf32>
    %cst_138 = arith.constant 1.000000e+00 : f32
    %340 = vector.broadcast %cst_138 : f32 to vector<8x384xf32>
    %341 = arith.addf %340, %339 : vector<8x384xf32>
    %342 = arith.divf %340, %341 : vector<8x384xf32>
    %343 = vector.extract_strided_slice %342 {offsets = [0, 0], sizes = [8, 128], strides = [1, 1]} : vector<8x384xf32> to vector<8x128xf32>
    %344 = vector.extract_strided_slice %342 {offsets = [0, 128], sizes = [8, 128], strides = [1, 1]} : vector<8x384xf32> to vector<8x128xf32>
    %345 = vector.extract_strided_slice %342 {offsets = [0, 256], sizes = [8, 128], strides = [1, 1]} : vector<8x384xf32> to vector<8x128xf32>
    %346 = vector.extract_strided_slice %336 {offsets = [0, 384], sizes = [8, 128], strides = [1, 1]} : vector<8x512xf32> to vector<8x128xf32>
    %347 = math.tanh %346 : vector<8x128xf32>
    %348 = arith.mulf %344, %329 : vector<8x128xf32>
    %349 = arith.mulf %343, %347 : vector<8x128xf32>
    %350 = arith.addf %348, %349 : vector<8x128xf32>
    %351 = math.tanh %350 : vector<8x128xf32>
    %352 = arith.mulf %345, %351 : vector<8x128xf32>
    %c56_139 = arith.constant 56 : index
    %c0_140 = arith.constant 0 : index
    %353 = vector.load %arg13[%c56_139, %c0_140] : memref<64x128xf32, #tpu.memory_space<vmem>>, vector<8x128xf32>
    tpu.vector_store %arg13[%c56_139, %c0_140], %352 {strides = array<i32>} : memref<64x128xf32, #tpu.memory_space<vmem>>, vector<8x128xf32>,
    %c0_141 = arith.constant 0 : index
    %c0_142 = arith.constant 0 : index
    %354 = vector.load %arg13[%c0_141, %c0_142] : memref<64x128xf32, #tpu.memory_space<vmem>>, vector<64x128xf32>
    %c0_143 = arith.constant 0 : index
    %c0_144 = arith.constant 0 : index
    %355 = vector.load %arg8[%c0_143, %c0_144] : memref<128x128xf32, #tpu.memory_space<vmem>>, vector<128x128xf32>
    %cst_145 = arith.constant dense<0.000000e+00> : vector<64x128xf32>
    %356 = tpu.matmul %354, %355, %cst_145 {dimension_numbers = #tpu.dot_dimension_numbers<[1], [0], [0], [1], [0, 0, 1, 1], [], []>} : vector<64x128xf32>, vector<128x128xf32>, vector<64x128xf32> -> vector<64x128xf32>
    %c0_146 = arith.constant 0 : index
    %c0_147 = arith.constant 0 : index
    %357 = vector.load %arg9[%c0_146, %c0_147] : memref<1x128xf32, #tpu.memory_space<vmem>>, vector<1x128xf32>
    %358 = vector.broadcast %357 : vector<1x128xf32> to vector<64x128xf32>
    %359 = arith.addf %356, %358 : vector<64x128xf32>
    %c0_148 = arith.constant 0 : index
    %c0_149 = arith.constant 0 : index
    %360 = vector.load %arg10[%c0_148, %c0_149] : memref<64x128xf32, #tpu.memory_space<vmem>>, vector<64x128xf32>
    tpu.vector_store %arg10[%c0_148, %c0_149], %359 {strides = array<i32>} : memref<64x128xf32, #tpu.memory_space<vmem>>, vector<64x128xf32>,
    return
  }
  func.func @transform_0(%arg0: i32) -> (i32, i32) {
    %c0_i32 = arith.constant 0 : i32
    %c0_i32_0 = arith.constant 0 : i32
    %c0_i32_1 = arith.constant 0 : i32
    return %c0_i32, %c0_i32_0 : i32, i32
  }
  func.func @transform_1(%arg0: i32) -> (i32, i32) {
    %c0_i32 = arith.constant 0 : i32
    %c0_i32_0 = arith.constant 0 : i32
    %c0_i32_1 = arith.constant 0 : i32
    return %c0_i32, %c0_i32_0 : i32, i32
  }
  func.func @transform_2(%arg0: i32) -> (i32, i32) {
    %c0_i32 = arith.constant 0 : i32
    %c0_i32_0 = arith.constant 0 : i32
    %c0_i32_1 = arith.constant 0 : i32
    return %c0_i32, %c0_i32_0 : i32, i32
  }
  func.func @transform_3(%arg0: i32) -> (i32, i32) {
    %c0_i32 = arith.constant 0 : i32
    %c0_i32_0 = arith.constant 0 : i32
    %c0_i32_1 = arith.constant 0 : i32
    return %c0_i32, %c0_i32_0 : i32, i32
  }
  func.func @transform_4(%arg0: i32) -> (i32, i32) {
    %c0_i32 = arith.constant 0 : i32
    %c0_i32_0 = arith.constant 0 : i32
    %c0_i32_1 = arith.constant 0 : i32
    return %c0_i32, %c0_i32_0 : i32, i32
  }
  func.func @transform_5(%arg0: i32) -> (i32, i32) {
    %c0_i32 = arith.constant 0 : i32
    %c0_i32_0 = arith.constant 0 : i32
    %c0_i32_1 = arith.constant 0 : i32
    return %c0_i32, %c0_i32_0 : i32, i32
  }
  func.func @transform_6(%arg0: i32) -> (i32, i32) {
    %c0_i32 = arith.constant 0 : i32
    %c0_i32_0 = arith.constant 0 : i32
    %c0_i32_1 = arith.constant 0 : i32
    return %c0_i32, %c0_i32_0 : i32, i32
  }
  func.func @transform_7(%arg0: i32) -> (i32, i32) {
    %c0_i32 = arith.constant 0 : i32
    %c0_i32_0 = arith.constant 0 : i32
    %c0_i32_1 = arith.constant 0 : i32
    return %c0_i32, %c0_i32_0 : i32, i32
  }
  func.func @transform_8(%arg0: i32) -> (i32, i32) {
    %c0_i32 = arith.constant 0 : i32
    %c0_i32_0 = arith.constant 0 : i32
    %c0_i32_1 = arith.constant 0 : i32
    return %c0_i32, %c0_i32_0 : i32, i32
  }
  func.func @transform_9(%arg0: i32) -> (i32, i32) {
    %c0_i32 = arith.constant 0 : i32
    %c0_i32_0 = arith.constant 0 : i32
    %c0_i32_1 = arith.constant 0 : i32
    return %c0_i32, %c0_i32_0 : i32, i32
  }
}

</mosaic_0001>

<llo_original>
// kernel: tpu_custom_call.1
$region0: #{tpu_custom_call.1}
  #allocation0 [shape = 'u32[]', space=smem, size = 0x4, offset = 0x4, fixed_abs, tag = 'smem constant byte address 0x4 - core index']
  #allocation1 [shape = 'u32[144,128]{1,0:T(1,128)}', space=vmem, size = 0x12000, scoped, tag = 'internal scratch']
  #allocation2 [shape = 'f32[64,512]{1,0:T(8,128)}', space=vmem, size = 0x20000, scoped, tag = 'scratch operand']
  #allocation3 [shape = 'f32[64,128]{1,0:T(8,128)}', space=vmem, size = 0x8000, scoped, tag = 'scratch operand']
  #allocation4 [shape = 'f32[64,128]{1,0:T(8,128)}', space=vmem, size = 0x8000, scoped, tag = 'scratch operand']
  %s0 = inlined_call_operand.hbm [shape: f32[64,128], index: 0, kind: input, shape index: {}]
  %s1 = inlined_call_operand.hbm [shape: f32[128,512], index: 1, kind: input, shape index: {}]
  %s2 = inlined_call_operand.hbm [shape: f32[128,512], index: 2, kind: input, shape index: {}]
  %s3 = inlined_call_operand.vmem [shape: f32[1,512], index: 3, kind: input, shape index: {}]
  %s4 = inlined_call_operand.hbm [shape: f32[128,512], index: 4, kind: input, shape index: {}]
  %s5 = inlined_call_operand.hbm [shape: f32[128,512], index: 5, kind: input, shape index: {}]
  %s6 = inlined_call_operand.vmem [shape: f32[1,512], index: 6, kind: input, shape index: {}]
  %s7 = inlined_call_operand.hbm [shape: f32[128,128], index: 7, kind: input, shape index: {}]
  %s8 = inlined_call_operand.vmem [shape: f32[1,128], index: 8, kind: input, shape index: {}]
  %s9 = inlined_call_operand.hbm [shape: f32[64,128], index: 9, kind: output, shape index: {}]
  %s10 = sld [smem:[#allocation0]]
  $region70: #{tpu_custom_call.1} parent=0
    _
  %s12 = ssub.s32 1, %s10
  %s13 = scalar_select 0, %s12, %s10
  $region1: #{tpu_custom_call.1} parent=0
    #allocation5 [shape = 'u8[32768]{0}', space=vmem, size = 0x8000, scoped, tag = 'input window, operand 0, single buffered']
    #allocation6 [shape = 's32[1]{0}', space=sflag, size = 0x4, scoped, tag = 'scoped memory for tpu_custom_call.1']
    #allocation7 [shape = 's32[1]{0}', space=sflag, size = 0x4, scoped, tag = 'scoped memory for tpu_custom_call.1']
    #allocation8 [shape = 'u8[262144]{0}', space=vmem, size = 0x40000, scoped, tag = 'input window, operand 1, single buffered']
    #allocation9 [shape = 's32[1]{0}', space=sflag, size = 0x4, scoped, tag = 'scoped memory for tpu_custom_call.1']
    #allocation10 [shape = 'u8[262144]{0}', space=vmem, size = 0x40000, scoped, tag = 'input window, operand 2, single buffered']
    #allocation11 [shape = 'u8[262144]{0}', space=vmem, size = 0x40000, scoped, tag = 'input window, operand 4, single buffered']
    #allocation12 [shape = 's32[1]{0}', space=sflag, size = 0x4, scoped, tag = 'scoped memory for tpu_custom_call.1']
    #allocation13 [shape = 'u8[262144]{0}', space=vmem, size = 0x40000, scoped, tag = 'input window, operand 5, single buffered']
    #allocation14 [shape = 'u8[65536]{0}', space=vmem, size = 0x10000, scoped, tag = 'input window, operand 7, single buffered']
    #allocation15 [shape = 's32[1]{0}', space=sflag, size = 0x4, scoped, tag = 'scoped memory for tpu_custom_call.1']
    #allocation16 [shape = 'u8[32768]{0}', space=vmem, size = 0x8000, scoped, tag = 'output window, operand 0, single buffered']
    %14 = vsyncpa [#allocation6], 0
    %15 = vsyncpa [#allocation9], 0
    %16 = vsyncpa [#allocation12], 0
    %17 = vsyncpa [#allocation15], 0
    %18 = vsyncpa [#allocation7], 0
    // Predicated region
    $region2: #{tpu_custom_call.1} parent=1 // pred_check
      _
    $region3: #{tpu_custom_call.1} parent=1 // pred_check_branch
      %20 = sbr.rel (0) target = $region5
    $region4: #{tpu_custom_call.1} parent=1 // pred_region
      %s22 = ssub.s32 1024, 1024
      %23 = vsyncadd [#allocation6], %s22
      %s24 = sshll.u32 [#allocation5], 4
      %s25 = int_to_ptr.vmem [resolvable:$true] %s24
      %30 = dma.hbm_to_vmem [thread:$0]  %s0, 1024, %s25, [#allocation6], 128, 128, 8
    $region5: #{tpu_custom_call.1} parent=1 // pred_fallthru
      _
    // Predicated region
    $region6: #{tpu_custom_call.1} parent=1 // pred_check
      _
    $region7: #{tpu_custom_call.1} parent=1 // pred_check_branch
      %32 = sbr.rel (0) target = $region9
    $region8: #{tpu_custom_call.1} parent=1 // pred_region
      %s34 = ssub.s32 8192, 8192
      %35 = vsyncadd [#allocation9], %s34
      %s36 = sshll.u32 [#allocation8], 4
      %s37 = int_to_ptr.vmem [resolvable:$true] %s36
      %42 = dma.hbm_to_vmem [thread:$0]  %s1, 8192, %s37, [#allocation9], 512, 512, 32
    $region9: #{tpu_custom_call.1} parent=1 // pred_fallthru
      _
    // Predicated region
    $region10: #{tpu_custom_call.1} parent=1 // pred_check
      _
    $region11: #{tpu_custom_call.1} parent=1 // pred_check_branch
      %44 = sbr.rel (0) target = $region13
    $region12: #{tpu_custom_call.1} parent=1 // pred_region
      %s46 = ssub.s32 8192, 8192
      %47 = vsyncadd [#allocation9], %s46
      %s48 = sshll.u32 [#allocation10], 4
      %s49 = int_to_ptr.vmem [resolvable:$true] %s48
      %54 = dma.hbm_to_vmem [thread:$0]  %s2, 8192, %s49, [#allocation9], 512, 512, 32
    $region13: #{tpu_custom_call.1} parent=1 // pred_fallthru
      _
    // Predicated region
    $region14: #{tpu_custom_call.1} parent=1 // pred_check
      _
    $region15: #{tpu_custom_call.1} parent=1 // pred_check_branch
      %56 = sbr.rel (0) target = $region17
    $region16: #{tpu_custom_call.1} parent=1 // pred_region
      _
    $region17: #{tpu_custom_call.1} parent=1 // pred_fallthru
      _
    // Predicated region
    $region18: #{tpu_custom_call.1} parent=1 // pred_check
      _
    $region19: #{tpu_custom_call.1} parent=1 // pred_check_branch
      %58 = sbr.rel (0) target = $region21
    $region20: #{tpu_custom_call.1} parent=1 // pred_region
      %s60 = ssub.s32 8192, 8192
      %61 = vsyncadd [#allocation12], %s60
      %s62 = sshll.u32 [#allocation11], 4
      %s63 = int_to_ptr.vmem [resolvable:$true] %s62
      %68 = dma.hbm_to_vmem [thread:$0]  %s4, 8192, %s63, [#allocation12], 512, 512, 32
    $region21: #{tpu_custom_call.1} parent=1 // pred_fallthru
      _
    // Predicated region
    $region22: #{tpu_custom_call.1} parent=1 // pred_check
      _
    $region23: #{tpu_custom_call.1} parent=1 // pred_check_branch
      %70 = sbr.rel (0) target = $region25
    $region24: #{tpu_custom_call.1} parent=1 // pred_region
      %s72 = ssub.s32 8192, 8192
      %73 = vsyncadd [#allocation12], %s72
      %s74 = sshll.u32 [#allocation13], 4
      %s75 = int_to_ptr.vmem [resolvable:$true] %s74
      %80 = dma.hbm_to_vmem [thread:$0]  %s5, 8192, %s75, [#allocation12], 512, 512, 32
    $region25: #{tpu_custom_call.1} parent=1 // pred_fallthru
      _
    // Predicated region
    $region26: #{tpu_custom_call.1} parent=1 // pred_check
      _
    $region27: #{tpu_custom_call.1} parent=1 // pred_check_branch
      %82 = sbr.rel (0) target = $region29
    $region28: #{tpu_custom_call.1} parent=1 // pred_region
      _
    $region29: #{tpu_custom_call.1} parent=1 // pred_fallthru
      _
    // Predicated region
    $region30: #{tpu_custom_call.1} parent=1 // pred_check
      _
    $region31: #{tpu_custom_call.1} parent=1 // pred_check_branch
      %84 = sbr.rel (0) target = $region33
    $region32: #{tpu_custom_call.1} parent=1 // pred_region
      %s86 = ssub.s32 2048, 2048
      %87 = vsyncadd [#allocation15], %s86
      %s88 = sshll.u32 [#allocation14], 4
      %s89 = int_to_ptr.vmem [resolvable:$true] %s88
      %94 = dma.hbm_to_vmem [thread:$0]  %s7, 2048, %s89, [#allocation15], 128, 128, 8
    $region33: #{tpu_custom_call.1} parent=1 // pred_fallthru
      _
    // Predicated region
    $region34: #{tpu_custom_call.1} parent=1 // pred_check
      _
    $region35: #{tpu_custom_call.1} parent=1 // pred_check_branch
      %96 = sbr.rel (0) target = $region37
    $region36: #{tpu_custom_call.1} parent=1 // pred_region
      _
    $region37: #{tpu_custom_call.1} parent=1 // pred_fallthru
      _
    // Predicated region
    $region38: #{tpu_custom_call.1} parent=1 // pred_check
      _
    $region39: #{tpu_custom_call.1} parent=1 // pred_check_branch
      %98 = sbr.rel (0) target = $region41
    $region40: #{tpu_custom_call.1} parent=1 // pred_region
      %99 = dma.done [#allocation6], 1024
    $region41: #{tpu_custom_call.1} parent=1 // pred_fallthru
      _
    // Predicated region
    $region42: #{tpu_custom_call.1} parent=1 // pred_check
      _
    $region43: #{tpu_custom_call.1} parent=1 // pred_check_branch
      %101 = sbr.rel (0) target = $region45
    $region44: #{tpu_custom_call.1} parent=1 // pred_region
      %102 = dma.done [#allocation9], 8192
    $region45: #{tpu_custom_call.1} parent=1 // pred_fallthru
      _
    // Predicated region
    $region46: #{tpu_custom_call.1} parent=1 // pred_check
      _
    $region47: #{tpu_custom_call.1} parent=1 // pred_check_branch
      %104 = sbr.rel (0) target = $region49
    $region48: #{tpu_custom_call.1} parent=1 // pred_region
      %105 = dma.done [#allocation9], 8192
    $region49: #{tpu_custom_call.1} parent=1 // pred_fallthru
      _
    // Predicated region
    $region50: #{tpu_custom_call.1} parent=1 // pred_check
      _
    $region51: #{tpu_custom_call.1} parent=1 // pred_check_branch
      %107 = sbr.rel (0) target = $region53
    $region52: #{tpu_custom_call.1} parent=1 // pred_region
      %108 = dma.done [#allocation12], 8192
    $region53: #{tpu_custom_call.1} parent=1 // pred_fallthru
      _
    // Predicated region
    $region54: #{tpu_custom_call.1} parent=1 // pred_check
      _
    $region55: #{tpu_custom_call.1} parent=1 // pred_check_branch
      %110 = sbr.rel (0) target = $region57
    $region56: #{tpu_custom_call.1} parent=1 // pred_region
      %111 = dma.done [#allocation12], 8192
    $region57: #{tpu_custom_call.1} parent=1 // pred_fallthru
      _
    // Predicated region
    $region58: #{tpu_custom_call.1} parent=1 // pred_check
      _
    $region59: #{tpu_custom_call.1} parent=1 // pred_check_branch
      %113 = sbr.rel (0) target = $region61
    $region60: #{tpu_custom_call.1} parent=1 // pred_region
      %114 = dma.done [#allocation15], 2048
    $region61: #{tpu_custom_call.1} parent=1 // pred_fallthru
      _
    %v115 = vld [vmem:[#allocation5] sm:$0xff]
    %v116 = vld [vmem:[#allocation5 + $0x8] sm:$0xff]
    %v117 = vld [vmem:[#allocation5 + $0x10] sm:$0xff]
    %v118 = vld [vmem:[#allocation5 + $0x18] sm:$0xff]
    %v119 = vld [vmem:[#allocation5 + $0x20] sm:$0xff]
    %v120 = vld [vmem:[#allocation5 + $0x28] sm:$0xff]
    %v121 = vld [vmem:[#allocation5 + $0x30] sm:$0xff]
    %v122 = vld [vmem:[#allocation5 + $0x38] sm:$0xff]
    %v123 = vld [vmem:[#allocation8] sm:$0xff]
    %v124 = vld [vmem:[#allocation8 + $0x8] sm:$0xff]
    %v125 = vld [vmem:[#allocation8 + $0x10] sm:$0xff]
    %v126 = vld [vmem:[#allocation8 + $0x18] sm:$0xff]
    %v127 = vld [vmem:[#allocation8 + $0x20] sm:$0xff]
    %v128 = vld [vmem:[#allocation8 + $0x28] sm:$0xff]
    %v129 = vld [vmem:[#allocation8 + $0x30] sm:$0xff]
    %v130 = vld [vmem:[#allocation8 + $0x38] sm:$0xff]
    %v131 = vld [vmem:[#allocation8 + $0x40] sm:$0xff]
    %v132 = vld [vmem:[#allocation8 + $0x48] sm:$0xff]
    %v133 = vld [vmem:[#allocation8 + $0x50] sm:$0xff]
    %v134 = vld [vmem:[#allocation8 + $0x58] sm:$0xff]
    %v135 = vld [vmem:[#allocation8 + $0x60] sm:$0xff]
    %v136 = vld [vmem:[#allocation8 + $0x68] sm:$0xff]
    %v137 = vld [vmem:[#allocation8 + $0x70] sm:$0xff]
    %v138 = vld [vmem:[#allocation8 + $0x78] sm:$0xff]
    %v139 = vld [vmem:[#allocation8 + $0x80] sm:$0xff]
    %v140 = vld [vmem:[#allocation8 + $0x88] sm:$0xff]
    %v141 = vld [vmem:[#allocation8 + $0x90] sm:$0xff]
    %v142 = vld [vmem:[#allocation8 + $0x98] sm:$0xff]
    %v143 = vld [vmem:[#allocation8 + $0xa0] sm:$0xff]
    %v144 = vld [vmem:[#allocation8 + $0xa8] sm:$0xff]
    %v145 = vld [vmem:[#allocation8 + $0xb0] sm:$0xff]
    %v146 = vld [vmem:[#allocation8 + $0xb8] sm:$0xff]
    %v147 = vld [vmem:[#allocation8 + $0xc0] sm:$0xff]
    %v148 = vld [vmem:[#allocation8 + $0xc8] sm:$0xff]
    %v149 = vld [vmem:[#allocation8 + $0xd0] sm:$0xff]
    %v150 = vld [vmem:[#allocation8 + $0xd8] sm:$0xff]
    %v151 = vld [vmem:[#allocation8 + $0xe0] sm:$0xff]
    %v152 = vld [vmem:[#allocation8 + $0xe8] sm:$0xff]
    %v153 = vld [vmem:[#allocation8 + $0xf0] sm:$0xff]
    %v154 = vld [vmem:[#allocation8 + $0xf8] sm:$0xff]
    %v155 = vld [vmem:[#allocation8 + $0x100] sm:$0xff]
    %v156 = vld [vmem:[#allocation8 + $0x108] sm:$0xff]
    %v157 = vld [vmem:[#allocation8 + $0x110] sm:$0xff]
    %v158 = vld [vmem:[#allocation8 + $0x118] sm:$0xff]
    %v159 = vld [vmem:[#allocation8 + $0x120] sm:$0xff]
    %v160 = vld [vmem:[#allocation8 + $0x128] sm:$0xff]
    %v161 = vld [vmem:[#allocation8 + $0x130] sm:$0xff]
    %v162 = vld [vmem:[#allocation8 + $0x138] sm:$0xff]
    %v163 = vld [vmem:[#allocation8 + $0x140] sm:$0xff]
    %v164 = vld [vmem:[#allocation8 + $0x148] sm:$0xff]
    %v165 = vld [vmem:[#allocation8 + $0x150] sm:$0xff]
    %v166 = vld [vmem:[#allocation8 + $0x158] sm:$0xff]
    %v167 = vld [vmem:[#allocation8 + $0x160] sm:$0xff]
    %v168 = vld [vmem:[#allocation8 + $0x168] sm:$0xff]
    %v169 = vld [vmem:[#allocation8 + $0x170] sm:$0xff]
    %v170 = vld [vmem:[#allocation8 + $0x178] sm:$0xff]
    %v171 = vld [vmem:[#allocation8 + $0x180] sm:$0xff]
    %v172 = vld [vmem:[#allocation8 + $0x188] sm:$0xff]
    %v173 = vld [vmem:[#allocation8 + $0x190] sm:$0xff]
    %v174 = vld [vmem:[#allocation8 + $0x198] sm:$0xff]
    %v175 = vld [vmem:[#allocation8 + $0x1a0] sm:$0xff]
    %v176 = vld [vmem:[#allocation8 + $0x1a8] sm:$0xff]
    %v177 = vld [vmem:[#allocation8 + $0x1b0] sm:$0xff]
    %v178 = vld [vmem:[#allocation8 + $0x1b8] sm:$0xff]
    %v179 = vld [vmem:[#allocation8 + $0x1c0] sm:$0xff]
    %v180 = vld [vmem:[#allocation8 + $0x1c8] sm:$0xff]
    %v181 = vld [vmem:[#allocation8 + $0x1d0] sm:$0xff]
    %v182 = vld [vmem:[#allocation8 + $0x1d8] sm:$0xff]
    %v183 = vld [vmem:[#allocation8 + $0x1e0] sm:$0xff]
    %v184 = vld [vmem:[#allocation8 + $0x1e8] sm:$0xff]
    %v185 = vld [vmem:[#allocation8 + $0x1f0] sm:$0xff]
    %v186 = vld [vmem:[#allocation8 + $0x1f8] sm:$0xff]
    %v187 = vld [vmem:[%s3] sm:$0xf]
    %v189 = vlaneseq
    %v190 = vshrl.u32 %v189, 7
    %v191 = vsub.s32 0, %v190
    %v192 = vrot.slane %v187, %v191
    %v193 = vlaneseq
    %v194 = vshrl.u32 %v193, 7
    %v195 = vsub.s32 1, %v194
    %v196 = vrot.slane %v187, %v195
    %v197 = vlaneseq
    %v198 = vshrl.u32 %v197, 7
    %v199 = vsub.s32 2, %v198
    %v200 = vrot.slane %v187, %v199
    %v201 = vlaneseq
    %v202 = vshrl.u32 %v201, 7
    %v203 = vsub.s32 3, %v202
    %v204 = vrot.slane %v187, %v203
    %209 = vmatprep.subr.mxu0 %v124
    %210 = vmatpush1.msra.mxu0 %v123
    %211 = vmatprep.subr.mxu0 %v128
    %212 = vmatpush1.msra.mxu0 %v127
    %213 = vmatprep.subr.mxu0 %v132
    %214 = vmatpush1.msra.mxu0 %v131
    %215 = vmatprep.subr.mxu0 %v136
    %216 = vmatpush1.msra.mxu0 %v135
    %217 = vmatprep.subr.mxu0 %v140
    %218 = vmatpush1.msra.mxu0 %v139
    %219 = vmatprep.subr.mxu0 %v144
    %220 = vmatpush1.msra.mxu0 %v143
    %221 = vmatprep.subr.mxu0 %v148
    %222 = vmatpush1.msra.mxu0 %v147
    %223 = vmatprep.subr.mxu0 %v152
    %224 = vmatpush1.msra.mxu0 %v151
    %225 = vmatprep.subr.mxu0 %v156
    %226 = vmatpush1.msra.mxu0 %v155
    %227 = vmatprep.subr.mxu0 %v160
    %228 = vmatpush1.msra.mxu0 %v159
    %229 = vmatprep.subr.mxu0 %v164
    %230 = vmatpush1.msra.mxu0 %v163
    %231 = vmatprep.subr.mxu0 %v168
    %232 = vmatpush1.msra.mxu0 %v167
    %233 = vmatprep.subr.mxu0 %v172
    %234 = vmatpush1.msra.mxu0 %v171
    %235 = vmatprep.subr.mxu0 %v176
    %236 = vmatpush1.msra.mxu0 %v175
    %237 = vmatprep.subr.mxu0 %v180
    %238 = vmatpush1.msra.mxu0 %v179
    %239 = vmatprep.subr.mxu0 %v184
    %240 = vmatpush1.msra.mxu0 %v183
    %241 = vmatprep.subr.mxu0 0.0
    %242 = vmatpush1.msra.mxu0 0.0
    %243 = vmatprep.subr.mxu0 0.0
    %244 = vmatpush1.msra.mxu0 0.0
    %245 = vmatprep.subr.mxu0 0.0
    %246 = vmatpush1.msra.mxu0 0.0
    %247 = vmatprep.subr.mxu0 0.0
    %248 = vmatpush1.msra.mxu0 0.0
    %249 = vmatprep.subr.mxu0 0.0
    %250 = vmatpush1.msra.mxu0 0.0
    %251 = vmatprep.subr.mxu0 0.0
    %252 = vmatpush1.msra.mxu0 0.0
    %253 = vmatprep.subr.mxu0 0.0
    %254 = vmatpush1.msra.mxu0 0.0
    %255 = vmatprep.subr.mxu0 0.0
    %256 = vmatpush1.msra.mxu0 0.0
    %257 = vmatprep.subr.mxu0 0.0
    %258 = vmatpush1.msra.mxu0 0.0
    %259 = vmatprep.subr.mxu0 0.0
    %260 = vmatpush1.msra.mxu0 0.0
    %261 = vmatprep.subr.mxu0 0.0
    %262 = vmatpush1.msra.mxu0 0.0
    %263 = vmatprep.subr.mxu0 0.0
    %264 = vmatpush1.msra.mxu0 0.0
    %265 = vmatprep.subr.mxu0 0.0
    %266 = vmatpush1.msra.mxu0 0.0
    %267 = vmatprep.subr.mxu0 0.0
    %268 = vmatpush1.msra.mxu0 0.0
    %269 = vmatprep.subr.mxu0 0.0
    %270 = vmatpush1.msra.mxu0 0.0
    %271 = vmatprep.subr.mxu0 0.0
    %272 = vmatpush1.msra.mxu0 0.0
    %273 = vmatprep.mubr.f32.mxu0 0.0
    %274 = vmatmul.mubr.f32.gmra.mrb[0].mxu0 %v115
    %v275 = vpop.f32.mrb[0].mxu0
    %v276 = vadd.f32 %v192, %v275
    %v277 = vpop.f32.mrb[0].mxu0
    %v278 = vadd.f32 %v196, %v277
    %279 = vmatprep.mubr.f32.mxu0 0.0
    %280 = vmatmul.mubr.f32.gmra.mrb[0].mxu0 %v116
    %v281 = vpop.f32.mrb[0].mxu0
    %v282 = vadd.f32 %v192, %v281
    %v283 = vpop.f32.mrb[0].mxu0
    %v284 = vadd.f32 %v196, %v283
    %285 = vmatprep.mubr.f32.mxu0 0.0
    %286 = vmatmul.mubr.f32.gmra.mrb[0].mxu0 %v117
    %v287 = vpop.f32.mrb[0].mxu0
    %v288 = vadd.f32 %v192, %v287
    %v289 = vpop.f32.mrb[0].mxu0
    %v290 = vadd.f32 %v196, %v289
    %291 = vmatprep.mubr.f32.mxu0 0.0
    %292 = vmatmul.mubr.f32.gmra.mrb[0].mxu0 %v118
    %v293 = vpop.f32.mrb[0].mxu0
    %v294 = vadd.f32 %v192, %v293
    %v295 = vpop.f32.mrb[0].mxu0
    %v296 = vadd.f32 %v196, %v295
    %297 = vmatprep.mubr.f32.mxu0 0.0
    %298 = vmatmul.mubr.f32.gmra.mrb[0].mxu0 %v119
    %v299 = vpop.f32.mrb[0].mxu0
    %v300 = vadd.f32 %v192, %v299
    %v301 = vpop.f32.mrb[0].mxu0
    %v302 = vadd.f32 %v196, %v301
    %303 = vmatprep.mubr.f32.mxu0 0.0
    %304 = vmatmul.mubr.f32.gmra.mrb[0].mxu0 %v120
    %v305 = vpop.f32.mrb[0].mxu0
    %v306 = vadd.f32 %v192, %v305
    %v307 = vpop.f32.mrb[0].mxu0
    %v308 = vadd.f32 %v196, %v307
    %309 = vmatprep.mubr.f32.mxu0 0.0
    %310 = vmatmul.mubr.f32.gmra.mrb[0].mxu0 %v121
    %v311 = vpop.f32.mrb[0].mxu0
    %v312 = vadd.f32 %v192, %v311
    %v313 = vpop.f32.mrb[0].mxu0
    %v314 = vadd.f32 %v196, %v313
    %315 = vmatprep.mubr.f32.mxu0 0.0
    %316 = vmatmul.mubr.f32.gmra.mrb[0].mxu0 %v122
    %v317 = vpop.f32.mrb[0].mxu0
    %v318 = vadd.f32 %v192, %v317
    %v319 = vpop.f32.mrb[0].mxu0
    %v320 = vadd.f32 %v196, %v319
    %321 = vdwg.mxu0
    %322 = vmatprep.subr.mxu0 %v126
    %323 = vmatpush1.msra.mxu0 %v125
    %324 = vmatprep.subr.mxu0 %v130
    %325 = vmatpush1.msra.mxu0 %v129
    %326 = vmatprep.subr.mxu0 %v134
    %327 = vmatpush1.msra.mxu0 %v133
    %328 = vmatprep.subr.mxu0 %v138
    %329 = vmatpush1.msra.mxu0 %v137
    %330 = vmatprep.subr.mxu0 %v142
    %331 = vmatpush1.msra.mxu0 %v141
    %332 = vmatprep.subr.mxu0 %v146
    %333 = vmatpush1.msra.mxu0 %v145
    %334 = vmatprep.subr.mxu0 %v150
    %335 = vmatpush1.msra.mxu0 %v149
    %336 = vmatprep.subr.mxu0 %v154
    %337 = vmatpush1.msra.mxu0 %v153
    %338 = vmatprep.subr.mxu0 %v158
    %339 = vmatpush1.msra.mxu0 %v157
    %340 = vmatprep.subr.mxu0 %v162
    %341 = vmatpush1.msra.mxu0 %v161
    %342 = vmatprep.subr.mxu0 %v166
    %343 = vmatpush1.msra.mxu0 %v165
    %344 = vmatprep.subr.mxu0 %v170
    %345 = vmatpush1.msra.mxu0 %v169
    %346 = vmatprep.subr.mxu0 %v174
    %347 = vmatpush1.msra.mxu0 %v173
    %348 = vmatprep.subr.mxu0 %v178
    %349 = vmatpush1.msra.mxu0 %v177
    %350 = vmatprep.subr.mxu0 %v182
    %351 = vmatpush1.msra.mxu0 %v181
    %352 = vmatprep.subr.mxu0 %v186
    %353 = vmatpush1.msra.mxu0 %v185
    %354 = vmatprep.subr.mxu0 0.0
    %355 = vmatpush1.msra.mxu0 0.0
    %356 = vmatprep.subr.mxu0 0.0
    %357 = vmatpush1.msra.mxu0 0.0
    %358 = vmatprep.subr.mxu0 0.0
    %359 = vmatpush1.msra.mxu0 0.0
    %360 = vmatprep.subr.mxu0 0.0
    %361 = vmatpush1.msra.mxu0 0.0
    %362 = vmatprep.subr.mxu0 0.0
    %363 = vmatpush1.msra.mxu0 0.0
    %364 = vmatprep.subr.mxu0 0.0
    %365 = vmatpush1.msra.mxu0 0.0
    %366 = vmatprep.subr.mxu0 0.0
    %367 = vmatpush1.msra.mxu0 0.0
    %368 = vmatprep.subr.mxu0 0.0
    %369 = vmatpush1.msra.mxu0 0.0
    %370 = vmatprep.subr.mxu0 0.0
    %371 = vmatpush1.msra.mxu0 0.0
    %372 = vmatprep.subr.mxu0 0.0
    %373 = vmatpush1.msra.mxu0 0.0
    %374 = vmatprep.subr.mxu0 0.0
    %375 = vmatpush1.msra.mxu0 0.0
    %376 = vmatprep.subr.mxu0 0.0
    %377 = vmatpush1.msra.mxu0 0.0
    %378 = vmatprep.subr.mxu0 0.0
    %379 = vmatpush1.msra.mxu0 0.0
    %380 = vmatprep.subr.mxu0 0.0
    %381 = vmatpush1.msra.mxu0 0.0
    %382 = vmatprep.subr.mxu0 0.0
    %383 = vmatpush1.msra.mxu0 0.0
    %384 = vmatprep.subr.mxu0 0.0
    %385 = vmatpush1.msra.mxu0 0.0
    %386 = vmatprep.mubr.f32.mxu0 0.0
    %387 = vmatmul.mubr.f32.gmra.mrb[0].mxu0 %v115
    %v388 = vpop.f32.mrb[0].mxu0
    %v389 = vadd.f32 %v200, %v388
    %v390 = vpop.f32.mrb[0].mxu0
    %v391 = vadd.f32 %v204, %v390
    %392 = vmatprep.mubr.f32.mxu0 0.0
    %393 = vmatmul.mubr.f32.gmra.mrb[0].mxu0 %v116
    %v394 = vpop.f32.mrb[0].mxu0
    %v395 = vadd.f32 %v200, %v394
    %v396 = vpop.f32.mrb[0].mxu0
    %v397 = vadd.f32 %v204, %v396
    %398 = vmatprep.mubr.f32.mxu0 0.0
    %399 = vmatmul.mubr.f32.gmra.mrb[0].mxu0 %v117
    %v400 = vpop.f32.mrb[0].mxu0
    %v401 = vadd.f32 %v200, %v400
    %v402 = vpop.f32.mrb[0].mxu0
    %v403 = vadd.f32 %v204, %v402
    %404 = vmatprep.mubr.f32.mxu0 0.0
    %405 = vmatmul.mubr.f32.gmra.mrb[0].mxu0 %v118
    %v406 = vpop.f32.mrb[0].mxu0
    %v407 = vadd.f32 %v200, %v406
    %v408 = vpop.f32.mrb[0].mxu0
    %v409 = vadd.f32 %v204, %v408
    %410 = vmatprep.mubr.f32.mxu0 0.0
    %411 = vmatmul.mubr.f32.gmra.mrb[0].mxu0 %v119
    %v412 = vpop.f32.mrb[0].mxu0
    %v413 = vadd.f32 %v200, %v412
    %v414 = vpop.f32.mrb[0].mxu0
    %v415 = vadd.f32 %v204, %v414
    %416 = vmatprep.mubr.f32.mxu0 0.0
    %417 = vmatmul.mubr.f32.gmra.mrb[0].mxu0 %v120
    %v418 = vpop.f32.mrb[0].mxu0
    %v419 = vadd.f32 %v200, %v418
    %v420 = vpop.f32.mrb[0].mxu0
    %v421 = vadd.f32 %v204, %v420
    %422 = vmatprep.mubr.f32.mxu0 0.0
    %423 = vmatmul.mubr.f32.gmra.mrb[0].mxu0 %v121
    %v424 = vpop.f32.mrb[0].mxu0
    %v425 = vadd.f32 %v200, %v424
    %v426 = vpop.f32.mrb[0].mxu0
    %v427 = vadd.f32 %v204, %v426
    %428 = vmatprep.mubr.f32.mxu0 0.0
    %429 = vmatmul.mubr.f32.gmra.mrb[0].mxu0 %v122
    %v430 = vpop.f32.mrb[0].mxu0
    %v431 = vadd.f32 %v200, %v430
    %v432 = vpop.f32.mrb[0].mxu0
    %v433 = vadd.f32 %v204, %v432
    %434 = vdwg.mxu0
    %435 = vst [vmem:[#allocation2] sm:$0xff] %v276
    %436 = vst [vmem:[#allocation2 + $0x8] sm:$0xff] %v278
    %437 = vst [vmem:[#allocation2 + $0x10] sm:$0xff] %v389
    %438 = vst [vmem:[#allocation2 + $0x18] sm:$0xff] %v391
    %439 = vst [vmem:[#allocation2 + $0x20] sm:$0xff] %v282
    %440 = vst [vmem:[#allocation2 + $0x28] sm:$0xff] %v284
    %441 = vst [vmem:[#allocation2 + $0x30] sm:$0xff] %v395
    %442 = vst [vmem:[#allocation2 + $0x38] sm:$0xff] %v397
    %443 = vst [vmem:[#allocation2 + $0x40] sm:$0xff] %v288
    %444 = vst [vmem:[#allocation2 + $0x48] sm:$0xff] %v290
    %445 = vst [vmem:[#allocation2 + $0x50] sm:$0xff] %v401
    %446 = vst [vmem:[#allocation2 + $0x58] sm:$0xff] %v403
    %447 = vst [vmem:[#allocation2 + $0x60] sm:$0xff] %v294
    %448 = vst [vmem:[#allocation2 + $0x68] sm:$0xff] %v296
    %449 = vst [vmem:[#allocation2 + $0x70] sm:$0xff] %v407
    %450 = vst [vmem:[#allocation2 + $0x78] sm:$0xff] %v409
    %451 = vst [vmem:[#allocation2 + $0x80] sm:$0xff] %v300
    %452 = vst [vmem:[#allocation2 + $0x88] sm:$0xff] %v302
    %453 = vst [vmem:[#allocation2 + $0x90] sm:$0xff] %v413
    %454 = vst [vmem:[#allocation2 + $0x98] sm:$0xff] %v415
    %455 = vst [vmem:[#allocation2 + $0xa0] sm:$0xff] %v306
    %456 = vst [vmem:[#allocation2 + $0xa8] sm:$0xff] %v308
    %457 = vst [vmem:[#allocation2 + $0xb0] sm:$0xff] %v419
    %458 = vst [vmem:[#allocation2 + $0xb8] sm:$0xff] %v421
    %459 = vst [vmem:[#allocation2 + $0xc0] sm:$0xff] %v312
    %460 = vst [vmem:[#allocation2 + $0xc8] sm:$0xff] %v314
    %461 = vst [vmem:[#allocation2 + $0xd0] sm:$0xff] %v425
    %462 = vst [vmem:[#allocation2 + $0xd8] sm:$0xff] %v427
    %463 = vst [vmem:[#allocation2 + $0xe0] sm:$0xff] %v318
    %464 = vst [vmem:[#allocation2 + $0xe8] sm:$0xff] %v320
    %465 = vst [vmem:[#allocation2 + $0xf0] sm:$0xff] %v431
    %466 = vst [vmem:[#allocation2 + $0xf8] sm:$0xff] %v433
    %v467 = vld [vmem:[#allocation2] sm:$0xff]
    %v468 = vld [vmem:[#allocation2 + $0x8] sm:$0xff]
    %v469 = vld [vmem:[#allocation2 + $0x10] sm:$0xff]
    %v470 = vld [vmem:[#allocation2 + $0x18] sm:$0xff]
    %v471 = vld [vmem:[#allocation10] sm:$0xff]
    %v472 = vld [vmem:[#allocation10 + $0x8] sm:$0xff]
    %v473 = vld [vmem:[#allocation10 + $0x10] sm:$0xff]
    %v474 = vld [vmem:[#allocation10 + $0x18] sm:$0xff]
    %v475 = vld [vmem:[#allocation10 + $0x20] sm:$0xff]
    %v476 = vld [vmem:[#allocation10 + $0x28] sm:$0xff]
    %v477 = vld [vmem:[#allocation10 + $0x30] sm:$0xff]
    %v478 = vld [vmem:[#allocation10 + $0x38] sm:$0xff]
    %v479 = vld [vmem:[#allocation10 + $0x40] sm:$0xff]
    %v480 = vld [vmem:[#allocation10 + $0x48] sm:$0xff]
    %v481 = vld [vmem:[#allocation10 + $0x50] sm:$0xff]
    %v482 = vld [vmem:[#allocation10 + $0x58] sm:$0xff]
    %v483 = vld [vmem:[#allocation10 + $0x60] sm:$0xff]
    %v484 = vld [vmem:[#allocation10 + $0x68] sm:$0xff]
    %v485 = vld [vmem:[#allocation10 + $0x70] sm:$0xff]
    %v486 = vld [vmem:[#allocation10 + $0x78] sm:$0xff]
    %v487 = vld [vmem:[#allocation10 + $0x80] sm:$0xff]
    %v488 = vld [vmem:[#allocation10 + $0x88] sm:$0xff]
    %v489 = vld [vmem:[#allocation10 + $0x90] sm:$0xff]
    %v490 = vld [vmem:[#allocation10 + $0x98] sm:$0xff]
    %v491 = vld [vmem:[#allocation10 + $0xa0] sm:$0xff]
    %v492 = vld [vmem:[#allocation10 + $0xa8] sm:$0xff]
    %v493 = vld [vmem:[#allocation10 + $0xb0] sm:$0xff]
    %v494 = vld [vmem:[#allocation10 + $0xb8] sm:$0xff]
    %v495 = vld [vmem:[#allocation10 + $0xc0] sm:$0xff]
    %v496 = vld [vmem:[#allocation10 + $0xc8] sm:$0xff]
    %v497 = vld [vmem:[#allocation10 + $0xd0] sm:$0xff]
    %v498 = vld [vmem:[#allocation10 + $0xd8] sm:$0xff]
    %v499 = vld [vmem:[#allocation10 + $0xe0] sm:$0xff]
    %v500 = vld [vmem:[#allocation10 + $0xe8] sm:$0xff]
    %v501 = vld [vmem:[#allocation10 + $0xf0] sm:$0xff]
    %v502 = vld [vmem:[#allocation10 + $0xf8] sm:$0xff]
    %v503 = vld [vmem:[#allocation10 + $0x100] sm:$0xff]
    %v504 = vld [vmem:[#allocation10 + $0x108] sm:$0xff]
    %v505 = vld [vmem:[#allocation10 + $0x110] sm:$0xff]
    %v506 = vld [vmem:[#allocation10 + $0x118] sm:$0xff]
    %v507 = vld [vmem:[#allocation10 + $0x120] sm:$0xff]
    %v508 = vld [vmem:[#allocation10 + $0x128] sm:$0xff]
    %v509 = vld [vmem:[#allocation10 + $0x130] sm:$0xff]
    %v510 = vld [vmem:[#allocation10 + $0x138] sm:$0xff]
    %v511 = vld [vmem:[#allocation10 + $0x140] sm:$0xff]
    %v512 = vld [vmem:[#allocation10 + $0x148] sm:$0xff]
    %v513 = vld [vmem:[#allocation10 + $0x150] sm:$0xff]
    %v514 = vld [vmem:[#allocation10 + $0x158] sm:$0xff]
    %v515 = vld [vmem:[#allocation10 + $0x160] sm:$0xff]
    %v516 = vld [vmem:[#allocation10 + $0x168] sm:$0xff]
    %v517 = vld [vmem:[#allocation10 + $0x170] sm:$0xff]
    %v518 = vld [vmem:[#allocation10 + $0x178] sm:$0xff]
    %v519 = vld [vmem:[#allocation10 + $0x180] sm:$0xff]
    %v520 = vld [vmem:[#allocation10 + $0x188] sm:$0xff]
    %v521 = vld [vmem:[#allocation10 + $0x190] sm:$0xff]
    %v522 = vld [vmem:[#allocation10 + $0x198] sm:$0xff]
    %v523 = vld [vmem:[#allocation10 + $0x1a0] sm:$0xff]
    %v524 = vld [vmem:[#allocation10 + $0x1a8] sm:$0xff]
    %v525 = vld [vmem:[#allocation10 + $0x1b0] sm:$0xff]
    %v526 = vld [vmem:[#allocation10 + $0x1b8] sm:$0xff]
    %v527 = vld [vmem:[#allocation10 + $0x1c0] sm:$0xff]
    %v528 = vld [vmem:[#allocation10 + $0x1c8] sm:$0xff]
    %v529 = vld [vmem:[#allocation10 + $0x1d0] sm:$0xff]
    %v530 = vld [vmem:[#allocation10 + $0x1d8] sm:$0xff]
    %v531 = vld [vmem:[#allocation10 + $0x1e0] sm:$0xff]
    %v532 = vld [vmem:[#allocation10 + $0x1e8] sm:$0xff]
    %v533 = vld [vmem:[#allocation10 + $0x1f0] sm:$0xff]
    %v534 = vld [vmem:[#allocation10 + $0x1f8] sm:$0xff]
    %535 = vmatprep.subr.mxu0 %v472
    %536 = vmatpush1.msra.mxu0 %v471
    %537 = vmatprep.subr.mxu0 %v476
    %538 = vmatpush1.msra.mxu0 %v475
    %539 = vmatprep.subr.mxu0 %v480
    %540 = vmatpush1.msra.mxu0 %v479
    %541 = vmatprep.subr.mxu0 %v484
    %542 = vmatpush1.msra.mxu0 %v483
    %543 = vmatprep.subr.mxu0 %v488
    %544 = vmatpush1.msra.mxu0 %v487
    %545 = vmatprep.subr.mxu0 %v492
    %546 = vmatpush1.msra.mxu0 %v491
    %547 = vmatprep.subr.mxu0 %v496
    %548 = vmatpush1.msra.mxu0 %v495
    %549 = vmatprep.subr.mxu0 %v500
    %550 = vmatpush1.msra.mxu0 %v499
    %551 = vmatprep.subr.mxu0 %v504
    %552 = vmatpush1.msra.mxu0 %v503
    %553 = vmatprep.subr.mxu0 %v508
    %554 = vmatpush1.msra.mxu0 %v507
    %555 = vmatprep.subr.mxu0 %v512
    %556 = vmatpush1.msra.mxu0 %v511
    %557 = vmatprep.subr.mxu0 %v516
    %558 = vmatpush1.msra.mxu0 %v515
    %559 = vmatprep.subr.mxu0 %v520
    %560 = vmatpush1.msra.mxu0 %v519
    %561 = vmatprep.subr.mxu0 %v524
    %562 = vmatpush1.msra.mxu0 %v523
    %563 = vmatprep.subr.mxu0 %v528
    %564 = vmatpush1.msra.mxu0 %v527
    %565 = vmatprep.subr.mxu0 %v532
    %566 = vmatpush1.msra.mxu0 %v531
    %567 = vmatprep.subr.mxu0 0.0
    %568 = vmatpush1.msra.mxu0 0.0
    %569 = vmatprep.subr.mxu0 0.0
    %570 = vmatpush1.msra.mxu0 0.0
    %571 = vmatprep.subr.mxu0 0.0
    %572 = vmatpush1.msra.mxu0 0.0
    %573 = vmatprep.subr.mxu0 0.0
    %574 = vmatpush1.msra.mxu0 0.0
    %575 = vmatprep.subr.mxu0 0.0
    %576 = vmatpush1.msra.mxu0 0.0
    %577 = vmatprep.subr.mxu0 0.0
    %578 = vmatpush1.msra.mxu0 0.0
    %579 = vmatprep.subr.mxu0 0.0
    %580 = vmatpush1.msra.mxu0 0.0
    %581 = vmatprep.subr.mxu0 0.0
    %582 = vmatpush1.msra.mxu0 0.0
    %583 = vmatprep.subr.mxu0 0.0
    %584 = vmatpush1.msra.mxu0 0.0
    %585 = vmatprep.subr.mxu0 0.0
    %586 = vmatpush1.msra.mxu0 0.0
    %587 = vmatprep.subr.mxu0 0.0
    %588 = vmatpush1.msra.mxu0 0.0
    %589 = vmatprep.subr.mxu0 0.0
    %590 = vmatpush1.msra.mxu0 0.0
    %591 = vmatprep.subr.mxu0 0.0
    %592 = vmatpush1.msra.mxu0 0.0
    %593 = vmatprep.subr.mxu0 0.0
    %594 = vmatpush1.msra.mxu0 0.0
    %595 = vmatprep.subr.mxu0 0.0
    %596 = vmatpush1.msra.mxu0 0.0
    %597 = vmatprep.subr.mxu0 0.0
    %598 = vmatpush1.msra.mxu0 0.0
    %599 = vmatprep.mubr.f32.mxu0 0.0
    %600 = vmatmul.mubr.f32.gmra.mrb[0].mxu0 0.0
    %v601 = vpop.f32.mrb[0].mxu0
    %v602 = vadd.f32 0.0, %v601
    %v603 = vpop.f32.mrb[0].mxu0
    %v604 = vadd.f32 0.0, %v603
    %605 = vdwg.mxu0
    %606 = vmatprep.subr.mxu0 %v474
    %607 = vmatpush1.msra.mxu0 %v473
    %608 = vmatprep.subr.mxu0 %v478
    %609 = vmatpush1.msra.mxu0 %v477
    %610 = vmatprep.subr.mxu0 %v482
    %611 = vmatpush1.msra.mxu0 %v481
    %612 = vmatprep.subr.mxu0 %v486
    %613 = vmatpush1.msra.mxu0 %v485
    %614 = vmatprep.subr.mxu0 %v490
    %615 = vmatpush1.msra.mxu0 %v489
    %616 = vmatprep.subr.mxu0 %v494
    %617 = vmatpush1.msra.mxu0 %v493
    %618 = vmatprep.subr.mxu0 %v498
    %619 = vmatpush1.msra.mxu0 %v497
    %620 = vmatprep.subr.mxu0 %v502
    %621 = vmatpush1.msra.mxu0 %v501
    %622 = vmatprep.subr.mxu0 %v506
    %623 = vmatpush1.msra.mxu0 %v505
    %624 = vmatprep.subr.mxu0 %v510
    %625 = vmatpush1.msra.mxu0 %v509
    %626 = vmatprep.subr.mxu0 %v514
    %627 = vmatpush1.msra.mxu0 %v513
    %628 = vmatprep.subr.mxu0 %v518
    %629 = vmatpush1.msra.mxu0 %v517
    %630 = vmatprep.subr.mxu0 %v522
    %631 = vmatpush1.msra.mxu0 %v521
    %632 = vmatprep.subr.mxu0 %v526
    %633 = vmatpush1.msra.mxu0 %v525
    %634 = vmatprep.subr.mxu0 %v530
    %635 = vmatpush1.msra.mxu0 %v529
    %636 = vmatprep.subr.mxu0 %v534
    %637 = vmatpush1.msra.mxu0 %v533
    %638 = vmatprep.subr.mxu0 0.0
    %639 = vmatpush1.msra.mxu0 0.0
    %640 = vmatprep.subr.mxu0 0.0
    %641 = vmatpush1.msra.mxu0 0.0
    %642 = vmatprep.subr.mxu0 0.0
    %643 = vmatpush1.msra.mxu0 0.0
    %644 = vmatprep.subr.mxu0 0.0
    %645 = vmatpush1.msra.mxu0 0.0
    %646 = vmatprep.subr.mxu0 0.0
    %647 = vmatpush1.msra.mxu0 0.0
    %648 = vmatprep.subr.mxu0 0.0
    %649 = vmatpush1.msra.mxu0 0.0
    %650 = vmatprep.subr.mxu0 0.0
    %651 = vmatpush1.msra.mxu0 0.0
    %652 = vmatprep.subr.mxu0 0.0
    %653 = vmatpush1.msra.mxu0 0.0
    %654 = vmatprep.subr.mxu0 0.0
    %655 = vmatpush1.msra.mxu0 0.0
    %656 = vmatprep.subr.mxu0 0.0
    %657 = vmatpush1.msra.mxu0 0.0
    %658 = vmatprep.subr.mxu0 0.0
    %659 = vmatpush1.msra.mxu0 0.0
    %660 = vmatprep.subr.mxu0 0.0
    %661 = vmatpush1.msra.mxu0 0.0
    %662 = vmatprep.subr.mxu0 0.0
    %663 = vmatpush1.msra.mxu0 0.0
    %664 = vmatprep.subr.mxu0 0.0
    %665 = vmatpush1.msra.mxu0 0.0
    %666 = vmatprep.subr.mxu0 0.0
    %667 = vmatpush1.msra.mxu0 0.0
    %668 = vmatprep.subr.mxu0 0.0
    %669 = vmatpush1.msra.mxu0 0.0
    %670 = vmatprep.mubr.f32.mxu0 0.0
    %671 = vmatmul.mubr.f32.gmra.mrb[0].mxu0 0.0
    %v672 = vpop.f32.mrb[0].mxu0
    %v673 = vadd.f32 0.0, %v672
    %v674 = vpop.f32.mrb[0].mxu0
    %v675 = vadd.f32 0.0, %v674
    %676 = vdwg.mxu0
    %v677 = vadd.f32 %v467, %v602
    %v678 = vadd.f32 %v468, %v604
    %v679 = vadd.f32 %v469, %v673
    %v680 = vadd.f32 %v470, %v675
    %v681 = vxor.u32 %v677, 2147483648
    %v682 = vxor.u32 %v678, 2147483648
    %v683 = vxor.u32 %v679, 2147483648
    %v684 = vmul.f32 %v681, 1.442695
    %v685 = vpow.pop %v684
    %v686 = vmul.f32 %v682, 1.442695
    %v687 = vpow.pop %v686
    %v688 = vmul.f32 %v683, 1.442695
    %v689 = vpow.pop %v688
    %v690 = vadd.f32 %v685, 1.0
    %v691 = vadd.f32 %v687, 1.0
    %v692 = vadd.f32 %v689, 1.0
    %v693 = vrcp.pop %v690
    %v694 = vmul.f32 1.0, %v693
    %v695 = vrcp.pop %v691
    %v696 = vmul.f32 1.0, %v695
    %v697 = vrcp.pop %v692
    %v698 = vmul.f32 1.0, %v697
    %v699 = vtanh.pop %v680
    %v700 = vmul.f32 %v696, 0.0
    %v701 = vmul.f32 %v694, %v699
    %v702 = vadd.f32 %v700, %v701
    %v703 = vtanh.pop %v702
    %v704 = vmul.f32 %v698, %v703
    %705 = vst [vmem:[#allocation3] sm:$0xff] %v704
    %v706 = vld [vmem:[#allocation2 + $0x20] sm:$0xff]
    %v707 = vld [vmem:[#allocation2 + $0x28] sm:$0xff]
    %v708 = vld [vmem:[#allocation2 + $0x30] sm:$0xff]
    %v709 = vld [vmem:[#allocation2 + $0x38] sm:$0xff]
    %v710 = vld [vmem:[#allocation10] sm:$0xff]
    %v711 = vld [vmem:[#allocation10 + $0x8] sm:$0xff]
    %v712 = vld [vmem:[#allocation10 + $0x10] sm:$0xff]
    %v713 = vld [vmem:[#allocation10 + $0x18] sm:$0xff]
    %v714 = vld [vmem:[#allocation10 + $0x20] sm:$0xff]
    %v715 = vld [vmem:[#allocation10 + $0x28] sm:$0xff]
    %v716 = vld [vmem:[#allocation10 + $0x30] sm:$0xff]
    %v717 = vld [vmem:[#allocation10 + $0x38] sm:$0xff]
    %v718 = vld [vmem:[#allocation10 + $0x40] sm:$0xff]
    %v719 = vld [vmem:[#allocation10 + $0x48] sm:$0xff]
    %v720 = vld [vmem:[#allocation10 + $0x50] sm:$0xff]
    %v721 = vld [vmem:[#allocation10 + $0x58] sm:$0xff]
    %v722 = vld [vmem:[#allocation10 + $0x60] sm:$0xff]
    %v723 = vld [vmem:[#allocation10 + $0x68] sm:$0xff]
    %v724 = vld [vmem:[#allocation10 + $0x70] sm:$0xff]
    %v725 = vld [vmem:[#allocation10 + $0x78] sm:$0xff]
    %v726 = vld [vmem:[#allocation10 + $0x80] sm:$0xff]
    %v727 = vld [vmem:[#allocation10 + $0x88] sm:$0xff]
    %v728 = vld [vmem:[#allocation10 + $0x90] sm:$0xff]
    %v729 = vld [vmem:[#allocation10 + $0x98] sm:$0xff]
    %v730 = vld [vmem:[#allocation10 + $0xa0] sm:$0xff]
    %v731 = vld [vmem:[#allocation10 + $0xa8] sm:$0xff]
    %v732 = vld [vmem:[#allocation10 + $0xb0] sm:$0xff]
    %v733 = vld [vmem:[#allocation10 + $0xb8] sm:$0xff]
    %v734 = vld [vmem:[#allocation10 + $0xc0] sm:$0xff]
    %v735 = vld [vmem:[#allocation10 + $0xc8] sm:$0xff]
    %v736 = vld [vmem:[#allocation10 + $0xd0] sm:$0xff]
    %v737 = vld [vmem:[#allocation10 + $0xd8] sm:$0xff]
    %v738 = vld [vmem:[#allocation10 + $0xe0] sm:$0xff]
    %v739 = vld [vmem:[#allocation10 + $0xe8] sm:$0xff]
    %v740 = vld [vmem:[#allocation10 + $0xf0] sm:$0xff]
    %v741 = vld [vmem:[#allocation10 + $0xf8] sm:$0xff]
    %v742 = vld [vmem:[#allocation10 + $0x100] sm:$0xff]
    %v743 = vld [vmem:[#allocation10 + $0x108] sm:$0xff]
    %v744 = vld [vmem:[#allocation10 + $0x110] sm:$0xff]
    %v745 = vld [vmem:[#allocation10 + $0x118] sm:$0xff]
    %v746 = vld [vmem:[#allocation10 + $0x120] sm:$0xff]
    %v747 = vld [vmem:[#allocation10 + $0x128] sm:$0xff]
    %v748 = vld [vmem:[#allocation10 + $0x130] sm:$0xff]
    %v749 = vld [vmem:[#allocation10 + $0x138] sm:$0xff]
    %v750 = vld [vmem:[#allocation10 + $0x140] sm:$0xff]
    %v751 = vld [vmem:[#allocation10 + $0x148] sm:$0xff]
    %v752 = vld [vmem:[#allocation10 + $0x150] sm:$0xff]
    %v753 = vld [vmem:[#allocation10 + $0x158] sm:$0xff]
    %v754 = vld [vmem:[#allocation10 + $0x160] sm:$0xff]
    %v755 = vld [vmem:[#allocation10 + $0x168] sm:$0xff]
    %v756 = vld [vmem:[#allocation10 + $0x170] sm:$0xff]
    %v757 = vld [vmem:[#allocation10 + $0x178] sm:$0xff]
    %v758 = vld [vmem:[#allocation10 + $0x180] sm:$0xff]
    %v759 = vld [vmem:[#allocation10 + $0x188] sm:$0xff]
    %v760 = vld [vmem:[#allocation10 + $0x190] sm:$0xff]
    %v761 = vld [vmem:[#allocation10 + $0x198] sm:$0xff]
    %v762 = vld [vmem:[#allocation10 + $0x1a0] sm:$0xff]
    %v763 = vld [vmem:[#allocation10 + $0x1a8] sm:$0xff]
    %v764 = vld [vmem:[#allocation10 + $0x1b0] sm:$0xff]
    %v765 = vld [vmem:[#allocation10 + $0x1b8] sm:$0xff]
    %v766 = vld [vmem:[#allocation10 + $0x1c0] sm:$0xff]
    %v767 = vld [vmem:[#allocation10 + $0x1c8] sm:$0xff]
    %v768 = vld [vmem:[#allocation10 + $0x1d0] sm:$0xff]
    %v769 = vld [vmem:[#allocation10 + $0x1d8] sm:$0xff]
    %v770 = vld [vmem:[#allocation10 + $0x1e0] sm:$0xff]
    %v771 = vld [vmem:[#allocation10 + $0x1e8] sm:$0xff]
    %v772 = vld [vmem:[#allocation10 + $0x1f0] sm:$0xff]
    %v773 = vld [vmem:[#allocation10 + $0x1f8] sm:$0xff]
    %774 = vmatprep.subr.mxu0 %v711
    %775 = vmatpush1.msra.mxu0 %v710
    %776 = vmatprep.subr.mxu0 %v715
    %777 = vmatpush1.msra.mxu0 %v714
    %778 = vmatprep.subr.mxu0 %v719
    %779 = vmatpush1.msra.mxu0 %v718
    %780 = vmatprep.subr.mxu0 %v723
    %781 = vmatpush1.msra.mxu0 %v722
    %782 = vmatprep.subr.mxu0 %v727
    %783 = vmatpush1.msra.mxu0 %v726
    %784 = vmatprep.subr.mxu0 %v731
    %785 = vmatpush1.msra.mxu0 %v730
    %786 = vmatprep.subr.mxu0 %v735
    %787 = vmatpush1.msra.mxu0 %v734
    %788 = vmatprep.subr.mxu0 %v739
    %789 = vmatpush1.msra.mxu0 %v738
    %790 = vmatprep.subr.mxu0 %v743
    %791 = vmatpush1.msra.mxu0 %v742
    %792 = vmatprep.subr.mxu0 %v747
    %793 = vmatpush1.msra.mxu0 %v746
    %794 = vmatprep.subr.mxu0 %v751
    %795 = vmatpush1.msra.mxu0 %v750
    %796 = vmatprep.subr.mxu0 %v755
    %797 = vmatpush1.msra.mxu0 %v754
    %798 = vmatprep.subr.mxu0 %v759
    %799 = vmatpush1.msra.mxu0 %v758
    %800 = vmatprep.subr.mxu0 %v763
    %801 = vmatpush1.msra.mxu0 %v762
    %802 = vmatprep.subr.mxu0 %v767
    %803 = vmatpush1.msra.mxu0 %v766
    %804 = vmatprep.subr.mxu0 %v771
    %805 = vmatpush1.msra.mxu0 %v770
    %806 = vmatprep.subr.mxu0 0.0
    %807 = vmatpush1.msra.mxu0 0.0
    %808 = vmatprep.subr.mxu0 0.0
    %809 = vmatpush1.msra.mxu0 0.0
    %810 = vmatprep.subr.mxu0 0.0
    %811 = vmatpush1.msra.mxu0 0.0
    %812 = vmatprep.subr.mxu0 0.0
    %813 = vmatpush1.msra.mxu0 0.0
    %814 = vmatprep.subr.mxu0 0.0
    %815 = vmatpush1.msra.mxu0 0.0
    %816 = vmatprep.subr.mxu0 0.0
    %817 = vmatpush1.msra.mxu0 0.0
    %818 = vmatprep.subr.mxu0 0.0
    %819 = vmatpush1.msra.mxu0 0.0
    %820 = vmatprep.subr.mxu0 0.0
    %821 = vmatpush1.msra.mxu0 0.0
    %822 = vmatprep.subr.mxu0 0.0
    %823 = vmatpush1.msra.mxu0 0.0
    %824 = vmatprep.subr.mxu0 0.0
    %825 = vmatpush1.msra.mxu0 0.0
    %826 = vmatprep.subr.mxu0 0.0
    %827 = vmatpush1.msra.mxu0 0.0
    %828 = vmatprep.subr.mxu0 0.0
    %829 = vmatpush1.msra.mxu0 0.0
    %830 = vmatprep.subr.mxu0 0.0
    %831 = vmatpush1.msra.mxu0 0.0
    %832 = vmatprep.subr.mxu0 0.0
    %833 = vmatpush1.msra.mxu0 0.0
    %834 = vmatprep.subr.mxu0 0.0
    %835 = vmatpush1.msra.mxu0 0.0
    %836 = vmatprep.subr.mxu0 0.0
    %837 = vmatpush1.msra.mxu0 0.0
    %838 = vmatprep.mubr.f32.mxu0 0.0
    %839 = vmatmul.mubr.f32.gmra.mrb[0].mxu0 %v704
    %v840 = vpop.f32.mrb[0].mxu0
    %v841 = vadd.f32 0.0, %v840
    %v842 = vpop.f32.mrb[0].mxu0
    %v843 = vadd.f32 0.0, %v842
    %844 = vdwg.mxu0
    %845 = vmatprep.subr.mxu0 %v713
    %846 = vmatpush1.msra.mxu0 %v712
    %847 = vmatprep.subr.mxu0 %v717
    %848 = vmatpush1.msra.mxu0 %v716
    %849 = vmatprep.subr.mxu0 %v721
    %850 = vmatpush1.msra.mxu0 %v720
    %851 = vmatprep.subr.mxu0 %v725
    %852 = vmatpush1.msra.mxu0 %v724
    %853 = vmatprep.subr.mxu0 %v729
    %854 = vmatpush1.msra.mxu0 %v728
    %855 = vmatprep.subr.mxu0 %v733
    %856 = vmatpush1.msra.mxu0 %v732
    %857 = vmatprep.subr.mxu0 %v737
    %858 = vmatpush1.msra.mxu0 %v736
    %859 = vmatprep.subr.mxu0 %v741
    %860 = vmatpush1.msra.mxu0 %v740
    %861 = vmatprep.subr.mxu0 %v745
    %862 = vmatpush1.msra.mxu0 %v744
    %863 = vmatprep.subr.mxu0 %v749
    %864 = vmatpush1.msra.mxu0 %v748
    %865 = vmatprep.subr.mxu0 %v753
    %866 = vmatpush1.msra.mxu0 %v752
    %867 = vmatprep.subr.mxu0 %v757
    %868 = vmatpush1.msra.mxu0 %v756
    %869 = vmatprep.subr.mxu0 %v761
    %870 = vmatpush1.msra.mxu0 %v760
    %871 = vmatprep.subr.mxu0 %v765
    %872 = vmatpush1.msra.mxu0 %v764
    %873 = vmatprep.subr.mxu0 %v769
    %874 = vmatpush1.msra.mxu0 %v768
    %875 = vmatprep.subr.mxu0 %v773
    %876 = vmatpush1.msra.mxu0 %v772
    %877 = vmatprep.subr.mxu0 0.0
    %878 = vmatpush1.msra.mxu0 0.0
    %879 = vmatprep.subr.mxu0 0.0
    %880 = vmatpush1.msra.mxu0 0.0
    %881 = vmatprep.subr.mxu0 0.0
    %882 = vmatpush1.msra.mxu0 0.0
    %883 = vmatprep.subr.mxu0 0.0
    %884 = vmatpush1.msra.mxu0 0.0
    %885 = vmatprep.subr.mxu0 0.0
    %886 = vmatpush1.msra.mxu0 0.0
    %887 = vmatprep.subr.mxu0 0.0
    %888 = vmatpush1.msra.mxu0 0.0
    %889 = vmatprep.subr.mxu0 0.0
    %890 = vmatpush1.msra.mxu0 0.0
    %891 = vmatprep.subr.mxu0 0.0
    %892 = vmatpush1.msra.mxu0 0.0
    %893 = vmatprep.subr.mxu0 0.0
    %894 = vmatpush1.msra.mxu0 0.0
    %895 = vmatprep.subr.mxu0 0.0
    %896 = vmatpush1.msra.mxu0 0.0
    %897 = vmatprep.subr.mxu0 0.0
    %898 = vmatpush1.msra.mxu0 0.0
    %899 = vmatprep.subr.mxu0 0.0
    %900 = vmatpush1.msra.mxu0 0.0
    %901 = vmatprep.subr.mxu0 0.0
    %902 = vmatpush1.msra.mxu0 0.0
    %903 = vmatprep.subr.mxu0 0.0
    %904 = vmatpush1.msra.mxu0 0.0
    %905 = vmatprep.subr.mxu0 0.0
    %906 = vmatpush1.msra.mxu0 0.0
    %907 = vmatprep.subr.mxu0 0.0
    %908 = vmatpush1.msra.mxu0 0.0
    %909 = vmatprep.mubr.f32.mxu0 0.0
    %910 = vmatmul.mubr.f32.gmra.mrb[0].mxu0 %v704
    %v911 = vpop.f32.mrb[0].mxu0
    %v912 = vadd.f32 0.0, %v911
    %v913 = vpop.f32.mrb[0].mxu0
    %v914 = vadd.f32 0.0, %v913
    %915 = vdwg.mxu0
    %v916 = vadd.f32 %v706, %v841
    %v917 = vadd.f32 %v707, %v843
    %v918 = vadd.f32 %v708, %v912
    %v919 = vadd.f32 %v709, %v914
    %v920 = vxor.u32 %v916, 2147483648
    %v921 = vxor.u32 %v917, 2147483648
    %v922 = vxor.u32 %v918, 2147483648
    %v923 = vmul.f32 %v920, 1.442695
    %v924 = vpow.pop %v923
    %v925 = vmul.f32 %v921, 1.442695
    %v926 = vpow.pop %v925
    %v927 = vmul.f32 %v922, 1.442695
    %v928 = vpow.pop %v927
    %v929 = vadd.f32 %v924, 1.0
    %v930 = vadd.f32 %v926, 1.0
    %v931 = vadd.f32 %v928, 1.0
    %v932 = vrcp.pop %v929
    %v933 = vmul.f32 1.0, %v932
    %v934 = vrcp.pop %v930
    %v935 = vmul.f32 1.0, %v934
    %v936 = vrcp.pop %v931
    %v937 = vmul.f32 1.0, %v936
    %v938 = vtanh.pop %v919
    %v939 = vmul.f32 %v935, %v702
    %v940 = vmul.f32 %v933, %v938
    %v941 = vadd.f32 %v939, %v940
    %v942 = vtanh.pop %v941
    %v943 = vmul.f32 %v937, %v942
    %944 = vst [vmem:[#allocation3 + $0x8] sm:$0xff] %v943
    %v945 = vld [vmem:[#allocation2 + $0x40] sm:$0xff]
    %v946 = vld [vmem:[#allocation2 + $0x48] sm:$0xff]
    %v947 = vld [vmem:[#allocation2 + $0x50] sm:$0xff]
    %v948 = vld [vmem:[#allocation2 + $0x58] sm:$0xff]
    %v949 = vld [vmem:[#allocation10] sm:$0xff]
    %v950 = vld [vmem:[#allocation10 + $0x8] sm:$0xff]
    %v951 = vld [vmem:[#allocation10 + $0x10] sm:$0xff]
    %v952 = vld [vmem:[#allocation10 + $0x18] sm:$0xff]
    %v953 = vld [vmem:[#allocation10 + $0x20] sm:$0xff]
    %v954 = vld [vmem:[#allocation10 + $0x28] sm:$0xff]
    %v955 = vld [vmem:[#allocation10 + $0x30] sm:$0xff]
    %v956 = vld [vmem:[#allocation10 + $0x38] sm:$0xff]
    %v957 = vld [vmem:[#allocation10 + $0x40] sm:$0xff]
    %v958 = vld [vmem:[#allocation10 + $0x48] sm:$0xff]
    %v959 = vld [vmem:[#allocation10 + $0x50] sm:$0xff]
    %v960 = vld [vmem:[#allocation10 + $0x58] sm:$0xff]
    %v961 = vld [vmem:[#allocation10 + $0x60] sm:$0xff]
    %v962 = vld [vmem:[#allocation10 + $0x68] sm:$0xff]
    %v963 = vld [vmem:[#allocation10 + $0x70] sm:$0xff]
    %v964 = vld [vmem:[#allocation10 + $0x78] sm:$0xff]
    %v965 = vld [vmem:[#allocation10 + $0x80] sm:$0xff]
    %v966 = vld [vmem:[#allocation10 + $0x88] sm:$0xff]
    %v967 = vld [vmem:[#allocation10 + $0x90] sm:$0xff]
    %v968 = vld [vmem:[#allocation10 + $0x98] sm:$0xff]
    %v969 = vld [vmem:[#allocation10 + $0xa0] sm:$0xff]
    %v970 = vld [vmem:[#allocation10 + $0xa8] sm:$0xff]
    %v971 = vld [vmem:[#allocation10 + $0xb0] sm:$0xff]
    %v972 = vld [vmem:[#allocation10 + $0xb8] sm:$0xff]
    %v973 = vld [vmem:[#allocation10 + $0xc0] sm:$0xff]
    %v974 = vld [vmem:[#allocation10 + $0xc8] sm:$0xff]
    %v975 = vld [vmem:[#allocation10 + $0xd0] sm:$0xff]
    %v976 = vld [vmem:[#allocation10 + $0xd8] sm:$0xff]
    %v977 = vld [vmem:[#allocation10 + $0xe0] sm:$0xff]
    %v978 = vld [vmem:[#allocation10 + $0xe8] sm:$0xff]
    %v979 = vld [vmem:[#allocation10 + $0xf0] sm:$0xff]
    %v980 = vld [vmem:[#allocation10 + $0xf8] sm:$0xff]
    %v981 = vld [vmem:[#allocation10 + $0x100] sm:$0xff]
    %v982 = vld [vmem:[#allocation10 + $0x108] sm:$0xff]
    %v983 = vld [vmem:[#allocation10 + $0x110] sm:$0xff]
    %v984 = vld [vmem:[#allocation10 + $0x118] sm:$0xff]
    %v985 = vld [vmem:[#allocation10 + $0x120] sm:$0xff]
    %v986 = vld [vmem:[#allocation10 + $0x128] sm:$0xff]
    %v987 = vld [vmem:[#allocation10 + $0x130] sm:$0xff]
    %v988 = vld [vmem:[#allocation10 + $0x138] sm:$0xff]
    %v989 = vld [vmem:[#allocation10 + $0x140] sm:$0xff]
    %v990 = vld [vmem:[#allocation10 + $0x148] sm:$0xff]
    %v991 = vld [vmem:[#allocation10 + $0x150] sm:$0xff]
    %v992 = vld [vmem:[#allocation10 + $0x158] sm:$0xff]
    %v993 = vld [vmem:[#allocation10 + $0x160] sm:$0xff]
    %v994 = vld [vmem:[#allocation10 + $0x168] sm:$0xff]
    %v995 = vld [vmem:[#allocation10 + $0x170] sm:$0xff]
    %v996 = vld [vmem:[#allocation10 + $0x178] sm:$0xff]
    %v997 = vld [vmem:[#allocation10 + $0x180] sm:$0xff]
    %v998 = vld [vmem:[#allocation10 + $0x188] sm:$0xff]
    %v999 = vld [vmem:[#allocation10 + $0x190] sm:$0xff]
    %v1000 = vld [vmem:[#allocation10 + $0x198] sm:$0xff]
    %v1001 = vld [vmem:[#allocation10 + $0x1a0] sm:$0xff]
    %v1002 = vld [vmem:[#allocation10 + $0x1a8] sm:$0xff]
    %v1003 = vld [vmem:[#allocation10 + $0x1b0] sm:$0xff]
    %v1004 = vld [vmem:[#allocation10 + $0x1b8] sm:$0xff]
    %v1005 = vld [vmem:[#allocation10 + $0x1c0] sm:$0xff]
    %v1006 = vld [vmem:[#allocation10 + $0x1c8] sm:$0xff]
    %v1007 = vld [vmem:[#allocation10 + $0x1d0] sm:$0xff]
    %v1008 = vld [vmem:[#allocation10 + $0x1d8] sm:$0xff]
    %v1009 = vld [vmem:[#allocation10 + $0x1e0] sm:$0xff]
    %v1010 = vld [vmem:[#allocation10 + $0x1e8] sm:$0xff]
    %v1011 = vld [vmem:[#allocation10 + $0x1f0] sm:$0xff]
    %v1012 = vld [vmem:[#allocation10 + $0x1f8] sm:$0xff]
    %1013 = vmatprep.subr.mxu0 %v950
    %1014 = vmatpush1.msra.mxu0 %v949
    %1015 = vmatprep.subr.mxu0 %v954
    %1016 = vmatpush1.msra.mxu0 %v953
    %1017 = vmatprep.subr.mxu0 %v958
    %1018 = vmatpush1.msra.mxu0 %v957
    %1019 = vmatprep.subr.mxu0 %v962
    %1020 = vmatpush1.msra.mxu0 %v961
    %1021 = vmatprep.subr.mxu0 %v966
    %1022 = vmatpush1.msra.mxu0 %v965
    %1023 = vmatprep.subr.mxu0 %v970
    %1024 = vmatpush1.msra.mxu0 %v969
    %1025 = vmatprep.subr.mxu0 %v974
    %1026 = vmatpush1.msra.mxu0 %v973
    %1027 = vmatprep.subr.mxu0 %v978
    %1028 = vmatpush1.msra.mxu0 %v977
    %1029 = vmatprep.subr.mxu0 %v982
    %1030 = vmatpush1.msra.mxu0 %v981
    %1031 = vmatprep.subr.mxu0 %v986
    %1032 = vmatpush1.msra.mxu0 %v985
    %1033 = vmatprep.subr.mxu0 %v990
    %1034 = vmatpush1.msra.mxu0 %v989
    %1035 = vmatprep.subr.mxu0 %v994
    %1036 = vmatpush1.msra.mxu0 %v993
    %1037 = vmatprep.subr.mxu0 %v998
    %1038 = vmatpush1.msra.mxu0 %v997
    %1039 = vmatprep.subr.mxu0 %v1002
    %1040 = vmatpush1.msra.mxu0 %v1001
    %1041 = vmatprep.subr.mxu0 %v1006
    %1042 = vmatpush1.msra.mxu0 %v1005
    %1043 = vmatprep.subr.mxu0 %v1010
    %1044 = vmatpush1.msra.mxu0 %v1009
    %1045 = vmatprep.subr.mxu0 0.0
    %1046 = vmatpush1.msra.mxu0 0.0
    %1047 = vmatprep.subr.mxu0 0.0
    %1048 = vmatpush1.msra.mxu0 0.0
    %1049 = vmatprep.subr.mxu0 0.0
    %1050 = vmatpush1.msra.mxu0 0.0
    %1051 = vmatprep.subr.mxu0 0.0
    %1052 = vmatpush1.msra.mxu0 0.0
    %1053 = vmatprep.subr.mxu0 0.0
    %1054 = vmatpush1.msra.mxu0 0.0
    %1055 = vmatprep.subr.mxu0 0.0
    %1056 = vmatpush1.msra.mxu0 0.0
    %1057 = vmatprep.subr.mxu0 0.0
    %1058 = vmatpush1.msra.mxu0 0.0
    %1059 = vmatprep.subr.mxu0 0.0
    %1060 = vmatpush1.msra.mxu0 0.0
    %1061 = vmatprep.subr.mxu0 0.0
    %1062 = vmatpush1.msra.mxu0 0.0
    %1063 = vmatprep.subr.mxu0 0.0
    %1064 = vmatpush1.msra.mxu0 0.0
    %1065 = vmatprep.subr.mxu0 0.0
    %1066 = vmatpush1.msra.mxu0 0.0
    %1067 = vmatprep.subr.mxu0 0.0
    %1068 = vmatpush1.msra.mxu0 0.0
    %1069 = vmatprep.subr.mxu0 0.0
    %1070 = vmatpush1.msra.mxu0 0.0
    %1071 = vmatprep.subr.mxu0 0.0
    %1072 = vmatpush1.msra.mxu0 0.0
    %1073 = vmatprep.subr.mxu0 0.0
    %1074 = vmatpush1.msra.mxu0 0.0
    %1075 = vmatprep.subr.mxu0 0.0
    %1076 = vmatpush1.msra.mxu0 0.0
    %1077 = vmatprep.mubr.f32.mxu0 0.0
    %1078 = vmatmul.mubr.f32.gmra.mrb[0].mxu0 %v943
    %v1079 = vpop.f32.mrb[0].mxu0
    %v1080 = vadd.f32 0.0, %v1079
    %v1081 = vpop.f32.mrb[0].mxu0
    %v1082 = vadd.f32 0.0, %v1081
    %1083 = vdwg.mxu0
    %1084 = vmatprep.subr.mxu0 %v952
    %1085 = vmatpush1.msra.mxu0 %v951
    %1086 = vmatprep.subr.mxu0 %v956
    %1087 = vmatpush1.msra.mxu0 %v955
    %1088 = vmatprep.subr.mxu0 %v960
    %1089 = vmatpush1.msra.mxu0 %v959
    %1090 = vmatprep.subr.mxu0 %v964
    %1091 = vmatpush1.msra.mxu0 %v963
    %1092 = vmatprep.subr.mxu0 %v968
    %1093 = vmatpush1.msra.mxu0 %v967
    %1094 = vmatprep.subr.mxu0 %v972
    %1095 = vmatpush1.msra.mxu0 %v971
    %1096 = vmatprep.subr.mxu0 %v976
    %1097 = vmatpush1.msra.mxu0 %v975
    %1098 = vmatprep.subr.mxu0 %v980
    %1099 = vmatpush1.msra.mxu0 %v979
    %1100 = vmatprep.subr.mxu0 %v984
    %1101 = vmatpush1.msra.mxu0 %v983
    %1102 = vmatprep.subr.mxu0 %v988
    %1103 = vmatpush1.msra.mxu0 %v987
    %1104 = vmatprep.subr.mxu0 %v992
    %1105 = vmatpush1.msra.mxu0 %v991
    %1106 = vmatprep.subr.mxu0 %v996
    %1107 = vmatpush1.msra.mxu0 %v995
    %1108 = vmatprep.subr.mxu0 %v1000
    %1109 = vmatpush1.msra.mxu0 %v999
    %1110 = vmatprep.subr.mxu0 %v1004
    %1111 = vmatpush1.msra.mxu0 %v1003
    %1112 = vmatprep.subr.mxu0 %v1008
    %1113 = vmatpush1.msra.mxu0 %v1007
    %1114 = vmatprep.subr.mxu0 %v1012
    %1115 = vmatpush1.msra.mxu0 %v1011
    %1116 = vmatprep.subr.mxu0 0.0
    %1117 = vmatpush1.msra.mxu0 0.0
    %1118 = vmatprep.subr.mxu0 0.0
    %1119 = vmatpush1.msra.mxu0 0.0
    %1120 = vmatprep.subr.mxu0 0.0
    %1121 = vmatpush1.msra.mxu0 0.0
    %1122 = vmatprep.subr.mxu0 0.0
    %1123 = vmatpush1.msra.mxu0 0.0
    %1124 = vmatprep.subr.mxu0 0.0
    %1125 = vmatpush1.msra.mxu0 0.0
    %1126 = vmatprep.subr.mxu0 0.0
    %1127 = vmatpush1.msra.mxu0 0.0
    %1128 = vmatprep.subr.mxu0 0.0
    %1129 = vmatpush1.msra.mxu0 0.0
    %1130 = vmatprep.subr.mxu0 0.0
    %1131 = vmatpush1.msra.mxu0 0.0
    %1132 = vmatprep.subr.mxu0 0.0
    %1133 = vmatpush1.msra.mxu0 0.0
    %1134 = vmatprep.subr.mxu0 0.0
    %1135 = vmatpush1.msra.mxu0 0.0
    %1136 = vmatprep.subr.mxu0 0.0
    %1137 = vmatpush1.msra.mxu0 0.0
    %1138 = vmatprep.subr.mxu0 0.0
    %1139 = vmatpush1.msra.mxu0 0.0
    %1140 = vmatprep.subr.mxu0 0.0
    %1141 = vmatpush1.msra.mxu0 0.0
    %1142 = vmatprep.subr.mxu0 0.0
    %1143 = vmatpush1.msra.mxu0 0.0
    %1144 = vmatprep.subr.mxu0 0.0
    %1145 = vmatpush1.msra.mxu0 0.0
    %1146 = vmatprep.subr.mxu0 0.0
    %1147 = vmatpush1.msra.mxu0 0.0
    %1148 = vmatprep.mubr.f32.mxu0 0.0
    %1149 = vmatmul.mubr.f32.gmra.mrb[0].mxu0 %v943
    %v1150 = vpop.f32.mrb[0].mxu0
    %v1151 = vadd.f32 0.0, %v1150
    %v1152 = vpop.f32.mrb[0].mxu0
    %v1153 = vadd.f32 0.0, %v1152
    %1154 = vdwg.mxu0
    %v1155 = vadd.f32 %v945, %v1080
    %v1156 = vadd.f32 %v946, %v1082
    %v1157 = vadd.f32 %v947, %v1151
    %v1158 = vadd.f32 %v948, %v1153
    %v1159 = vxor.u32 %v1155, 2147483648
    %v1160 = vxor.u32 %v1156, 2147483648
    %v1161 = vxor.u32 %v1157, 2147483648
    %v1162 = vmul.f32 %v1159, 1.442695
    %v1163 = vpow.pop %v1162
    %v1164 = vmul.f32 %v1160, 1.442695
    %v1165 = vpow.pop %v1164
    %v1166 = vmul.f32 %v1161, 1.442695
    %v1167 = vpow.pop %v1166
    %v1168 = vadd.f32 %v1163, 1.0
    %v1169 = vadd.f32 %v1165, 1.0
    %v1170 = vadd.f32 %v1167, 1.0
    %v1171 = vrcp.pop %v1168
    %v1172 = vmul.f32 1.0, %v1171
    %v1173 = vrcp.pop %v1169
    %v1174 = vmul.f32 1.0, %v1173
    %v1175 = vrcp.pop %v1170
    %v1176 = vmul.f32 1.0, %v1175
    %v1177 = vtanh.pop %v1158
    %v1178 = vmul.f32 %v1174, %v941
    %v1179 = vmul.f32 %v1172, %v1177
    %v1180 = vadd.f32 %v1178, %v1179
    %v1181 = vtanh.pop %v1180
    %v1182 = vmul.f32 %v1176, %v1181
    %1183 = vst [vmem:[#allocation3 + $0x10] sm:$0xff] %v1182
    %v1184 = vld [vmem:[#allocation2 + $0x60] sm:$0xff]
    %v1185 = vld [vmem:[#allocation2 + $0x68] sm:$0xff]
    %v1186 = vld [vmem:[#allocation2 + $0x70] sm:$0xff]
    %v1187 = vld [vmem:[#allocation2 + $0x78] sm:$0xff]
    %v1188 = vld [vmem:[#allocation10] sm:$0xff]
    %v1189 = vld [vmem:[#allocation10 + $0x8] sm:$0xff]
    %v1190 = vld [vmem:[#allocation10 + $0x10] sm:$0xff]
    %v1191 = vld [vmem:[#allocation10 + $0x18] sm:$0xff]
    %v1192 = vld [vmem:[#allocation10 + $0x20] sm:$0xff]
    %v1193 = vld [vmem:[#allocation10 + $0x28] sm:$0xff]
    %v1194 = vld [vmem:[#allocation10 + $0x30] sm:$0xff]
    %v1195 = vld [vmem:[#allocation10 + $0x38] sm:$0xff]
    %v1196 = vld [vmem:[#allocation10 + $0x40] sm:$0xff]
    %v1197 = vld [vmem:[#allocation10 + $0x48] sm:$0xff]
    %v1198 = vld [vmem:[#allocation10 + $0x50] sm:$0xff]
    %v1199 = vld [vmem:[#allocation10 + $0x58] sm:$0xff]
    %v1200 = vld [vmem:[#allocation10 + $0x60] sm:$0xff]
    %v1201 = vld [vmem:[#allocation10 + $0x68] sm:$0xff]
    %v1202 = vld [vmem:[#allocation10 + $0x70] sm:$0xff]
    %v1203 = vld [vmem:[#allocation10 + $0x78] sm:$0xff]
    %v1204 = vld [vmem:[#allocation10 + $0x80] sm:$0xff]
    %v1205 = vld [vmem:[#allocation10 + $0x88] sm:$0xff]
    %v1206 = vld [vmem:[#allocation10 + $0x90] sm:$0xff]
    %v1207 = vld [vmem:[#allocation10 + $0x98] sm:$0xff]
    %v1208 = vld [vmem:[#allocation10 + $0xa0] sm:$0xff]
    %v1209 = vld [vmem:[#allocation10 + $0xa8] sm:$0xff]
    %v1210 = vld [vmem:[#allocation10 + $0xb0] sm:$0xff]
    %v1211 = vld [vmem:[#allocation10 + $0xb8] sm:$0xff]
    %v1212 = vld [vmem:[#allocation10 + $0xc0] sm:$0xff]
    %v1213 = vld [vmem:[#allocation10 + $0xc8] sm:$0xff]
    %v1214 = vld [vmem:[#allocation10 + $0xd0] sm:$0xff]
    %v1215 = vld [vmem:[#allocation10 + $0xd8] sm:$0xff]
    %v1216 = vld [vmem:[#allocation10 + $0xe0] sm:$0xff]
    %v1217 = vld [vmem:[#allocation10 + $0xe8] sm:$0xff]
    %v1218 = vld [vmem:[#allocation10 + $0xf0] sm:$0xff]
    %v1219 = vld [vmem:[#allocation10 + $0xf8] sm:$0xff]
    %v1220 = vld [vmem:[#allocation10 + $0x100] sm:$0xff]
    %v1221 = vld [vmem:[#allocation10 + $0x108] sm:$0xff]
    %v1222 = vld [vmem:[#allocation10 + $0x110] sm:$0xff]
    %v1223 = vld [vmem:[#allocation10 + $0x118] sm:$0xff]
    %v1224 = vld [vmem:[#allocation10 + $0x120] sm:$0xff]
    %v1225 = vld [vmem:[#allocation10 + $0x128] sm:$0xff]
    %v1226 = vld [vmem:[#allocation10 + $0x130] sm:$0xff]
    %v1227 = vld [vmem:[#allocation10 + $0x138] sm:$0xff]
    %v1228 = vld [vmem:[#allocation10 + $0x140] sm:$0xff]
    %v1229 = vld [vmem:[#allocation10 + $0x148] sm:$0xff]
    %v1230 = vld [vmem:[#allocation10 + $0x150] sm:$0xff]
    %v1231 = vld [vmem:[#allocation10 + $0x158] sm:$0xff]
    %v1232 = vld [vmem:[#allocation10 + $0x160] sm:$0xff]
    %v1233 = vld [vmem:[#allocation10 + $0x168] sm:$0xff]
    %v1234 = vld [vmem:[#allocation10 + $0x170] sm:$0xff]
    %v1235 = vld [vmem:[#allocation10 + $0x178] sm:$0xff]
    %v1236 = vld [vmem:[#allocation10 + $0x180] sm:$0xff]
    %v1237 = vld [vmem:[#allocation10 + $0x188] sm:$0xff]
    %v1238 = vld [vmem:[#allocation10 + $0x190] sm:$0xff]
    %v1239 = vld [vmem:[#allocation10 + $0x198] sm:$0xff]
    %v1240 = vld [vmem:[#allocation10 + $0x1a0] sm:$0xff]
    %v1241 = vld [vmem:[#allocation10 + $0x1a8] sm:$0xff]
    %v1242 = vld [vmem:[#allocation10 + $0x1b0] sm:$0xff]
    %v1243 = vld [vmem:[#allocation10 + $0x1b8] sm:$0xff]
    %v1244 = vld [vmem:[#allocation10 + $0x1c0] sm:$0xff]
    %v1245 = vld [vmem:[#allocation10 + $0x1c8] sm:$0xff]
    %v1246 = vld [vmem:[#allocation10 + $0x1d0] sm:$0xff]
    %v1247 = vld [vmem:[#allocation10 + $0x1d8] sm:$0xff]
    %v1248 = vld [vmem:[#allocation10 + $0x1e0] sm:$0xff]
    %v1249 = vld [vmem:[#allocation10 + $0x1e8] sm:$0xff]
    %v1250 = vld [vmem:[#allocation10 + $0x1f0] sm:$0xff]
    %v1251 = vld [vmem:[#allocation10 + $0x1f8] sm:$0xff]
    %1252 = vmatprep.subr.mxu0 %v1189
    %1253 = vmatpush1.msra.mxu0 %v1188
    %1254 = vmatprep.subr.mxu0 %v1193
    %1255 = vmatpush1.msra.mxu0 %v1192
    %1256 = vmatprep.subr.mxu0 %v1197
    %1257 = vmatpush1.msra.mxu0 %v1196
    %1258 = vmatprep.subr.mxu0 %v1201
    %1259 = vmatpush1.msra.mxu0 %v1200
    %1260 = vmatprep.subr.mxu0 %v1205
    %1261 = vmatpush1.msra.mxu0 %v1204
    %1262 = vmatprep.subr.mxu0 %v1209
    %1263 = vmatpush1.msra.mxu0 %v1208
    %1264 = vmatprep.subr.mxu0 %v1213
    %1265 = vmatpush1.msra.mxu0 %v1212
    %1266 = vmatprep.subr.mxu0 %v1217
    %1267 = vmatpush1.msra.mxu0 %v1216
    %1268 = vmatprep.subr.mxu0 %v1221
    %1269 = vmatpush1.msra.mxu0 %v1220
    %1270 = vmatprep.subr.mxu0 %v1225
    %1271 = vmatpush1.msra.mxu0 %v1224
    %1272 = vmatprep.subr.mxu0 %v1229
    %1273 = vmatpush1.msra.mxu0 %v1228
    %1274 = vmatprep.subr.mxu0 %v1233
    %1275 = vmatpush1.msra.mxu0 %v1232
    %1276 = vmatprep.subr.mxu0 %v1237
    %1277 = vmatpush1.msra.mxu0 %v1236
    %1278 = vmatprep.subr.mxu0 %v1241
    %1279 = vmatpush1.msra.mxu0 %v1240
    %1280 = vmatprep.subr.mxu0 %v1245
    %1281 = vmatpush1.msra.mxu0 %v1244
    %1282 = vmatprep.subr.mxu0 %v1249
    %1283 = vmatpush1.msra.mxu0 %v1248
    %1284 = vmatprep.subr.mxu0 0.0
    %1285 = vmatpush1.msra.mxu0 0.0
    %1286 = vmatprep.subr.mxu0 0.0
    %1287 = vmatpush1.msra.mxu0 0.0
    %1288 = vmatprep.subr.mxu0 0.0
    %1289 = vmatpush1.msra.mxu0 0.0
    %1290 = vmatprep.subr.mxu0 0.0
    %1291 = vmatpush1.msra.mxu0 0.0
    %1292 = vmatprep.subr.mxu0 0.0
    %1293 = vmatpush1.msra.mxu0 0.0
    %1294 = vmatprep.subr.mxu0 0.0
    %1295 = vmatpush1.msra.mxu0 0.0
    %1296 = vmatprep.subr.mxu0 0.0
    %1297 = vmatpush1.msra.mxu0 0.0
    %1298 = vmatprep.subr.mxu0 0.0
    %1299 = vmatpush1.msra.mxu0 0.0
    %1300 = vmatprep.subr.mxu0 0.0
    %1301 = vmatpush1.msra.mxu0 0.0
    %1302 = vmatprep.subr.mxu0 0.0
    %1303 = vmatpush1.msra.mxu0 0.0
    %1304 = vmatprep.subr.mxu0 0.0
    %1305 = vmatpush1.msra.mxu0 0.0
    %1306 = vmatprep.subr.mxu0 0.0
    %1307 = vmatpush1.msra.mxu0 0.0
    %1308 = vmatprep.subr.mxu0 0.0
    %1309 = vmatpush1.msra.mxu0 0.0
    %1310 = vmatprep.subr.mxu0 0.0
    %1311 = vmatpush1.msra.mxu0 0.0
    %1312 = vmatprep.subr.mxu0 0.0
    %1313 = vmatpush1.msra.mxu0 0.0
    %1314 = vmatprep.subr.mxu0 0.0
    %1315 = vmatpush1.msra.mxu0 0.0
    %1316 = vmatprep.mubr.f32.mxu0 0.0
    %1317 = vmatmul.mubr.f32.gmra.mrb[0].mxu0 %v1182
    %v1318 = vpop.f32.mrb[0].mxu0
    %v1319 = vadd.f32 0.0, %v1318
    %v1320 = vpop.f32.mrb[0].mxu0
    %v1321 = vadd.f32 0.0, %v1320
    %1322 = vdwg.mxu0
    %1323 = vmatprep.subr.mxu0 %v1191
    %1324 = vmatpush1.msra.mxu0 %v1190
    %1325 = vmatprep.subr.mxu0 %v1195
    %1326 = vmatpush1.msra.mxu0 %v1194
    %1327 = vmatprep.subr.mxu0 %v1199
    %1328 = vmatpush1.msra.mxu0 %v1198
    %1329 = vmatprep.subr.mxu0 %v1203
    %1330 = vmatpush1.msra.mxu0 %v1202
    %1331 = vmatprep.subr.mxu0 %v1207
    %1332 = vmatpush1.msra.mxu0 %v1206
    %1333 = vmatprep.subr.mxu0 %v1211
    %1334 = vmatpush1.msra.mxu0 %v1210
    %1335 = vmatprep.subr.mxu0 %v1215
    %1336 = vmatpush1.msra.mxu0 %v1214
    %1337 = vmatprep.subr.mxu0 %v1219
    %1338 = vmatpush1.msra.mxu0 %v1218
    %1339 = vmatprep.subr.mxu0 %v1223
    %1340 = vmatpush1.msra.mxu0 %v1222
    %1341 = vmatprep.subr.mxu0 %v1227
    %1342 = vmatpush1.msra.mxu0 %v1226
    %1343 = vmatprep.subr.mxu0 %v1231
    %1344 = vmatpush1.msra.mxu0 %v1230
    %1345 = vmatprep.subr.mxu0 %v1235
    %1346 = vmatpush1.msra.mxu0 %v1234
    %1347 = vmatprep.subr.mxu0 %v1239
    %1348 = vmatpush1.msra.mxu0 %v1238
    %1349 = vmatprep.subr.mxu0 %v1243
    %1350 = vmatpush1.msra.mxu0 %v1242
    %1351 = vmatprep.subr.mxu0 %v1247
    %1352 = vmatpush1.msra.mxu0 %v1246
    %1353 = vmatprep.subr.mxu0 %v1251
    %1354 = vmatpush1.msra.mxu0 %v1250
    %1355 = vmatprep.subr.mxu0 0.0
    %1356 = vmatpush1.msra.mxu0 0.0
    %1357 = vmatprep.subr.mxu0 0.0
    %1358 = vmatpush1.msra.mxu0 0.0
    %1359 = vmatprep.subr.mxu0 0.0
    %1360 = vmatpush1.msra.mxu0 0.0
    %1361 = vmatprep.subr.mxu0 0.0
    %1362 = vmatpush1.msra.mxu0 0.0
    %1363 = vmatprep.subr.mxu0 0.0
    %1364 = vmatpush1.msra.mxu0 0.0
    %1365 = vmatprep.subr.mxu0 0.0
    %1366 = vmatpush1.msra.mxu0 0.0
    %1367 = vmatprep.subr.mxu0 0.0
    %1368 = vmatpush1.msra.mxu0 0.0
    %1369 = vmatprep.subr.mxu0 0.0
    %1370 = vmatpush1.msra.mxu0 0.0
    %1371 = vmatprep.subr.mxu0 0.0
    %1372 = vmatpush1.msra.mxu0 0.0
    %1373 = vmatprep.subr.mxu0 0.0
    %1374 = vmatpush1.msra.mxu0 0.0
    %1375 = vmatprep.subr.mxu0 0.0
    %1376 = vmatpush1.msra.mxu0 0.0
    %1377 = vmatprep.subr.mxu0 0.0
    %1378 = vmatpush1.msra.mxu0 0.0
    %1379 = vmatprep.subr.mxu0 0.0
    %1380 = vmatpush1.msra.mxu0 0.0
    %1381 = vmatprep.subr.mxu0 0.0
    %1382 = vmatpush1.msra.mxu0 0.0
    %1383 = vmatprep.subr.mxu0 0.0
    %1384 = vmatpush1.msra.mxu0 0.0
    %1385 = vmatprep.subr.mxu0 0.0
    %1386 = vmatpush1.msra.mxu0 0.0
    %1387 = vmatprep.mubr.f32.mxu0 0.0
    %1388 = vmatmul.mubr.f32.gmra.mrb[0].mxu0 %v1182
    %v1389 = vpop.f32.mrb[0].mxu0
    %v1390 = vadd.f32 0.0, %v1389
    %v1391 = vpop.f32.mrb[0].mxu0
    %v1392 = vadd.f32 0.0, %v1391
    %1393 = vdwg.mxu0
    %v1394 = vadd.f32 %v1184, %v1319
    %v1395 = vadd.f32 %v1185, %v1321
    %v1396 = vadd.f32 %v1186, %v1390
    %v1397 = vadd.f32 %v1187, %v1392
    %v1398 = vxor.u32 %v1394, 2147483648
    %v1399 = vxor.u32 %v1395, 2147483648
    %v1400 = vxor.u32 %v1396, 2147483648
    %v1401 = vmul.f32 %v1398, 1.442695
    %v1402 = vpow.pop %v1401
    %v1403 = vmul.f32 %v1399, 1.442695
    %v1404 = vpow.pop %v1403
    %v1405 = vmul.f32 %v1400, 1.442695
    %v1406 = vpow.pop %v1405
    %v1407 = vadd.f32 %v1402, 1.0
    %v1408 = vadd.f32 %v1404, 1.0
    %v1409 = vadd.f32 %v1406, 1.0
    %v1410 = vrcp.pop %v1407
    %v1411 = vmul.f32 1.0, %v1410
    %v1412 = vrcp.pop %v1408
    %v1413 = vmul.f32 1.0, %v1412
    %v1414 = vrcp.pop %v1409
    %v1415 = vmul.f32 1.0, %v1414
    %v1416 = vtanh.pop %v1397
    %v1417 = vmul.f32 %v1413, %v1180
    %v1418 = vmul.f32 %v1411, %v1416
    %v1419 = vadd.f32 %v1417, %v1418
    %v1420 = vtanh.pop %v1419
    %v1421 = vmul.f32 %v1415, %v1420
    %1422 = vst [vmem:[#allocation3 + $0x18] sm:$0xff] %v1421
    %v1423 = vld [vmem:[#allocation2 + $0x80] sm:$0xff]
    %v1424 = vld [vmem:[#allocation2 + $0x88] sm:$0xff]
    %v1425 = vld [vmem:[#allocation2 + $0x90] sm:$0xff]
    %v1426 = vld [vmem:[#allocation2 + $0x98] sm:$0xff]
    %v1427 = vld [vmem:[#allocation10] sm:$0xff]
    %v1428 = vld [vmem:[#allocation10 + $0x8] sm:$0xff]
    %v1429 = vld [vmem:[#allocation10 + $0x10] sm:$0xff]
    %v1430 = vld [vmem:[#allocation10 + $0x18] sm:$0xff]
    %v1431 = vld [vmem:[#allocation10 + $0x20] sm:$0xff]
    %v1432 = vld [vmem:[#allocation10 + $0x28] sm:$0xff]
    %v1433 = vld [vmem:[#allocation10 + $0x30] sm:$0xff]
    %v1434 = vld [vmem:[#allocation10 + $0x38] sm:$0xff]
    %v1435 = vld [vmem:[#allocation10 + $0x40] sm:$0xff]
    %v1436 = vld [vmem:[#allocation10 + $0x48] sm:$0xff]
    %v1437 = vld [vmem:[#allocation10 + $0x50] sm:$0xff]
    %v1438 = vld [vmem:[#allocation10 + $0x58] sm:$0xff]
    %v1439 = vld [vmem:[#allocation10 + $0x60] sm:$0xff]
    %v1440 = vld [vmem:[#allocation10 + $0x68] sm:$0xff]
    %v1441 = vld [vmem:[#allocation10 + $0x70] sm:$0xff]
    %v1442 = vld [vmem:[#allocation10 + $0x78] sm:$0xff]
    %v1443 = vld [vmem:[#allocation10 + $0x80] sm:$0xff]
    %v1444 = vld [vmem:[#allocation10 + $0x88] sm:$0xff]
    %v1445 = vld [vmem:[#allocation10 + $0x90] sm:$0xff]
    %v1446 = vld [vmem:[#allocation10 + $0x98] sm:$0xff]
    %v1447 = vld [vmem:[#allocation10 + $0xa0] sm:$0xff]
    %v1448 = vld [vmem:[#allocation10 + $0xa8] sm:$0xff]
    %v1449 = vld [vmem:[#allocation10 + $0xb0] sm:$0xff]
    %v1450 = vld [vmem:[#allocation10 + $0xb8] sm:$0xff]
    %v1451 = vld [vmem:[#allocation10 + $0xc0] sm:$0xff]
    %v1452 = vld [vmem:[#allocation10 + $0xc8] sm:$0xff]
    %v1453 = vld [vmem:[#allocation10 + $0xd0] sm:$0xff]
    %v1454 = vld [vmem:[#allocation10 + $0xd8] sm:$0xff]
    %v1455 = vld [vmem:[#allocation10 + $0xe0] sm:$0xff]
    %v1456 = vld [vmem:[#allocation10 + $0xe8] sm:$0xff]
    %v1457 = vld [vmem:[#allocation10 + $0xf0] sm:$0xff]
    %v1458 = vld [vmem:[#allocation10 + $0xf8] sm:$0xff]
    %v1459 = vld [vmem:[#allocation10 + $0x100] sm:$0xff]
    %v1460 = vld [vmem:[#allocation10 + $0x108] sm:$0xff]
    %v1461 = vld [vmem:[#allocation10 + $0x110] sm:$0xff]
    %v1462 = vld [vmem:[#allocation10 + $0x118] sm:$0xff]
    %v1463 = vld [vmem:[#allocation10 + $0x120] sm:$0xff]
    %v1464 = vld [vmem:[#allocation10 + $0x128] sm:$0xff]
    %v1465 = vld [vmem:[#allocation10 + $0x130] sm:$0xff]
    %v1466 = vld [vmem:[#allocation10 + $0x138] sm:$0xff]
    %v1467 = vld [vmem:[#allocation10 + $0x140] sm:$0xff]
    %v1468 = vld [vmem:[#allocation10 + $0x148] sm:$0xff]
    %v1469 = vld [vmem:[#allocation10 + $0x150] sm:$0xff]
    %v1470 = vld [vmem:[#allocation10 + $0x158] sm:$0xff]
    %v1471 = vld [vmem:[#allocation10 + $0x160] sm:$0xff]
    %v1472 = vld [vmem:[#allocation10 + $0x168] sm:$0xff]
    %v1473 = vld [vmem:[#allocation10 + $0x170] sm:$0xff]
    %v1474 = vld [vmem:[#allocation10 + $0x178] sm:$0xff]
    %v1475 = vld [vmem:[#allocation10 + $0x180] sm:$0xff]
    %v1476 = vld [vmem:[#allocation10 + $0x188] sm:$0xff]
    %v1477 = vld [vmem:[#allocation10 + $0x190] sm:$0xff]
    %v1478 = vld [vmem:[#allocation10 + $0x198] sm:$0xff]
    %v1479 = vld [vmem:[#allocation10 + $0x1a0] sm:$0xff]
    %v1480 = vld [vmem:[#allocation10 + $0x1a8] sm:$0xff]
    %v1481 = vld [vmem:[#allocation10 + $0x1b0] sm:$0xff]
    %v1482 = vld [vmem:[#allocation10 + $0x1b8] sm:$0xff]
    %v1483 = vld [vmem:[#allocation10 + $0x1c0] sm:$0xff]
    %v1484 = vld [vmem:[#allocation10 + $0x1c8] sm:$0xff]
    %v1485 = vld [vmem:[#allocation10 + $0x1d0] sm:$0xff]
    %v1486 = vld [vmem:[#allocation10 + $0x1d8] sm:$0xff]
    %v1487 = vld [vmem:[#allocation10 + $0x1e0] sm:$0xff]
    %v1488 = vld [vmem:[#allocation10 + $0x1e8] sm:$0xff]
    %v1489 = vld [vmem:[#allocation10 + $0x1f0] sm:$0xff]
    %v1490 = vld [vmem:[#allocation10 + $0x1f8] sm:$0xff]
    %1491 = vmatprep.subr.mxu0 %v1428
    %1492 = vmatpush1.msra.mxu0 %v1427
    %1493 = vmatprep.subr.mxu0 %v1432
    %1494 = vmatpush1.msra.mxu0 %v1431
    %1495 = vmatprep.subr.mxu0 %v1436
    %1496 = vmatpush1.msra.mxu0 %v1435
    %1497 = vmatprep.subr.mxu0 %v1440
    %1498 = vmatpush1.msra.mxu0 %v1439
    %1499 = vmatprep.subr.mxu0 %v1444
    %1500 = vmatpush1.msra.mxu0 %v1443
    %1501 = vmatprep.subr.mxu0 %v1448
    %1502 = vmatpush1.msra.mxu0 %v1447
    %1503 = vmatprep.subr.mxu0 %v1452
    %1504 = vmatpush1.msra.mxu0 %v1451
    %1505 = vmatprep.subr.mxu0 %v1456
    %1506 = vmatpush1.msra.mxu0 %v1455
    %1507 = vmatprep.subr.mxu0 %v1460
    %1508 = vmatpush1.msra.mxu0 %v1459
    %1509 = vmatprep.subr.mxu0 %v1464
    %1510 = vmatpush1.msra.mxu0 %v1463
    %1511 = vmatprep.subr.mxu0 %v1468
    %1512 = vmatpush1.msra.mxu0 %v1467
    %1513 = vmatprep.subr.mxu0 %v1472
    %1514 = vmatpush1.msra.mxu0 %v1471
    %1515 = vmatprep.subr.mxu0 %v1476
    %1516 = vmatpush1.msra.mxu0 %v1475
    %1517 = vmatprep.subr.mxu0 %v1480
    %1518 = vmatpush1.msra.mxu0 %v1479
    %1519 = vmatprep.subr.mxu0 %v1484
    %1520 = vmatpush1.msra.mxu0 %v1483
    %1521 = vmatprep.subr.mxu0 %v1488
    %1522 = vmatpush1.msra.mxu0 %v1487
    %1523 = vmatprep.subr.mxu0 0.0
    %1524 = vmatpush1.msra.mxu0 0.0
    %1525 = vmatprep.subr.mxu0 0.0
    %1526 = vmatpush1.msra.mxu0 0.0
    %1527 = vmatprep.subr.mxu0 0.0
    %1528 = vmatpush1.msra.mxu0 0.0
    %1529 = vmatprep.subr.mxu0 0.0
    %1530 = vmatpush1.msra.mxu0 0.0
    %1531 = vmatprep.subr.mxu0 0.0
    %1532 = vmatpush1.msra.mxu0 0.0
    %1533 = vmatprep.subr.mxu0 0.0
    %1534 = vmatpush1.msra.mxu0 0.0
    %1535 = vmatprep.subr.mxu0 0.0
    %1536 = vmatpush1.msra.mxu0 0.0
    %1537 = vmatprep.subr.mxu0 0.0
    %1538 = vmatpush1.msra.mxu0 0.0
    %1539 = vmatprep.subr.mxu0 0.0
    %1540 = vmatpush1.msra.mxu0 0.0
    %1541 = vmatprep.subr.mxu0 0.0
    %1542 = vmatpush1.msra.mxu0 0.0
    %1543 = vmatprep.subr.mxu0 0.0
    %1544 = vmatpush1.msra.mxu0 0.0
    %1545 = vmatprep.subr.mxu0 0.0
    %1546 = vmatpush1.msra.mxu0 0.0
    %1547 = vmatprep.subr.mxu0 0.0
    %1548 = vmatpush1.msra.mxu0 0.0
    %1549 = vmatprep.subr.mxu0 0.0
    %1550 = vmatpush1.msra.mxu0 0.0
    %1551 = vmatprep.subr.mxu0 0.0
    %1552 = vmatpush1.msra.mxu0 0.0
    %1553 = vmatprep.subr.mxu0 0.0
    %1554 = vmatpush1.msra.mxu0 0.0
    %1555 = vmatprep.mubr.f32.mxu0 0.0
    %1556 = vmatmul.mubr.f32.gmra.mrb[0].mxu0 %v1421
    %v1557 = vpop.f32.mrb[0].mxu0
    %v1558 = vadd.f32 0.0, %v1557
    %v1559 = vpop.f32.mrb[0].mxu0
    %v1560 = vadd.f32 0.0, %v1559
    %1561 = vdwg.mxu0
    %1562 = vmatprep.subr.mxu0 %v1430
    %1563 = vmatpush1.msra.mxu0 %v1429
    %1564 = vmatprep.subr.mxu0 %v1434
    %1565 = vmatpush1.msra.mxu0 %v1433
    %1566 = vmatprep.subr.mxu0 %v1438
    %1567 = vmatpush1.msra.mxu0 %v1437
    %1568 = vmatprep.subr.mxu0 %v1442
    %1569 = vmatpush1.msra.mxu0 %v1441
    %1570 = vmatprep.subr.mxu0 %v1446
    %1571 = vmatpush1.msra.mxu0 %v1445
    %1572 = vmatprep.subr.mxu0 %v1450
    %1573 = vmatpush1.msra.mxu0 %v1449
    %1574 = vmatprep.subr.mxu0 %v1454
    %1575 = vmatpush1.msra.mxu0 %v1453
    %1576 = vmatprep.subr.mxu0 %v1458
    %1577 = vmatpush1.msra.mxu0 %v1457
    %1578 = vmatprep.subr.mxu0 %v1462
    %1579 = vmatpush1.msra.mxu0 %v1461
    %1580 = vmatprep.subr.mxu0 %v1466
    %1581 = vmatpush1.msra.mxu0 %v1465
    %1582 = vmatprep.subr.mxu0 %v1470
    %1583 = vmatpush1.msra.mxu0 %v1469
    %1584 = vmatprep.subr.mxu0 %v1474
    %1585 = vmatpush1.msra.mxu0 %v1473
    %1586 = vmatprep.subr.mxu0 %v1478
    %1587 = vmatpush1.msra.mxu0 %v1477
    %1588 = vmatprep.subr.mxu0 %v1482
    %1589 = vmatpush1.msra.mxu0 %v1481
    %1590 = vmatprep.subr.mxu0 %v1486
    %1591 = vmatpush1.msra.mxu0 %v1485
    %1592 = vmatprep.subr.mxu0 %v1490
    %1593 = vmatpush1.msra.mxu0 %v1489
    %1594 = vmatprep.subr.mxu0 0.0
    %1595 = vmatpush1.msra.mxu0 0.0
    %1596 = vmatprep.subr.mxu0 0.0
    %1597 = vmatpush1.msra.mxu0 0.0
    %1598 = vmatprep.subr.mxu0 0.0
    %1599 = vmatpush1.msra.mxu0 0.0
    %1600 = vmatprep.subr.mxu0 0.0
    %1601 = vmatpush1.msra.mxu0 0.0
    %1602 = vmatprep.subr.mxu0 0.0
    %1603 = vmatpush1.msra.mxu0 0.0
    %1604 = vmatprep.subr.mxu0 0.0
    %1605 = vmatpush1.msra.mxu0 0.0
    %1606 = vmatprep.subr.mxu0 0.0
    %1607 = vmatpush1.msra.mxu0 0.0
    %1608 = vmatprep.subr.mxu0 0.0
    %1609 = vmatpush1.msra.mxu0 0.0
    %1610 = vmatprep.subr.mxu0 0.0
    %1611 = vmatpush1.msra.mxu0 0.0
    %1612 = vmatprep.subr.mxu0 0.0
    %1613 = vmatpush1.msra.mxu0 0.0
    %1614 = vmatprep.subr.mxu0 0.0
    %1615 = vmatpush1.msra.mxu0 0.0
    %1616 = vmatprep.subr.mxu0 0.0
    %1617 = vmatpush1.msra.mxu0 0.0
    %1618 = vmatprep.subr.mxu0 0.0
    %1619 = vmatpush1.msra.mxu0 0.0
    %1620 = vmatprep.subr.mxu0 0.0
    %1621 = vmatpush1.msra.mxu0 0.0
    %1622 = vmatprep.subr.mxu0 0.0
    %1623 = vmatpush1.msra.mxu0 0.0
    %1624 = vmatprep.subr.mxu0 0.0
    %1625 = vmatpush1.msra.mxu0 0.0
    %1626 = vmatprep.mubr.f32.mxu0 0.0
    %1627 = vmatmul.mubr.f32.gmra.mrb[0].mxu0 %v1421
    %v1628 = vpop.f32.mrb[0].mxu0
    %v1629 = vadd.f32 0.0, %v1628
    %v1630 = vpop.f32.mrb[0].mxu0
    %v1631 = vadd.f32 0.0, %v1630
    %1632 = vdwg.mxu0
    %v1633 = vadd.f32 %v1423, %v1558
    %v1634 = vadd.f32 %v1424, %v1560
    %v1635 = vadd.f32 %v1425, %v1629
    %v1636 = vadd.f32 %v1426, %v1631
    %v1637 = vxor.u32 %v1633, 2147483648
    %v1638 = vxor.u32 %v1634, 2147483648
    %v1639 = vxor.u32 %v1635, 2147483648
    %v1640 = vmul.f32 %v1637, 1.442695
    %v1641 = vpow.pop %v1640
    %v1642 = vmul.f32 %v1638, 1.442695
    %v1643 = vpow.pop %v1642
    %v1644 = vmul.f32 %v1639, 1.442695
    %v1645 = vpow.pop %v1644
    %v1646 = vadd.f32 %v1641, 1.0
    %v1647 = vadd.f32 %v1643, 1.0
    %v1648 = vadd.f32 %v1645, 1.0
    %v1649 = vrcp.pop %v1646
    %v1650 = vmul.f32 1.0, %v1649
    %v1651 = vrcp.pop %v1647
    %v1652 = vmul.f32 1.0, %v1651
    %v1653 = vrcp.pop %v1648
    %v1654 = vmul.f32 1.0, %v1653
    %v1655 = vtanh.pop %v1636
    %v1656 = vmul.f32 %v1652, %v1419
    %v1657 = vmul.f32 %v1650, %v1655
    %v1658 = vadd.f32 %v1656, %v1657
    %v1659 = vtanh.pop %v1658
    %v1660 = vmul.f32 %v1654, %v1659
    %1661 = vst [vmem:[#allocation3 + $0x20] sm:$0xff] %v1660
    %v1662 = vld [vmem:[#allocation2 + $0xa0] sm:$0xff]
    %v1663 = vld [vmem:[#allocation2 + $0xa8] sm:$0xff]
    %v1664 = vld [vmem:[#allocation2 + $0xb0] sm:$0xff]
    %v1665 = vld [vmem:[#allocation2 + $0xb8] sm:$0xff]
    %v1666 = vld [vmem:[#allocation10] sm:$0xff]
    %v1667 = vld [vmem:[#allocation10 + $0x8] sm:$0xff]
    %v1668 = vld [vmem:[#allocation10 + $0x10] sm:$0xff]
    %v1669 = vld [vmem:[#allocation10 + $0x18] sm:$0xff]
    %v1670 = vld [vmem:[#allocation10 + $0x20] sm:$0xff]
    %v1671 = vld [vmem:[#allocation10 + $0x28] sm:$0xff]
    %v1672 = vld [vmem:[#allocation10 + $0x30] sm:$0xff]
    %v1673 = vld [vmem:[#allocation10 + $0x38] sm:$0xff]
    %v1674 = vld [vmem:[#allocation10 + $0x40] sm:$0xff]
    %v1675 = vld [vmem:[#allocation10 + $0x48] sm:$0xff]
    %v1676 = vld [vmem:[#allocation10 + $0x50] sm:$0xff]
    %v1677 = vld [vmem:[#allocation10 + $0x58] sm:$0xff]
    %v1678 = vld [vmem:[#allocation10 + $0x60] sm:$0xff]
    %v1679 = vld [vmem:[#allocation10 + $0x68] sm:$0xff]
    %v1680 = vld [vmem:[#allocation10 + $0x70] sm:$0xff]
    %v1681 = vld [vmem:[#allocation10 + $0x78] sm:$0xff]
    %v1682 = vld [vmem:[#allocation10 + $0x80] sm:$0xff]
    %v1683 = vld [vmem:[#allocation10 + $0x88] sm:$0xff]
    %v1684 = vld [vmem:[#allocation10 + $0x90] sm:$0xff]
    %v1685 = vld [vmem:[#allocation10 + $0x98] sm:$0xff]
    %v1686 = vld [vmem:[#allocation10 + $0xa0] sm:$0xff]
    %v1687 = vld [vmem:[#allocation10 + $0xa8] sm:$0xff]
    %v1688 = vld [vmem:[#allocation10 + $0xb0] sm:$0xff]
    %v1689 = vld [vmem:[#allocation10 + $0xb8] sm:$0xff]
    %v1690 = vld [vmem:[#allocation10 + $0xc0] sm:$0xff]
    %v1691 = vld [vmem:[#allocation10 + $0xc8] sm:$0xff]
    %v1692 = vld [vmem:[#allocation10 + $0xd0] sm:$0xff]
    %v1693 = vld [vmem:[#allocation10 + $0xd8] sm:$0xff]
    %v1694 = vld [vmem:[#allocation10 + $0xe0] sm:$0xff]
    %v1695 = vld [vmem:[#allocation10 + $0xe8] sm:$0xff]
    %v1696 = vld [vmem:[#allocation10 + $0xf0] sm:$0xff]
    %v1697 = vld [vmem:[#allocation10 + $0xf8] sm:$0xff]
    %v1698 = vld [vmem:[#allocation10 + $0x100] sm:$0xff]
    %v1699 = vld [vmem:[#allocation10 + $0x108] sm:$0xff]
    %v1700 = vld [vmem:[#allocation10 + $0x110] sm:$0xff]
    %v1701 = vld [vmem:[#allocation10 + $0x118] sm:$0xff]
    %v1702 = vld [vmem:[#allocation10 + $0x120] sm:$0xff]
    %v1703 = vld [vmem:[#allocation10 + $0x128] sm:$0xff]
    %v1704 = vld [vmem:[#allocation10 + $0x130] sm:$0xff]
    %v1705 = vld [vmem:[#allocation10 + $0x138] sm:$0xff]
    %v1706 = vld [vmem:[#allocation10 + $0x140] sm:$0xff]
    %v1707 = vld [vmem:[#allocation10 + $0x148] sm:$0xff]
    %v1708 = vld [vmem:[#allocation10 + $0x150] sm:$0xff]
    %v1709 = vld [vmem:[#allocation10 + $0x158] sm:$0xff]
    %v1710 = vld [vmem:[#allocation10 + $0x160] sm:$0xff]
    %v1711 = vld [vmem:[#allocation10 + $0x168] sm:$0xff]
    %v1712 = vld [vmem:[#allocation10 + $0x170] sm:$0xff]
    %v1713 = vld [vmem:[#allocation10 + $0x178] sm:$0xff]
    %v1714 = vld [vmem:[#allocation10 + $0x180] sm:$0xff]
    %v1715 = vld [vmem:[#allocation10 + $0x188] sm:$0xff]
    %v1716 = vld [vmem:[#allocation10 + $0x190] sm:$0xff]
    %v1717 = vld [vmem:[#allocation10 + $0x198] sm:$0xff]
    %v1718 = vld [vmem:[#allocation10 + $0x1a0] sm:$0xff]
    %v1719 = vld [vmem:[#allocation10 + $0x1a8] sm:$0xff]
    %v1720 = vld [vmem:[#allocation10 + $0x1b0] sm:$0xff]
    %v1721 = vld [vmem:[#allocation10 + $0x1b8] sm:$0xff]
    %v1722 = vld [vmem:[#allocation10 + $0x1c0] sm:$0xff]
    %v1723 = vld [vmem:[#allocation10 + $0x1c8] sm:$0xff]
    %v1724 = vld [vmem:[#allocation10 + $0x1d0] sm:$0xff]
    %v1725 = vld [vmem:[#allocation10 + $0x1d8] sm:$0xff]
    %v1726 = vld [vmem:[#allocation10 + $0x1e0] sm:$0xff]
    %v1727 = vld [vmem:[#allocation10 + $0x1e8] sm:$0xff]
    %v1728 = vld [vmem:[#allocation10 + $0x1f0] sm:$0xff]
    %v1729 = vld [vmem:[#allocation10 + $0x1f8] sm:$0xff]
    %1730 = vmatprep.subr.mxu0 %v1667
    %1731 = vmatpush1.msra.mxu0 %v1666
    %1732 = vmatprep.subr.mxu0 %v1671
    %1733 = vmatpush1.msra.mxu0 %v1670
    %1734 = vmatprep.subr.mxu0 %v1675
    %1735 = vmatpush1.msra.mxu0 %v1674
    %1736 = vmatprep.subr.mxu0 %v1679
    %1737 = vmatpush1.msra.mxu0 %v1678
    %1738 = vmatprep.subr.mxu0 %v1683
    %1739 = vmatpush1.msra.mxu0 %v1682
    %1740 = vmatprep.subr.mxu0 %v1687
    %1741 = vmatpush1.msra.mxu0 %v1686
    %1742 = vmatprep.subr.mxu0 %v1691
    %1743 = vmatpush1.msra.mxu0 %v1690
    %1744 = vmatprep.subr.mxu0 %v1695
    %1745 = vmatpush1.msra.mxu0 %v1694
    %1746 = vmatprep.subr.mxu0 %v1699
    %1747 = vmatpush1.msra.mxu0 %v1698
    %1748 = vmatprep.subr.mxu0 %v1703
    %1749 = vmatpush1.msra.mxu0 %v1702
    %1750 = vmatprep.subr.mxu0 %v1707
    %1751 = vmatpush1.msra.mxu0 %v1706
    %1752 = vmatprep.subr.mxu0 %v1711
    %1753 = vmatpush1.msra.mxu0 %v1710
    %1754 = vmatprep.subr.mxu0 %v1715
    %1755 = vmatpush1.msra.mxu0 %v1714
    %1756 = vmatprep.subr.mxu0 %v1719
    %1757 = vmatpush1.msra.mxu0 %v1718
    %1758 = vmatprep.subr.mxu0 %v1723
    %1759 = vmatpush1.msra.mxu0 %v1722
    %1760 = vmatprep.subr.mxu0 %v1727
    %1761 = vmatpush1.msra.mxu0 %v1726
    %1762 = vmatprep.subr.mxu0 0.0
    %1763 = vmatpush1.msra.mxu0 0.0
    %1764 = vmatprep.subr.mxu0 0.0
    %1765 = vmatpush1.msra.mxu0 0.0
    %1766 = vmatprep.subr.mxu0 0.0
    %1767 = vmatpush1.msra.mxu0 0.0
    %1768 = vmatprep.subr.mxu0 0.0
    %1769 = vmatpush1.msra.mxu0 0.0
    %1770 = vmatprep.subr.mxu0 0.0
    %1771 = vmatpush1.msra.mxu0 0.0
    %1772 = vmatprep.subr.mxu0 0.0
    %1773 = vmatpush1.msra.mxu0 0.0
    %1774 = vmatprep.subr.mxu0 0.0
    %1775 = vmatpush1.msra.mxu0 0.0
    %1776 = vmatprep.subr.mxu0 0.0
    %1777 = vmatpush1.msra.mxu0 0.0
    %1778 = vmatprep.subr.mxu0 0.0
    %1779 = vmatpush1.msra.mxu0 0.0
    %1780 = vmatprep.subr.mxu0 0.0
    %1781 = vmatpush1.msra.mxu0 0.0
    %1782 = vmatprep.subr.mxu0 0.0
    %1783 = vmatpush1.msra.mxu0 0.0
    %1784 = vmatprep.subr.mxu0 0.0
    %1785 = vmatpush1.msra.mxu0 0.0
    %1786 = vmatprep.subr.mxu0 0.0
    %1787 = vmatpush1.msra.mxu0 0.0
    %1788 = vmatprep.subr.mxu0 0.0
    %1789 = vmatpush1.msra.mxu0 0.0
    %1790 = vmatprep.subr.mxu0 0.0
    %1791 = vmatpush1.msra.mxu0 0.0
    %1792 = vmatprep.subr.mxu0 0.0
    %1793 = vmatpush1.msra.mxu0 0.0
    %1794 = vmatprep.mubr.f32.mxu0 0.0
    %1795 = vmatmul.mubr.f32.gmra.mrb[0].mxu0 %v1660
    %v1796 = vpop.f32.mrb[0].mxu0
    %v1797 = vadd.f32 0.0, %v1796
    %v1798 = vpop.f32.mrb[0].mxu0
    %v1799 = vadd.f32 0.0, %v1798
    %1800 = vdwg.mxu0
    %1801 = vmatprep.subr.mxu0 %v1669
    %1802 = vmatpush1.msra.mxu0 %v1668
    %1803 = vmatprep.subr.mxu0 %v1673
    %1804 = vmatpush1.msra.mxu0 %v1672
    %1805 = vmatprep.subr.mxu0 %v1677
    %1806 = vmatpush1.msra.mxu0 %v1676
    %1807 = vmatprep.subr.mxu0 %v1681
    %1808 = vmatpush1.msra.mxu0 %v1680
    %1809 = vmatprep.subr.mxu0 %v1685
    %1810 = vmatpush1.msra.mxu0 %v1684
    %1811 = vmatprep.subr.mxu0 %v1689
    %1812 = vmatpush1.msra.mxu0 %v1688
    %1813 = vmatprep.subr.mxu0 %v1693
    %1814 = vmatpush1.msra.mxu0 %v1692
    %1815 = vmatprep.subr.mxu0 %v1697
    %1816 = vmatpush1.msra.mxu0 %v1696
    %1817 = vmatprep.subr.mxu0 %v1701
    %1818 = vmatpush1.msra.mxu0 %v1700
    %1819 = vmatprep.subr.mxu0 %v1705
    %1820 = vmatpush1.msra.mxu0 %v1704
    %1821 = vmatprep.subr.mxu0 %v1709
    %1822 = vmatpush1.msra.mxu0 %v1708
    %1823 = vmatprep.subr.mxu0 %v1713
    %1824 = vmatpush1.msra.mxu0 %v1712
    %1825 = vmatprep.subr.mxu0 %v1717
    %1826 = vmatpush1.msra.mxu0 %v1716
    %1827 = vmatprep.subr.mxu0 %v1721
    %1828 = vmatpush1.msra.mxu0 %v1720
    %1829 = vmatprep.subr.mxu0 %v1725
    %1830 = vmatpush1.msra.mxu0 %v1724
    %1831 = vmatprep.subr.mxu0 %v1729
    %1832 = vmatpush1.msra.mxu0 %v1728
    %1833 = vmatprep.subr.mxu0 0.0
    %1834 = vmatpush1.msra.mxu0 0.0
    %1835 = vmatprep.subr.mxu0 0.0
    %1836 = vmatpush1.msra.mxu0 0.0
    %1837 = vmatprep.subr.mxu0 0.0
    %1838 = vmatpush1.msra.mxu0 0.0
    %1839 = vmatprep.subr.mxu0 0.0
    %1840 = vmatpush1.msra.mxu0 0.0
    %1841 = vmatprep.subr.mxu0 0.0
    %1842 = vmatpush1.msra.mxu0 0.0
    %1843 = vmatprep.subr.mxu0 0.0
    %1844 = vmatpush1.msra.mxu0 0.0
    %1845 = vmatprep.subr.mxu0 0.0
    %1846 = vmatpush1.msra.mxu0 0.0
    %1847 = vmatprep.subr.mxu0 0.0
    %1848 = vmatpush1.msra.mxu0 0.0
    %1849 = vmatprep.subr.mxu0 0.0
    %1850 = vmatpush1.msra.mxu0 0.0
    %1851 = vmatprep.subr.mxu0 0.0
    %1852 = vmatpush1.msra.mxu0 0.0
    %1853 = vmatprep.subr.mxu0 0.0
    %1854 = vmatpush1.msra.mxu0 0.0
    %1855 = vmatprep.subr.mxu0 0.0
    %1856 = vmatpush1.msra.mxu0 0.0
    %1857 = vmatprep.subr.mxu0 0.0
    %1858 = vmatpush1.msra.mxu0 0.0
    %1859 = vmatprep.subr.mxu0 0.0
    %1860 = vmatpush1.msra.mxu0 0.0
    %1861 = vmatprep.subr.mxu0 0.0
    %1862 = vmatpush1.msra.mxu0 0.0
    %1863 = vmatprep.subr.mxu0 0.0
    %1864 = vmatpush1.msra.mxu0 0.0
    %1865 = vmatprep.mubr.f32.mxu0 0.0
    %1866 = vmatmul.mubr.f32.gmra.mrb[0].mxu0 %v1660
    %v1867 = vpop.f32.mrb[0].mxu0
    %v1868 = vadd.f32 0.0, %v1867
    %v1869 = vpop.f32.mrb[0].mxu0
    %v1870 = vadd.f32 0.0, %v1869
    %1871 = vdwg.mxu0
    %v1872 = vadd.f32 %v1662, %v1797
    %v1873 = vadd.f32 %v1663, %v1799
    %v1874 = vadd.f32 %v1664, %v1868
    %v1875 = vadd.f32 %v1665, %v1870
    %v1876 = vxor.u32 %v1872, 2147483648
    %v1877 = vxor.u32 %v1873, 2147483648
    %v1878 = vxor.u32 %v1874, 2147483648
    %v1879 = vmul.f32 %v1876, 1.442695
    %v1880 = vpow.pop %v1879
    %v1881 = vmul.f32 %v1877, 1.442695
    %v1882 = vpow.pop %v1881
    %v1883 = vmul.f32 %v1878, 1.442695
    %v1884 = vpow.pop %v1883
    %v1885 = vadd.f32 %v1880, 1.0
    %v1886 = vadd.f32 %v1882, 1.0
    %v1887 = vadd.f32 %v1884, 1.0
    %v1888 = vrcp.pop %v1885
    %v1889 = vmul.f32 1.0, %v1888
    %v1890 = vrcp.pop %v1886
    %v1891 = vmul.f32 1.0, %v1890
    %v1892 = vrcp.pop %v1887
    %v1893 = vmul.f32 1.0, %v1892
    %v1894 = vtanh.pop %v1875
    %v1895 = vmul.f32 %v1891, %v1658
    %v1896 = vmul.f32 %v1889, %v1894
    %v1897 = vadd.f32 %v1895, %v1896
    %v1898 = vtanh.pop %v1897
    %v1899 = vmul.f32 %v1893, %v1898
    %1900 = vst [vmem:[#allocation3 + $0x28] sm:$0xff] %v1899
    %v1901 = vld [vmem:[#allocation2 + $0xc0] sm:$0xff]
    %v1902 = vld [vmem:[#allocation2 + $0xc8] sm:$0xff]
    %v1903 = vld [vmem:[#allocation2 + $0xd0] sm:$0xff]
    %v1904 = vld [vmem:[#allocation2 + $0xd8] sm:$0xff]
    %v1905 = vld [vmem:[#allocation10] sm:$0xff]
    %v1906 = vld [vmem:[#allocation10 + $0x8] sm:$0xff]
    %v1907 = vld [vmem:[#allocation10 + $0x10] sm:$0xff]
    %v1908 = vld [vmem:[#allocation10 + $0x18] sm:$0xff]
    %v1909 = vld [vmem:[#allocation10 + $0x20] sm:$0xff]
    %v1910 = vld [vmem:[#allocation10 + $0x28] sm:$0xff]
    %v1911 = vld [vmem:[#allocation10 + $0x30] sm:$0xff]
    %v1912 = vld [vmem:[#allocation10 + $0x38] sm:$0xff]
    %v1913 = vld [vmem:[#allocation10 + $0x40] sm:$0xff]
    %v1914 = vld [vmem:[#allocation10 + $0x48] sm:$0xff]
    %v1915 = vld [vmem:[#allocation10 + $0x50] sm:$0xff]
    %v1916 = vld [vmem:[#allocation10 + $0x58] sm:$0xff]
    %v1917 = vld [vmem:[#allocation10 + $0x60] sm:$0xff]
    %v1918 = vld [vmem:[#allocation10 + $0x68] sm:$0xff]
    %v1919 = vld [vmem:[#allocation10 + $0x70] sm:$0xff]
    %v1920 = vld [vmem:[#allocation10 + $0x78] sm:$0xff]
    %v1921 = vld [vmem:[#allocation10 + $0x80] sm:$0xff]
    %v1922 = vld [vmem:[#allocation10 + $0x88] sm:$0xff]
    %v1923 = vld [vmem:[#allocation10 + $0x90] sm:$0xff]
    %v1924 = vld [vmem:[#allocation10 + $0x98] sm:$0xff]
    %v1925 = vld [vmem:[#allocation10 + $0xa0] sm:$0xff]
    %v1926 = vld [vmem:[#allocation10 + $0xa8] sm:$0xff]
    %v1927 = vld [vmem:[#allocation10 + $0xb0] sm:$0xff]
    %v1928 = vld [vmem:[#allocation10 + $0xb8] sm:$0xff]
    %v1929 = vld [vmem:[#allocation10 + $0xc0] sm:$0xff]
    %v1930 = vld [vmem:[#allocation10 + $0xc8] sm:$0xff]
    %v1931 = vld [vmem:[#allocation10 + $0xd0] sm:$0xff]
    %v1932 = vld [vmem:[#allocation10 + $0xd8] sm:$0xff]
    %v1933 = vld [vmem:[#allocation10 + $0xe0] sm:$0xff]
    %v1934 = vld [vmem:[#allocation10 + $0xe8] sm:$0xff]
    %v1935 = vld [vmem:[#allocation10 + $0xf0] sm:$0xff]
    %v1936 = vld [vmem:[#allocation10 + $0xf8] sm:$0xff]
    %v1937 = vld [vmem:[#allocation10 + $0x100] sm:$0xff]
    %v1938 = vld [vmem:[#allocation10 + $0x108] sm:$0xff]
    %v1939 = vld [vmem:[#allocation10 + $0x110] sm:$0xff]
    %v1940 = vld [vmem:[#allocation10 + $0x118] sm:$0xff]
    %v1941 = vld [vmem:[#allocation10 + $0x120] sm:$0xff]
    %v1942 = vld [vmem:[#allocation10 + $0x128] sm:$0xff]
    %v1943 = vld [vmem:[#allocation10 + $0x130] sm:$0xff]
    %v1944 = vld [vmem:[#allocation10 + $0x138] sm:$0xff]
    %v1945 = vld [vmem:[#allocation10 + $0x140] sm:$0xff]
    %v1946 = vld [vmem:[#allocation10 + $0x148] sm:$0xff]
    %v1947 = vld [vmem:[#allocation10 + $0x150] sm:$0xff]
    %v1948 = vld [vmem:[#allocation10 + $0x158] sm:$0xff]
    %v1949 = vld [vmem:[#allocation10 + $0x160] sm:$0xff]
    %v1950 = vld [vmem:[#allocation10 + $0x168] sm:$0xff]
    %v1951 = vld [vmem:[#allocation10 + $0x170] sm:$0xff]
    %v1952 = vld [vmem:[#allocation10 + $0x178] sm:$0xff]
    %v1953 = vld [vmem:[#allocation10 + $0x180] sm:$0xff]
    %v1954 = vld [vmem:[#allocation10 + $0x188] sm:$0xff]
    %v1955 = vld [vmem:[#allocation10 + $0x190] sm:$0xff]
    %v1956 = vld [vmem:[#allocation10 + $0x198] sm:$0xff]
    %v1957 = vld [vmem:[#allocation10 + $0x1a0] sm:$0xff]
    %v1958 = vld [vmem:[#allocation10 + $0x1a8] sm:$0xff]
    %v1959 = vld [vmem:[#allocation10 + $0x1b0] sm:$0xff]
    %v1960 = vld [vmem:[#allocation10 + $0x1b8] sm:$0xff]
    %v1961 = vld [vmem:[#allocation10 + $0x1c0] sm:$0xff]
    %v1962 = vld [vmem:[#allocation10 + $0x1c8] sm:$0xff]
    %v1963 = vld [vmem:[#allocation10 + $0x1d0] sm:$0xff]
    %v1964 = vld [vmem:[#allocation10 + $0x1d8] sm:$0xff]
    %v1965 = vld [vmem:[#allocation10 + $0x1e0] sm:$0xff]
    %v1966 = vld [vmem:[#allocation10 + $0x1e8] sm:$0xff]
    %v1967 = vld [vmem:[#allocation10 + $0x1f0] sm:$0xff]
    %v1968 = vld [vmem:[#allocation10 + $0x1f8] sm:$0xff]
    %1969 = vmatprep.subr.mxu0 %v1906
    %1970 = vmatpush1.msra.mxu0 %v1905
    %1971 = vmatprep.subr.mxu0 %v1910
    %1972 = vmatpush1.msra.mxu0 %v1909
    %1973 = vmatprep.subr.mxu0 %v1914
    %1974 = vmatpush1.msra.mxu0 %v1913
    %1975 = vmatprep.subr.mxu0 %v1918
    %1976 = vmatpush1.msra.mxu0 %v1917
    %1977 = vmatprep.subr.mxu0 %v1922
    %1978 = vmatpush1.msra.mxu0 %v1921
    %1979 = vmatprep.subr.mxu0 %v1926
    %1980 = vmatpush1.msra.mxu0 %v1925
    %1981 = vmatprep.subr.mxu0 %v1930
    %1982 = vmatpush1.msra.mxu0 %v1929
    %1983 = vmatprep.subr.mxu0 %v1934
    %1984 = vmatpush1.msra.mxu0 %v1933
    %1985 = vmatprep.subr.mxu0 %v1938
    %1986 = vmatpush1.msra.mxu0 %v1937
    %1987 = vmatprep.subr.mxu0 %v1942
    %1988 = vmatpush1.msra.mxu0 %v1941
    %1989 = vmatprep.subr.mxu0 %v1946
    %1990 = vmatpush1.msra.mxu0 %v1945
    %1991 = vmatprep.subr.mxu0 %v1950
    %1992 = vmatpush1.msra.mxu0 %v1949
    %1993 = vmatprep.subr.mxu0 %v1954
    %1994 = vmatpush1.msra.mxu0 %v1953
    %1995 = vmatprep.subr.mxu0 %v1958
    %1996 = vmatpush1.msra.mxu0 %v1957
    %1997 = vmatprep.subr.mxu0 %v1962
    %1998 = vmatpush1.msra.mxu0 %v1961
    %1999 = vmatprep.subr.mxu0 %v1966
    %2000 = vmatpush1.msra.mxu0 %v1965
    %2001 = vmatprep.subr.mxu0 0.0
    %2002 = vmatpush1.msra.mxu0 0.0
    %2003 = vmatprep.subr.mxu0 0.0
    %2004 = vmatpush1.msra.mxu0 0.0
    %2005 = vmatprep.subr.mxu0 0.0
    %2006 = vmatpush1.msra.mxu0 0.0
    %2007 = vmatprep.subr.mxu0 0.0
    %2008 = vmatpush1.msra.mxu0 0.0
    %2009 = vmatprep.subr.mxu0 0.0
    %2010 = vmatpush1.msra.mxu0 0.0
    %2011 = vmatprep.subr.mxu0 0.0
    %2012 = vmatpush1.msra.mxu0 0.0
    %2013 = vmatprep.subr.mxu0 0.0
    %2014 = vmatpush1.msra.mxu0 0.0
    %2015 = vmatprep.subr.mxu0 0.0
    %2016 = vmatpush1.msra.mxu0 0.0
    %2017 = vmatprep.subr.mxu0 0.0
    %2018 = vmatpush1.msra.mxu0 0.0
    %2019 = vmatprep.subr.mxu0 0.0
    %2020 = vmatpush1.msra.mxu0 0.0
    %2021 = vmatprep.subr.mxu0 0.0
    %2022 = vmatpush1.msra.mxu0 0.0
    %2023 = vmatprep.subr.mxu0 0.0
    %2024 = vmatpush1.msra.mxu0 0.0
    %2025 = vmatprep.subr.mxu0 0.0
    %2026 = vmatpush1.msra.mxu0 0.0
    %2027 = vmatprep.subr.mxu0 0.0
    %2028 = vmatpush1.msra.mxu0 0.0
    %2029 = vmatprep.subr.mxu0 0.0
    %2030 = vmatpush1.msra.mxu0 0.0
    %2031 = vmatprep.subr.mxu0 0.0
    %2032 = vmatpush1.msra.mxu0 0.0
    %2033 = vmatprep.mubr.f32.mxu0 0.0
    %2034 = vmatmul.mubr.f32.gmra.mrb[0].mxu0 %v1899
    %v2035 = vpop.f32.mrb[0].mxu0
    %v2036 = vadd.f32 0.0, %v2035
    %v2037 = vpop.f32.mrb[0].mxu0
    %v2038 = vadd.f32 0.0, %v2037
    %2039 = vdwg.mxu0
    %2040 = vmatprep.subr.mxu0 %v1908
    %2041 = vmatpush1.msra.mxu0 %v1907
    %2042 = vmatprep.subr.mxu0 %v1912
    %2043 = vmatpush1.msra.mxu0 %v1911
    %2044 = vmatprep.subr.mxu0 %v1916
    %2045 = vmatpush1.msra.mxu0 %v1915
    %2046 = vmatprep.subr.mxu0 %v1920
    %2047 = vmatpush1.msra.mxu0 %v1919
    %2048 = vmatprep.subr.mxu0 %v1924
    %2049 = vmatpush1.msra.mxu0 %v1923
    %2050 = vmatprep.subr.mxu0 %v1928
    %2051 = vmatpush1.msra.mxu0 %v1927
    %2052 = vmatprep.subr.mxu0 %v1932
    %2053 = vmatpush1.msra.mxu0 %v1931
    %2054 = vmatprep.subr.mxu0 %v1936
    %2055 = vmatpush1.msra.mxu0 %v1935
    %2056 = vmatprep.subr.mxu0 %v1940
    %2057 = vmatpush1.msra.mxu0 %v1939
    %2058 = vmatprep.subr.mxu0 %v1944
    %2059 = vmatpush1.msra.mxu0 %v1943
    %2060 = vmatprep.subr.mxu0 %v1948
    %2061 = vmatpush1.msra.mxu0 %v1947
    %2062 = vmatprep.subr.mxu0 %v1952
    %2063 = vmatpush1.msra.mxu0 %v1951
    %2064 = vmatprep.subr.mxu0 %v1956
    %2065 = vmatpush1.msra.mxu0 %v1955
    %2066 = vmatprep.subr.mxu0 %v1960
    %2067 = vmatpush1.msra.mxu0 %v1959
    %2068 = vmatprep.subr.mxu0 %v1964
    %2069 = vmatpush1.msra.mxu0 %v1963
    %2070 = vmatprep.subr.mxu0 %v1968
    %2071 = vmatpush1.msra.mxu0 %v1967
    %2072 = vmatprep.subr.mxu0 0.0
    %2073 = vmatpush1.msra.mxu0 0.0
    %2074 = vmatprep.subr.mxu0 0.0
    %2075 = vmatpush1.msra.mxu0 0.0
    %2076 = vmatprep.subr.mxu0 0.0
    %2077 = vmatpush1.msra.mxu0 0.0
    %2078 = vmatprep.subr.mxu0 0.0
    %2079 = vmatpush1.msra.mxu0 0.0
    %2080 = vmatprep.subr.mxu0 0.0
    %2081 = vmatpush1.msra.mxu0 0.0
    %2082 = vmatprep.subr.mxu0 0.0
    %2083 = vmatpush1.msra.mxu0 0.0
    %2084 = vmatprep.subr.mxu0 0.0
    %2085 = vmatpush1.msra.mxu0 0.0
    %2086 = vmatprep.subr.mxu0 0.0
    %2087 = vmatpush1.msra.mxu0 0.0
    %2088 = vmatprep.subr.mxu0 0.0
    %2089 = vmatpush1.msra.mxu0 0.0
    %2090 = vmatprep.subr.mxu0 0.0
    %2091 = vmatpush1.msra.mxu0 0.0
    %2092 = vmatprep.subr.mxu0 0.0
    %2093 = vmatpush1.msra.mxu0 0.0
    %2094 = vmatprep.subr.mxu0 0.0
    %2095 = vmatpush1.msra.mxu0 0.0
    %2096 = vmatprep.subr.mxu0 0.0
    %2097 = vmatpush1.msra.mxu0 0.0
    %2098 = vmatprep.subr.mxu0 0.0
    %2099 = vmatpush1.msra.mxu0 0.0
    %2100 = vmatprep.subr.mxu0 0.0
    %2101 = vmatpush1.msra.mxu0 0.0
    %2102 = vmatprep.subr.mxu0 0.0
    %2103 = vmatpush1.msra.mxu0 0.0
    %2104 = vmatprep.mubr.f32.mxu0 0.0
    %2105 = vmatmul.mubr.f32.gmra.mrb[0].mxu0 %v1899
    %v2106 = vpop.f32.mrb[0].mxu0
    %v2107 = vadd.f32 0.0, %v2106
    %v2108 = vpop.f32.mrb[0].mxu0
    %v2109 = vadd.f32 0.0, %v2108
    %2110 = vdwg.mxu0
    %v2111 = vadd.f32 %v1901, %v2036
    %v2112 = vadd.f32 %v1902, %v2038
    %v2113 = vadd.f32 %v1903, %v2107
    %v2114 = vadd.f32 %v1904, %v2109
    %v2115 = vxor.u32 %v2111, 2147483648
    %v2116 = vxor.u32 %v2112, 2147483648
    %v2117 = vxor.u32 %v2113, 2147483648
    %v2118 = vmul.f32 %v2115, 1.442695
    %v2119 = vpow.pop %v2118
    %v2120 = vmul.f32 %v2116, 1.442695
    %v2121 = vpow.pop %v2120
    %v2122 = vmul.f32 %v2117, 1.442695
    %v2123 = vpow.pop %v2122
    %v2124 = vadd.f32 %v2119, 1.0
    %v2125 = vadd.f32 %v2121, 1.0
    %v2126 = vadd.f32 %v2123, 1.0
    %v2127 = vrcp.pop %v2124
    %v2128 = vmul.f32 1.0, %v2127
    %v2129 = vrcp.pop %v2125
    %v2130 = vmul.f32 1.0, %v2129
    %v2131 = vrcp.pop %v2126
    %v2132 = vmul.f32 1.0, %v2131
    %v2133 = vtanh.pop %v2114
    %v2134 = vmul.f32 %v2130, %v1897
    %v2135 = vmul.f32 %v2128, %v2133
    %v2136 = vadd.f32 %v2134, %v2135
    %v2137 = vtanh.pop %v2136
    %v2138 = vmul.f32 %v2132, %v2137
    %2139 = vst [vmem:[#allocation3 + $0x30] sm:$0xff] %v2138
    %v2140 = vld [vmem:[#allocation2 + $0xe0] sm:$0xff]
    %v2141 = vld [vmem:[#allocation2 + $0xe8] sm:$0xff]
    %v2142 = vld [vmem:[#allocation2 + $0xf0] sm:$0xff]
    %v2143 = vld [vmem:[#allocation2 + $0xf8] sm:$0xff]
    %v2144 = vld [vmem:[#allocation10] sm:$0xff]
    %v2145 = vld [vmem:[#allocation10 + $0x8] sm:$0xff]
    %v2146 = vld [vmem:[#allocation10 + $0x10] sm:$0xff]
    %v2147 = vld [vmem:[#allocation10 + $0x18] sm:$0xff]
    %v2148 = vld [vmem:[#allocation10 + $0x20] sm:$0xff]
    %v2149 = vld [vmem:[#allocation10 + $0x28] sm:$0xff]
    %v2150 = vld [vmem:[#allocation10 + $0x30] sm:$0xff]
    %v2151 = vld [vmem:[#allocation10 + $0x38] sm:$0xff]
    %v2152 = vld [vmem:[#allocation10 + $0x40] sm:$0xff]
    %v2153 = vld [vmem:[#allocation10 + $0x48] sm:$0xff]
    %v2154 = vld [vmem:[#allocation10 + $0x50] sm:$0xff]
    %v2155 = vld [vmem:[#allocation10 + $0x58] sm:$0xff]
    %v2156 = vld [vmem:[#allocation10 + $0x60] sm:$0xff]
    %v2157 = vld [vmem:[#allocation10 + $0x68] sm:$0xff]
    %v2158 = vld [vmem:[#allocation10 + $0x70] sm:$0xff]
    %v2159 = vld [vmem:[#allocation10 + $0x78] sm:$0xff]
    %v2160 = vld [vmem:[#allocation10 + $0x80] sm:$0xff]
    %v2161 = vld [vmem:[#allocation10 + $0x88] sm:$0xff]
    %v2162 = vld [vmem:[#allocation10 + $0x90] sm:$0xff]
    %v2163 = vld [vmem:[#allocation10 + $0x98] sm:$0xff]
    %v2164 = vld [vmem:[#allocation10 + $0xa0] sm:$0xff]
    %v2165 = vld [vmem:[#allocation10 + $0xa8] sm:$0xff]
    %v2166 = vld [vmem:[#allocation10 + $0xb0] sm:$0xff]
    %v2167 = vld [vmem:[#allocation10 + $0xb8] sm:$0xff]
    %v2168 = vld [vmem:[#allocation10 + $0xc0] sm:$0xff]
    %v2169 = vld [vmem:[#allocation10 + $0xc8] sm:$0xff]
    %v2170 = vld [vmem:[#allocation10 + $0xd0] sm:$0xff]
    %v2171 = vld [vmem:[#allocation10 + $0xd8] sm:$0xff]
    %v2172 = vld [vmem:[#allocation10 + $0xe0] sm:$0xff]
    %v2173 = vld [vmem:[#allocation10 + $0xe8] sm:$0xff]
    %v2174 = vld [vmem:[#allocation10 + $0xf0] sm:$0xff]
    %v2175 = vld [vmem:[#allocation10 + $0xf8] sm:$0xff]
    %v2176 = vld [vmem:[#allocation10 + $0x100] sm:$0xff]
    %v2177 = vld [vmem:[#allocation10 + $0x108] sm:$0xff]
    %v2178 = vld [vmem:[#allocation10 + $0x110] sm:$0xff]
    %v2179 = vld [vmem:[#allocation10 + $0x118] sm:$0xff]
    %v2180 = vld [vmem:[#allocation10 + $0x120] sm:$0xff]
    %v2181 = vld [vmem:[#allocation10 + $0x128] sm:$0xff]
    %v2182 = vld [vmem:[#allocation10 + $0x130] sm:$0xff]
    %v2183 = vld [vmem:[#allocation10 + $0x138] sm:$0xff]
    %v2184 = vld [vmem:[#allocation10 + $0x140] sm:$0xff]
    %v2185 = vld [vmem:[#allocation10 + $0x148] sm:$0xff]
    %v2186 = vld [vmem:[#allocation10 + $0x150] sm:$0xff]
    %v2187 = vld [vmem:[#allocation10 + $0x158] sm:$0xff]
    %v2188 = vld [vmem:[#allocation10 + $0x160] sm:$0xff]
    %v2189 = vld [vmem:[#allocation10 + $0x168] sm:$0xff]
    %v2190 = vld [vmem:[#allocation10 + $0x170] sm:$0xff]
    %v2191 = vld [vmem:[#allocation10 + $0x178] sm:$0xff]
    %v2192 = vld [vmem:[#allocation10 + $0x180] sm:$0xff]
    %v2193 = vld [vmem:[#allocation10 + $0x188] sm:$0xff]
    %v2194 = vld [vmem:[#allocation10 + $0x190] sm:$0xff]
    %v2195 = vld [vmem:[#allocation10 + $0x198] sm:$0xff]
    %v2196 = vld [vmem:[#allocation10 + $0x1a0] sm:$0xff]
    %v2197 = vld [vmem:[#allocation10 + $0x1a8] sm:$0xff]
    %v2198 = vld [vmem:[#allocation10 + $0x1b0] sm:$0xff]
    %v2199 = vld [vmem:[#allocation10 + $0x1b8] sm:$0xff]
    %v2200 = vld [vmem:[#allocation10 + $0x1c0] sm:$0xff]
    %v2201 = vld [vmem:[#allocation10 + $0x1c8] sm:$0xff]
    %v2202 = vld [vmem:[#allocation10 + $0x1d0] sm:$0xff]
    %v2203 = vld [vmem:[#allocation10 + $0x1d8] sm:$0xff]
    %v2204 = vld [vmem:[#allocation10 + $0x1e0] sm:$0xff]
    %v2205 = vld [vmem:[#allocation10 + $0x1e8] sm:$0xff]
    %v2206 = vld [vmem:[#allocation10 + $0x1f0] sm:$0xff]
    %v2207 = vld [vmem:[#allocation10 + $0x1f8] sm:$0xff]
    %2208 = vmatprep.subr.mxu0 %v2145
    %2209 = vmatpush1.msra.mxu0 %v2144
    %2210 = vmatprep.subr.mxu0 %v2149
    %2211 = vmatpush1.msra.mxu0 %v2148
    %2212 = vmatprep.subr.mxu0 %v2153
    %2213 = vmatpush1.msra.mxu0 %v2152
    %2214 = vmatprep.subr.mxu0 %v2157
    %2215 = vmatpush1.msra.mxu0 %v2156
    %2216 = vmatprep.subr.mxu0 %v2161
    %2217 = vmatpush1.msra.mxu0 %v2160
    %2218 = vmatprep.subr.mxu0 %v2165
    %2219 = vmatpush1.msra.mxu0 %v2164
    %2220 = vmatprep.subr.mxu0 %v2169
    %2221 = vmatpush1.msra.mxu0 %v2168
    %2222 = vmatprep.subr.mxu0 %v2173
    %2223 = vmatpush1.msra.mxu0 %v2172
    %2224 = vmatprep.subr.mxu0 %v2177
    %2225 = vmatpush1.msra.mxu0 %v2176
    %2226 = vmatprep.subr.mxu0 %v2181
    %2227 = vmatpush1.msra.mxu0 %v2180
    %2228 = vmatprep.subr.mxu0 %v2185
    %2229 = vmatpush1.msra.mxu0 %v2184
    %2230 = vmatprep.subr.mxu0 %v2189
    %2231 = vmatpush1.msra.mxu0 %v2188
    %2232 = vmatprep.subr.mxu0 %v2193
    %2233 = vmatpush1.msra.mxu0 %v2192
    %2234 = vmatprep.subr.mxu0 %v2197
    %2235 = vmatpush1.msra.mxu0 %v2196
    %2236 = vmatprep.subr.mxu0 %v2201
    %2237 = vmatpush1.msra.mxu0 %v2200
    %2238 = vmatprep.subr.mxu0 %v2205
    %2239 = vmatpush1.msra.mxu0 %v2204
    %2240 = vmatprep.subr.mxu0 0.0
    %2241 = vmatpush1.msra.mxu0 0.0
    %2242 = vmatprep.subr.mxu0 0.0
    %2243 = vmatpush1.msra.mxu0 0.0
    %2244 = vmatprep.subr.mxu0 0.0
    %2245 = vmatpush1.msra.mxu0 0.0
    %2246 = vmatprep.subr.mxu0 0.0
    %2247 = vmatpush1.msra.mxu0 0.0
    %2248 = vmatprep.subr.mxu0 0.0
    %2249 = vmatpush1.msra.mxu0 0.0
    %2250 = vmatprep.subr.mxu0 0.0
    %2251 = vmatpush1.msra.mxu0 0.0
    %2252 = vmatprep.subr.mxu0 0.0
    %2253 = vmatpush1.msra.mxu0 0.0
    %2254 = vmatprep.subr.mxu0 0.0
    %2255 = vmatpush1.msra.mxu0 0.0
    %2256 = vmatprep.subr.mxu0 0.0
    %2257 = vmatpush1.msra.mxu0 0.0
    %2258 = vmatprep.subr.mxu0 0.0
    %2259 = vmatpush1.msra.mxu0 0.0
    %2260 = vmatprep.subr.mxu0 0.0
    %2261 = vmatpush1.msra.mxu0 0.0
    %2262 = vmatprep.subr.mxu0 0.0
    %2263 = vmatpush1.msra.mxu0 0.0
    %2264 = vmatprep.subr.mxu0 0.0
    %2265 = vmatpush1.msra.mxu0 0.0
    %2266 = vmatprep.subr.mxu0 0.0
    %2267 = vmatpush1.msra.mxu0 0.0
    %2268 = vmatprep.subr.mxu0 0.0
    %2269 = vmatpush1.msra.mxu0 0.0
    %2270 = vmatprep.subr.mxu0 0.0
    %2271 = vmatpush1.msra.mxu0 0.0
    %2272 = vmatprep.mubr.f32.mxu0 0.0
    %2273 = vmatmul.mubr.f32.gmra.mrb[0].mxu0 %v2138
    %v2274 = vpop.f32.mrb[0].mxu0
    %v2275 = vadd.f32 0.0, %v2274
    %v2276 = vpop.f32.mrb[0].mxu0
    %v2277 = vadd.f32 0.0, %v2276
    %2278 = vdwg.mxu0
    %2279 = vmatprep.subr.mxu0 %v2147
    %2280 = vmatpush1.msra.mxu0 %v2146
    %2281 = vmatprep.subr.mxu0 %v2151
    %2282 = vmatpush1.msra.mxu0 %v2150
    %2283 = vmatprep.subr.mxu0 %v2155
    %2284 = vmatpush1.msra.mxu0 %v2154
    %2285 = vmatprep.subr.mxu0 %v2159
    %2286 = vmatpush1.msra.mxu0 %v2158
    %2287 = vmatprep.subr.mxu0 %v2163
    %2288 = vmatpush1.msra.mxu0 %v2162
    %2289 = vmatprep.subr.mxu0 %v2167
    %2290 = vmatpush1.msra.mxu0 %v2166
    %2291 = vmatprep.subr.mxu0 %v2171
    %2292 = vmatpush1.msra.mxu0 %v2170
    %2293 = vmatprep.subr.mxu0 %v2175
    %2294 = vmatpush1.msra.mxu0 %v2174
    %2295 = vmatprep.subr.mxu0 %v2179
    %2296 = vmatpush1.msra.mxu0 %v2178
    %2297 = vmatprep.subr.mxu0 %v2183
    %2298 = vmatpush1.msra.mxu0 %v2182
    %2299 = vmatprep.subr.mxu0 %v2187
    %2300 = vmatpush1.msra.mxu0 %v2186
    %2301 = vmatprep.subr.mxu0 %v2191
    %2302 = vmatpush1.msra.mxu0 %v2190
    %2303 = vmatprep.subr.mxu0 %v2195
    %2304 = vmatpush1.msra.mxu0 %v2194
    %2305 = vmatprep.subr.mxu0 %v2199
    %2306 = vmatpush1.msra.mxu0 %v2198
    %2307 = vmatprep.subr.mxu0 %v2203
    %2308 = vmatpush1.msra.mxu0 %v2202
    %2309 = vmatprep.subr.mxu0 %v2207
    %2310 = vmatpush1.msra.mxu0 %v2206
    %2311 = vmatprep.subr.mxu0 0.0
    %2312 = vmatpush1.msra.mxu0 0.0
    %2313 = vmatprep.subr.mxu0 0.0
    %2314 = vmatpush1.msra.mxu0 0.0
    %2315 = vmatprep.subr.mxu0 0.0
    %2316 = vmatpush1.msra.mxu0 0.0
    %2317 = vmatprep.subr.mxu0 0.0
    %2318 = vmatpush1.msra.mxu0 0.0
    %2319 = vmatprep.subr.mxu0 0.0
    %2320 = vmatpush1.msra.mxu0 0.0
    %2321 = vmatprep.subr.mxu0 0.0
    %2322 = vmatpush1.msra.mxu0 0.0
    %2323 = vmatprep.subr.mxu0 0.0
    %2324 = vmatpush1.msra.mxu0 0.0
    %2325 = vmatprep.subr.mxu0 0.0
    %2326 = vmatpush1.msra.mxu0 0.0
    %2327 = vmatprep.subr.mxu0 0.0
    %2328 = vmatpush1.msra.mxu0 0.0
    %2329 = vmatprep.subr.mxu0 0.0
    %2330 = vmatpush1.msra.mxu0 0.0
    %2331 = vmatprep.subr.mxu0 0.0
    %2332 = vmatpush1.msra.mxu0 0.0
    %2333 = vmatprep.subr.mxu0 0.0
    %2334 = vmatpush1.msra.mxu0 0.0
    %2335 = vmatprep.subr.mxu0 0.0
    %2336 = vmatpush1.msra.mxu0 0.0
    %2337 = vmatprep.subr.mxu0 0.0
    %2338 = vmatpush1.msra.mxu0 0.0
    %2339 = vmatprep.subr.mxu0 0.0
    %2340 = vmatpush1.msra.mxu0 0.0
    %2341 = vmatprep.subr.mxu0 0.0
    %2342 = vmatpush1.msra.mxu0 0.0
    %2343 = vmatprep.mubr.f32.mxu0 0.0
    %2344 = vmatmul.mubr.f32.gmra.mrb[0].mxu0 %v2138
    %v2345 = vpop.f32.mrb[0].mxu0
    %v2346 = vadd.f32 0.0, %v2345
    %v2347 = vpop.f32.mrb[0].mxu0
    %v2348 = vadd.f32 0.0, %v2347
    %2349 = vdwg.mxu0
    %v2350 = vadd.f32 %v2140, %v2275
    %v2351 = vadd.f32 %v2141, %v2277
    %v2352 = vadd.f32 %v2142, %v2346
    %v2353 = vadd.f32 %v2143, %v2348
    %v2354 = vxor.u32 %v2350, 2147483648
    %v2355 = vxor.u32 %v2351, 2147483648
    %v2356 = vxor.u32 %v2352, 2147483648
    %v2357 = vmul.f32 %v2354, 1.442695
    %v2358 = vpow.pop %v2357
    %v2359 = vmul.f32 %v2355, 1.442695
    %v2360 = vpow.pop %v2359
    %v2361 = vmul.f32 %v2356, 1.442695
    %v2362 = vpow.pop %v2361
    %v2363 = vadd.f32 %v2358, 1.0
    %v2364 = vadd.f32 %v2360, 1.0
    %v2365 = vadd.f32 %v2362, 1.0
    %v2366 = vrcp.pop %v2363
    %v2367 = vmul.f32 1.0, %v2366
    %v2368 = vrcp.pop %v2364
    %v2369 = vmul.f32 1.0, %v2368
    %v2370 = vrcp.pop %v2365
    %v2371 = vmul.f32 1.0, %v2370
    %v2372 = vtanh.pop %v2353
    %v2373 = vmul.f32 %v2369, %v2136
    %v2374 = vmul.f32 %v2367, %v2372
    %v2375 = vadd.f32 %v2373, %v2374
    %v2376 = vtanh.pop %v2375
    %v2377 = vmul.f32 %v2371, %v2376
    %2378 = vst [vmem:[#allocation3 + $0x38] sm:$0xff] %v2377
    %v2379 = vld [vmem:[#allocation3] sm:$0xff]
    %v2380 = vld [vmem:[#allocation3 + $0x8] sm:$0xff]
    %v2381 = vld [vmem:[#allocation3 + $0x10] sm:$0xff]
    %v2382 = vld [vmem:[#allocation3 + $0x18] sm:$0xff]
    %v2383 = vld [vmem:[#allocation3 + $0x20] sm:$0xff]
    %v2384 = vld [vmem:[#allocation3 + $0x28] sm:$0xff]
    %v2385 = vld [vmem:[#allocation3 + $0x30] sm:$0xff]
    %v2386 = vld [vmem:[#allocation3 + $0x38] sm:$0xff]
    %v2387 = vld [vmem:[#allocation11] sm:$0xff]
    %v2388 = vld [vmem:[#allocation11 + $0x8] sm:$0xff]
    %v2389 = vld [vmem:[#allocation11 + $0x10] sm:$0xff]
    %v2390 = vld [vmem:[#allocation11 + $0x18] sm:$0xff]
    %v2391 = vld [vmem:[#allocation11 + $0x20] sm:$0xff]
    %v2392 = vld [vmem:[#allocation11 + $0x28] sm:$0xff]
    %v2393 = vld [vmem:[#allocation11 + $0x30] sm:$0xff]
    %v2394 = vld [vmem:[#allocation11 + $0x38] sm:$0xff]
    %v2395 = vld [vmem:[#allocation11 + $0x40] sm:$0xff]
    %v2396 = vld [vmem:[#allocation11 + $0x48] sm:$0xff]
    %v2397 = vld [vmem:[#allocation11 + $0x50] sm:$0xff]
    %v2398 = vld [vmem:[#allocation11 + $0x58] sm:$0xff]
    %v2399 = vld [vmem:[#allocation11 + $0x60] sm:$0xff]
    %v2400 = vld [vmem:[#allocation11 + $0x68] sm:$0xff]
    %v2401 = vld [vmem:[#allocation11 + $0x70] sm:$0xff]
    %v2402 = vld [vmem:[#allocation11 + $0x78] sm:$0xff]
    %v2403 = vld [vmem:[#allocation11 + $0x80] sm:$0xff]
    %v2404 = vld [vmem:[#allocation11 + $0x88] sm:$0xff]
    %v2405 = vld [vmem:[#allocation11 + $0x90] sm:$0xff]
    %v2406 = vld [vmem:[#allocation11 + $0x98] sm:$0xff]
    %v2407 = vld [vmem:[#allocation11 + $0xa0] sm:$0xff]
    %v2408 = vld [vmem:[#allocation11 + $0xa8] sm:$0xff]
    %v2409 = vld [vmem:[#allocation11 + $0xb0] sm:$0xff]
    %v2410 = vld [vmem:[#allocation11 + $0xb8] sm:$0xff]
    %v2411 = vld [vmem:[#allocation11 + $0xc0] sm:$0xff]
    %v2412 = vld [vmem:[#allocation11 + $0xc8] sm:$0xff]
    %v2413 = vld [vmem:[#allocation11 + $0xd0] sm:$0xff]
    %v2414 = vld [vmem:[#allocation11 + $0xd8] sm:$0xff]
    %v2415 = vld [vmem:[#allocation11 + $0xe0] sm:$0xff]
    %v2416 = vld [vmem:[#allocation11 + $0xe8] sm:$0xff]
    %v2417 = vld [vmem:[#allocation11 + $0xf0] sm:$0xff]
    %v2418 = vld [vmem:[#allocation11 + $0xf8] sm:$0xff]
    %v2419 = vld [vmem:[#allocation11 + $0x100] sm:$0xff]
    %v2420 = vld [vmem:[#allocation11 + $0x108] sm:$0xff]
    %v2421 = vld [vmem:[#allocation11 + $0x110] sm:$0xff]
    %v2422 = vld [vmem:[#allocation11 + $0x118] sm:$0xff]
    %v2423 = vld [vmem:[#allocation11 + $0x120] sm:$0xff]
    %v2424 = vld [vmem:[#allocation11 + $0x128] sm:$0xff]
    %v2425 = vld [vmem:[#allocation11 + $0x130] sm:$0xff]
    %v2426 = vld [vmem:[#allocation11 + $0x138] sm:$0xff]
    %v2427 = vld [vmem:[#allocation11 + $0x140] sm:$0xff]
    %v2428 = vld [vmem:[#allocation11 + $0x148] sm:$0xff]
    %v2429 = vld [vmem:[#allocation11 + $0x150] sm:$0xff]
    %v2430 = vld [vmem:[#allocation11 + $0x158] sm:$0xff]
    %v2431 = vld [vmem:[#allocation11 + $0x160] sm:$0xff]
    %v2432 = vld [vmem:[#allocation11 + $0x168] sm:$0xff]
    %v2433 = vld [vmem:[#allocation11 + $0x170] sm:$0xff]
    %v2434 = vld [vmem:[#allocation11 + $0x178] sm:$0xff]
    %v2435 = vld [vmem:[#allocation11 + $0x180] sm:$0xff]
    %v2436 = vld [vmem:[#allocation11 + $0x188] sm:$0xff]
    %v2437 = vld [vmem:[#allocation11 + $0x190] sm:$0xff]
    %v2438 = vld [vmem:[#allocation11 + $0x198] sm:$0xff]
    %v2439 = vld [vmem:[#allocation11 + $0x1a0] sm:$0xff]
    %v2440 = vld [vmem:[#allocation11 + $0x1a8] sm:$0xff]
    %v2441 = vld [vmem:[#allocation11 + $0x1b0] sm:$0xff]
    %v2442 = vld [vmem:[#allocation11 + $0x1b8] sm:$0xff]
    %v2443 = vld [vmem:[#allocation11 + $0x1c0] sm:$0xff]
    %v2444 = vld [vmem:[#allocation11 + $0x1c8] sm:$0xff]
    %v2445 = vld [vmem:[#allocation11 + $0x1d0] sm:$0xff]
    %v2446 = vld [vmem:[#allocation11 + $0x1d8] sm:$0xff]
    %v2447 = vld [vmem:[#allocation11 + $0x1e0] sm:$0xff]
    %v2448 = vld [vmem:[#allocation11 + $0x1e8] sm:$0xff]
    %v2449 = vld [vmem:[#allocation11 + $0x1f0] sm:$0xff]
    %v2450 = vld [vmem:[#allocation11 + $0x1f8] sm:$0xff]
    %v2451 = vld [vmem:[%s6] sm:$0xf]
    %v2453 = vlaneseq
    %v2454 = vshrl.u32 %v2453, 7
    %v2455 = vsub.s32 0, %v2454
    %v2456 = vrot.slane %v2451, %v2455
    %v2457 = vlaneseq
    %v2458 = vshrl.u32 %v2457, 7
    %v2459 = vsub.s32 1, %v2458
    %v2460 = vrot.slane %v2451, %v2459
    %v2461 = vlaneseq
    %v2462 = vshrl.u32 %v2461, 7
    %v2463 = vsub.s32 2, %v2462
    %v2464 = vrot.slane %v2451, %v2463
    %v2465 = vlaneseq
    %v2466 = vshrl.u32 %v2465, 7
    %v2467 = vsub.s32 3, %v2466
    %v2468 = vrot.slane %v2451, %v2467
    %2473 = vmatprep.subr.mxu0 %v2388
    %2474 = vmatpush1.msra.mxu0 %v2387
    %2475 = vmatprep.subr.mxu0 %v2392
    %2476 = vmatpush1.msra.mxu0 %v2391
    %2477 = vmatprep.subr.mxu0 %v2396
    %2478 = vmatpush1.msra.mxu0 %v2395
    %2479 = vmatprep.subr.mxu0 %v2400
    %2480 = vmatpush1.msra.mxu0 %v2399
    %2481 = vmatprep.subr.mxu0 %v2404
    %2482 = vmatpush1.msra.mxu0 %v2403
    %2483 = vmatprep.subr.mxu0 %v2408
    %2484 = vmatpush1.msra.mxu0 %v2407
    %2485 = vmatprep.subr.mxu0 %v2412
    %2486 = vmatpush1.msra.mxu0 %v2411
    %2487 = vmatprep.subr.mxu0 %v2416
    %2488 = vmatpush1.msra.mxu0 %v2415
    %2489 = vmatprep.subr.mxu0 %v2420
    %2490 = vmatpush1.msra.mxu0 %v2419
    %2491 = vmatprep.subr.mxu0 %v2424
    %2492 = vmatpush1.msra.mxu0 %v2423
    %2493 = vmatprep.subr.mxu0 %v2428
    %2494 = vmatpush1.msra.mxu0 %v2427
    %2495 = vmatprep.subr.mxu0 %v2432
    %2496 = vmatpush1.msra.mxu0 %v2431
    %2497 = vmatprep.subr.mxu0 %v2436
    %2498 = vmatpush1.msra.mxu0 %v2435
    %2499 = vmatprep.subr.mxu0 %v2440
    %2500 = vmatpush1.msra.mxu0 %v2439
    %2501 = vmatprep.subr.mxu0 %v2444
    %2502 = vmatpush1.msra.mxu0 %v2443
    %2503 = vmatprep.subr.mxu0 %v2448
    %2504 = vmatpush1.msra.mxu0 %v2447
    %2505 = vmatprep.subr.mxu0 0.0
    %2506 = vmatpush1.msra.mxu0 0.0
    %2507 = vmatprep.subr.mxu0 0.0
    %2508 = vmatpush1.msra.mxu0 0.0
    %2509 = vmatprep.subr.mxu0 0.0
    %2510 = vmatpush1.msra.mxu0 0.0
    %2511 = vmatprep.subr.mxu0 0.0
    %2512 = vmatpush1.msra.mxu0 0.0
    %2513 = vmatprep.subr.mxu0 0.0
    %2514 = vmatpush1.msra.mxu0 0.0
    %2515 = vmatprep.subr.mxu0 0.0
    %2516 = vmatpush1.msra.mxu0 0.0
    %2517 = vmatprep.subr.mxu0 0.0
    %2518 = vmatpush1.msra.mxu0 0.0
    %2519 = vmatprep.subr.mxu0 0.0
    %2520 = vmatpush1.msra.mxu0 0.0
    %2521 = vmatprep.subr.mxu0 0.0
    %2522 = vmatpush1.msra.mxu0 0.0
    %2523 = vmatprep.subr.mxu0 0.0
    %2524 = vmatpush1.msra.mxu0 0.0
    %2525 = vmatprep.subr.mxu0 0.0
    %2526 = vmatpush1.msra.mxu0 0.0
    %2527 = vmatprep.subr.mxu0 0.0
    %2528 = vmatpush1.msra.mxu0 0.0
    %2529 = vmatprep.subr.mxu0 0.0
    %2530 = vmatpush1.msra.mxu0 0.0
    %2531 = vmatprep.subr.mxu0 0.0
    %2532 = vmatpush1.msra.mxu0 0.0
    %2533 = vmatprep.subr.mxu0 0.0
    %2534 = vmatpush1.msra.mxu0 0.0
    %2535 = vmatprep.subr.mxu0 0.0
    %2536 = vmatpush1.msra.mxu0 0.0
    %2537 = vmatprep.mubr.f32.mxu0 0.0
    %2538 = vmatmul.mubr.f32.gmra.mrb[0].mxu0 %v2379
    %v2539 = vpop.f32.mrb[0].mxu0
    %v2540 = vadd.f32 %v2456, %v2539
    %v2541 = vpop.f32.mrb[0].mxu0
    %v2542 = vadd.f32 %v2460, %v2541
    %2543 = vmatprep.mubr.f32.mxu0 0.0
    %2544 = vmatmul.mubr.f32.gmra.mrb[0].mxu0 %v2380
    %v2545 = vpop.f32.mrb[0].mxu0
    %v2546 = vadd.f32 %v2456, %v2545
    %v2547 = vpop.f32.mrb[0].mxu0
    %v2548 = vadd.f32 %v2460, %v2547
    %2549 = vmatprep.mubr.f32.mxu0 0.0
    %2550 = vmatmul.mubr.f32.gmra.mrb[0].mxu0 %v2381
    %v2551 = vpop.f32.mrb[0].mxu0
    %v2552 = vadd.f32 %v2456, %v2551
    %v2553 = vpop.f32.mrb[0].mxu0
    %v2554 = vadd.f32 %v2460, %v2553
    %2555 = vmatprep.mubr.f32.mxu0 0.0
    %2556 = vmatmul.mubr.f32.gmra.mrb[0].mxu0 %v2382
    %v2557 = vpop.f32.mrb[0].mxu0
    %v2558 = vadd.f32 %v2456, %v2557
    %v2559 = vpop.f32.mrb[0].mxu0
    %v2560 = vadd.f32 %v2460, %v2559
    %2561 = vmatprep.mubr.f32.mxu0 0.0
    %2562 = vmatmul.mubr.f32.gmra.mrb[0].mxu0 %v2383
    %v2563 = vpop.f32.mrb[0].mxu0
    %v2564 = vadd.f32 %v2456, %v2563
    %v2565 = vpop.f32.mrb[0].mxu0
    %v2566 = vadd.f32 %v2460, %v2565
    %2567 = vmatprep.mubr.f32.mxu0 0.0
    %2568 = vmatmul.mubr.f32.gmra.mrb[0].mxu0 %v2384
    %v2569 = vpop.f32.mrb[0].mxu0
    %v2570 = vadd.f32 %v2456, %v2569
    %v2571 = vpop.f32.mrb[0].mxu0
    %v2572 = vadd.f32 %v2460, %v2571
    %2573 = vmatprep.mubr.f32.mxu0 0.0
    %2574 = vmatmul.mubr.f32.gmra.mrb[0].mxu0 %v2385
    %v2575 = vpop.f32.mrb[0].mxu0
    %v2576 = vadd.f32 %v2456, %v2575
    %v2577 = vpop.f32.mrb[0].mxu0
    %v2578 = vadd.f32 %v2460, %v2577
    %2579 = vmatprep.mubr.f32.mxu0 0.0
    %2580 = vmatmul.mubr.f32.gmra.mrb[0].mxu0 %v2386
    %v2581 = vpop.f32.mrb[0].mxu0
    %v2582 = vadd.f32 %v2456, %v2581
    %v2583 = vpop.f32.mrb[0].mxu0
    %v2584 = vadd.f32 %v2460, %v2583
    %2585 = vdwg.mxu0
    %2586 = vmatprep.subr.mxu0 %v2390
    %2587 = vmatpush1.msra.mxu0 %v2389
    %2588 = vmatprep.subr.mxu0 %v2394
    %2589 = vmatpush1.msra.mxu0 %v2393
    %2590 = vmatprep.subr.mxu0 %v2398
    %2591 = vmatpush1.msra.mxu0 %v2397
    %2592 = vmatprep.subr.mxu0 %v2402
    %2593 = vmatpush1.msra.mxu0 %v2401
    %2594 = vmatprep.subr.mxu0 %v2406
    %2595 = vmatpush1.msra.mxu0 %v2405
    %2596 = vmatprep.subr.mxu0 %v2410
    %2597 = vmatpush1.msra.mxu0 %v2409
    %2598 = vmatprep.subr.mxu0 %v2414
    %2599 = vmatpush1.msra.mxu0 %v2413
    %2600 = vmatprep.subr.mxu0 %v2418
    %2601 = vmatpush1.msra.mxu0 %v2417
    %2602 = vmatprep.subr.mxu0 %v2422
    %2603 = vmatpush1.msra.mxu0 %v2421
    %2604 = vmatprep.subr.mxu0 %v2426
    %2605 = vmatpush1.msra.mxu0 %v2425
    %2606 = vmatprep.subr.mxu0 %v2430
    %2607 = vmatpush1.msra.mxu0 %v2429
    %2608 = vmatprep.subr.mxu0 %v2434
    %2609 = vmatpush1.msra.mxu0 %v2433
    %2610 = vmatprep.subr.mxu0 %v2438
    %2611 = vmatpush1.msra.mxu0 %v2437
    %2612 = vmatprep.subr.mxu0 %v2442
    %2613 = vmatpush1.msra.mxu0 %v2441
    %2614 = vmatprep.subr.mxu0 %v2446
    %2615 = vmatpush1.msra.mxu0 %v2445
    %2616 = vmatprep.subr.mxu0 %v2450
    %2617 = vmatpush1.msra.mxu0 %v2449
    %2618 = vmatprep.subr.mxu0 0.0
    %2619 = vmatpush1.msra.mxu0 0.0
    %2620 = vmatprep.subr.mxu0 0.0
    %2621 = vmatpush1.msra.mxu0 0.0
    %2622 = vmatprep.subr.mxu0 0.0
    %2623 = vmatpush1.msra.mxu0 0.0
    %2624 = vmatprep.subr.mxu0 0.0
    %2625 = vmatpush1.msra.mxu0 0.0
    %2626 = vmatprep.subr.mxu0 0.0
    %2627 = vmatpush1.msra.mxu0 0.0
    %2628 = vmatprep.subr.mxu0 0.0
    %2629 = vmatpush1.msra.mxu0 0.0
    %2630 = vmatprep.subr.mxu0 0.0
    %2631 = vmatpush1.msra.mxu0 0.0
    %2632 = vmatprep.subr.mxu0 0.0
    %2633 = vmatpush1.msra.mxu0 0.0
    %2634 = vmatprep.subr.mxu0 0.0
    %2635 = vmatpush1.msra.mxu0 0.0
    %2636 = vmatprep.subr.mxu0 0.0
    %2637 = vmatpush1.msra.mxu0 0.0
    %2638 = vmatprep.subr.mxu0 0.0
    %2639 = vmatpush1.msra.mxu0 0.0
    %2640 = vmatprep.subr.mxu0 0.0
    %2641 = vmatpush1.msra.mxu0 0.0
    %2642 = vmatprep.subr.mxu0 0.0
    %2643 = vmatpush1.msra.mxu0 0.0
    %2644 = vmatprep.subr.mxu0 0.0
    %2645 = vmatpush1.msra.mxu0 0.0
    %2646 = vmatprep.subr.mxu0 0.0
    %2647 = vmatpush1.msra.mxu0 0.0
    %2648 = vmatprep.subr.mxu0 0.0
    %2649 = vmatpush1.msra.mxu0 0.0
    %2650 = vmatprep.mubr.f32.mxu0 0.0
    %2651 = vmatmul.mubr.f32.gmra.mrb[0].mxu0 %v2379
    %v2652 = vpop.f32.mrb[0].mxu0
    %v2653 = vadd.f32 %v2464, %v2652
    %v2654 = vpop.f32.mrb[0].mxu0
    %v2655 = vadd.f32 %v2468, %v2654
    %2656 = vmatprep.mubr.f32.mxu0 0.0
    %2657 = vmatmul.mubr.f32.gmra.mrb[0].mxu0 %v2380
    %v2658 = vpop.f32.mrb[0].mxu0
    %v2659 = vadd.f32 %v2464, %v2658
    %v2660 = vpop.f32.mrb[0].mxu0
    %v2661 = vadd.f32 %v2468, %v2660
    %2662 = vmatprep.mubr.f32.mxu0 0.0
    %2663 = vmatmul.mubr.f32.gmra.mrb[0].mxu0 %v2381
    %v2664 = vpop.f32.mrb[0].mxu0
    %v2665 = vadd.f32 %v2464, %v2664
    %v2666 = vpop.f32.mrb[0].mxu0
    %v2667 = vadd.f32 %v2468, %v2666
    %2668 = vmatprep.mubr.f32.mxu0 0.0
    %2669 = vmatmul.mubr.f32.gmra.mrb[0].mxu0 %v2382
    %v2670 = vpop.f32.mrb[0].mxu0
    %v2671 = vadd.f32 %v2464, %v2670
    %v2672 = vpop.f32.mrb[0].mxu0
    %v2673 = vadd.f32 %v2468, %v2672
    %2674 = vmatprep.mubr.f32.mxu0 0.0
    %2675 = vmatmul.mubr.f32.gmra.mrb[0].mxu0 %v2383
    %v2676 = vpop.f32.mrb[0].mxu0
    %v2677 = vadd.f32 %v2464, %v2676
    %v2678 = vpop.f32.mrb[0].mxu0
    %v2679 = vadd.f32 %v2468, %v2678
    %2680 = vmatprep.mubr.f32.mxu0 0.0
    %2681 = vmatmul.mubr.f32.gmra.mrb[0].mxu0 %v2384
    %v2682 = vpop.f32.mrb[0].mxu0
    %v2683 = vadd.f32 %v2464, %v2682
    %v2684 = vpop.f32.mrb[0].mxu0
    %v2685 = vadd.f32 %v2468, %v2684
    %2686 = vmatprep.mubr.f32.mxu0 0.0
    %2687 = vmatmul.mubr.f32.gmra.mrb[0].mxu0 %v2385
    %v2688 = vpop.f32.mrb[0].mxu0
    %v2689 = vadd.f32 %v2464, %v2688
    %v2690 = vpop.f32.mrb[0].mxu0
    %v2691 = vadd.f32 %v2468, %v2690
    %2692 = vmatprep.mubr.f32.mxu0 0.0
    %2693 = vmatmul.mubr.f32.gmra.mrb[0].mxu0 %v2386
    %v2694 = vpop.f32.mrb[0].mxu0
    %v2695 = vadd.f32 %v2464, %v2694
    %v2696 = vpop.f32.mrb[0].mxu0
    %v2697 = vadd.f32 %v2468, %v2696
    %2698 = vdwg.mxu0
    %2699 = vst [vmem:[#allocation2] sm:$0xff] %v2540
    %2700 = vst [vmem:[#allocation2 + $0x8] sm:$0xff] %v2542
    %2701 = vst [vmem:[#allocation2 + $0x10] sm:$0xff] %v2653
    %2702 = vst [vmem:[#allocation2 + $0x18] sm:$0xff] %v2655
    %2703 = vst [vmem:[#allocation2 + $0x20] sm:$0xff] %v2546
    %2704 = vst [vmem:[#allocation2 + $0x28] sm:$0xff] %v2548
    %2705 = vst [vmem:[#allocation2 + $0x30] sm:$0xff] %v2659
    %2706 = vst [vmem:[#allocation2 + $0x38] sm:$0xff] %v2661
    %2707 = vst [vmem:[#allocation2 + $0x40] sm:$0xff] %v2552
    %2708 = vst [vmem:[#allocation2 + $0x48] sm:$0xff] %v2554
    %2709 = vst [vmem:[#allocation2 + $0x50] sm:$0xff] %v2665
    %2710 = vst [vmem:[#allocation2 + $0x58] sm:$0xff] %v2667
    %2711 = vst [vmem:[#allocation2 + $0x60] sm:$0xff] %v2558
    %2712 = vst [vmem:[#allocation2 + $0x68] sm:$0xff] %v2560
    %2713 = vst [vmem:[#allocation2 + $0x70] sm:$0xff] %v2671
    %2714 = vst [vmem:[#allocation2 + $0x78] sm:$0xff] %v2673
    %2715 = vst [vmem:[#allocation2 + $0x80] sm:$0xff] %v2564
    %2716 = vst [vmem:[#allocation2 + $0x88] sm:$0xff] %v2566
    %2717 = vst [vmem:[#allocation2 + $0x90] sm:$0xff] %v2677
    %2718 = vst [vmem:[#allocation2 + $0x98] sm:$0xff] %v2679
    %2719 = vst [vmem:[#allocation2 + $0xa0] sm:$0xff] %v2570
    %2720 = vst [vmem:[#allocation2 + $0xa8] sm:$0xff] %v2572
    %2721 = vst [vmem:[#allocation2 + $0xb0] sm:$0xff] %v2683
    %2722 = vst [vmem:[#allocation2 + $0xb8] sm:$0xff] %v2685
    %2723 = vst [vmem:[#allocation2 + $0xc0] sm:$0xff] %v2576
    %2724 = vst [vmem:[#allocation2 + $0xc8] sm:$0xff] %v2578
    %2725 = vst [vmem:[#allocation2 + $0xd0] sm:$0xff] %v2689
    %2726 = vst [vmem:[#allocation2 + $0xd8] sm:$0xff] %v2691
    %2727 = vst [vmem:[#allocation2 + $0xe0] sm:$0xff] %v2582
    %2728 = vst [vmem:[#allocation2 + $0xe8] sm:$0xff] %v2584
    %2729 = vst [vmem:[#allocation2 + $0xf0] sm:$0xff] %v2695
    %2730 = vst [vmem:[#allocation2 + $0xf8] sm:$0xff] %v2697
    %v2731 = vld [vmem:[#allocation2] sm:$0xff]
    %v2732 = vld [vmem:[#allocation2 + $0x8] sm:$0xff]
    %v2733 = vld [vmem:[#allocation2 + $0x10] sm:$0xff]
    %v2734 = vld [vmem:[#allocation2 + $0x18] sm:$0xff]
    %v2735 = vld [vmem:[#allocation13] sm:$0xff]
    %v2736 = vld [vmem:[#allocation13 + $0x8] sm:$0xff]
    %v2737 = vld [vmem:[#allocation13 + $0x10] sm:$0xff]
    %v2738 = vld [vmem:[#allocation13 + $0x18] sm:$0xff]
    %v2739 = vld [vmem:[#allocation13 + $0x20] sm:$0xff]
    %v2740 = vld [vmem:[#allocation13 + $0x28] sm:$0xff]
    %v2741 = vld [vmem:[#allocation13 + $0x30] sm:$0xff]
    %v2742 = vld [vmem:[#allocation13 + $0x38] sm:$0xff]
    %v2743 = vld [vmem:[#allocation13 + $0x40] sm:$0xff]
    %v2744 = vld [vmem:[#allocation13 + $0x48] sm:$0xff]
    %v2745 = vld [vmem:[#allocation13 + $0x50] sm:$0xff]
    %v2746 = vld [vmem:[#allocation13 + $0x58] sm:$0xff]
    %v2747 = vld [vmem:[#allocation13 + $0x60] sm:$0xff]
    %v2748 = vld [vmem:[#allocation13 + $0x68] sm:$0xff]
    %v2749 = vld [vmem:[#allocation13 + $0x70] sm:$0xff]
    %v2750 = vld [vmem:[#allocation13 + $0x78] sm:$0xff]
    %v2751 = vld [vmem:[#allocation13 + $0x80] sm:$0xff]
    %v2752 = vld [vmem:[#allocation13 + $0x88] sm:$0xff]
    %v2753 = vld [vmem:[#allocation13 + $0x90] sm:$0xff]
    %v2754 = vld [vmem:[#allocation13 + $0x98] sm:$0xff]
    %v2755 = vld [vmem:[#allocation13 + $0xa0] sm:$0xff]
    %v2756 = vld [vmem:[#allocation13 + $0xa8] sm:$0xff]
    %v2757 = vld [vmem:[#allocation13 + $0xb0] sm:$0xff]
    %v2758 = vld [vmem:[#allocation13 + $0xb8] sm:$0xff]
    %v2759 = vld [vmem:[#allocation13 + $0xc0] sm:$0xff]
    %v2760 = vld [vmem:[#allocation13 + $0xc8] sm:$0xff]
    %v2761 = vld [vmem:[#allocation13 + $0xd0] sm:$0xff]
    %v2762 = vld [vmem:[#allocation13 + $0xd8] sm:$0xff]
    %v2763 = vld [vmem:[#allocation13 + $0xe0] sm:$0xff]
    %v2764 = vld [vmem:[#allocation13 + $0xe8] sm:$0xff]
    %v2765 = vld [vmem:[#allocation13 + $0xf0] sm:$0xff]
    %v2766 = vld [vmem:[#allocation13 + $0xf8] sm:$0xff]
    %v2767 = vld [vmem:[#allocation13 + $0x100] sm:$0xff]
    %v2768 = vld [vmem:[#allocation13 + $0x108] sm:$0xff]
    %v2769 = vld [vmem:[#allocation13 + $0x110] sm:$0xff]
    %v2770 = vld [vmem:[#allocation13 + $0x118] sm:$0xff]
    %v2771 = vld [vmem:[#allocation13 + $0x120] sm:$0xff]
    %v2772 = vld [vmem:[#allocation13 + $0x128] sm:$0xff]
    %v2773 = vld [vmem:[#allocation13 + $0x130] sm:$0xff]
    %v2774 = vld [vmem:[#allocation13 + $0x138] sm:$0xff]
    %v2775 = vld [vmem:[#allocation13 + $0x140] sm:$0xff]
    %v2776 = vld [vmem:[#allocation13 + $0x148] sm:$0xff]
    %v2777 = vld [vmem:[#allocation13 + $0x150] sm:$0xff]
    %v2778 = vld [vmem:[#allocation13 + $0x158] sm:$0xff]
    %v2779 = vld [vmem:[#allocation13 + $0x160] sm:$0xff]
    %v2780 = vld [vmem:[#allocation13 + $0x168] sm:$0xff]
    %v2781 = vld [vmem:[#allocation13 + $0x170] sm:$0xff]
    %v2782 = vld [vmem:[#allocation13 + $0x178] sm:$0xff]
    %v2783 = vld [vmem:[#allocation13 + $0x180] sm:$0xff]
    %v2784 = vld [vmem:[#allocation13 + $0x188] sm:$0xff]
    %v2785 = vld [vmem:[#allocation13 + $0x190] sm:$0xff]
    %v2786 = vld [vmem:[#allocation13 + $0x198] sm:$0xff]
    %v2787 = vld [vmem:[#allocation13 + $0x1a0] sm:$0xff]
    %v2788 = vld [vmem:[#allocation13 + $0x1a8] sm:$0xff]
    %v2789 = vld [vmem:[#allocation13 + $0x1b0] sm:$0xff]
    %v2790 = vld [vmem:[#allocation13 + $0x1b8] sm:$0xff]
    %v2791 = vld [vmem:[#allocation13 + $0x1c0] sm:$0xff]
    %v2792 = vld [vmem:[#allocation13 + $0x1c8] sm:$0xff]
    %v2793 = vld [vmem:[#allocation13 + $0x1d0] sm:$0xff]
    %v2794 = vld [vmem:[#allocation13 + $0x1d8] sm:$0xff]
    %v2795 = vld [vmem:[#allocation13 + $0x1e0] sm:$0xff]
    %v2796 = vld [vmem:[#allocation13 + $0x1e8] sm:$0xff]
    %v2797 = vld [vmem:[#allocation13 + $0x1f0] sm:$0xff]
    %v2798 = vld [vmem:[#allocation13 + $0x1f8] sm:$0xff]
    %2799 = vmatprep.subr.mxu0 %v2736
    %2800 = vmatpush1.msra.mxu0 %v2735
    %2801 = vmatprep.subr.mxu0 %v2740
    %2802 = vmatpush1.msra.mxu0 %v2739
    %2803 = vmatprep.subr.mxu0 %v2744
    %2804 = vmatpush1.msra.mxu0 %v2743
    %2805 = vmatprep.subr.mxu0 %v2748
    %2806 = vmatpush1.msra.mxu0 %v2747
    %2807 = vmatprep.subr.mxu0 %v2752
    %2808 = vmatpush1.msra.mxu0 %v2751
    %2809 = vmatprep.subr.mxu0 %v2756
    %2810 = vmatpush1.msra.mxu0 %v2755
    %2811 = vmatprep.subr.mxu0 %v2760
    %2812 = vmatpush1.msra.mxu0 %v2759
    %2813 = vmatprep.subr.mxu0 %v2764
    %2814 = vmatpush1.msra.mxu0 %v2763
    %2815 = vmatprep.subr.mxu0 %v2768
    %2816 = vmatpush1.msra.mxu0 %v2767
    %2817 = vmatprep.subr.mxu0 %v2772
    %2818 = vmatpush1.msra.mxu0 %v2771
    %2819 = vmatprep.subr.mxu0 %v2776
    %2820 = vmatpush1.msra.mxu0 %v2775
    %2821 = vmatprep.subr.mxu0 %v2780
    %2822 = vmatpush1.msra.mxu0 %v2779
    %2823 = vmatprep.subr.mxu0 %v2784
    %2824 = vmatpush1.msra.mxu0 %v2783
    %2825 = vmatprep.subr.mxu0 %v2788
    %2826 = vmatpush1.msra.mxu0 %v2787
    %2827 = vmatprep.subr.mxu0 %v2792
    %2828 = vmatpush1.msra.mxu0 %v2791
    %2829 = vmatprep.subr.mxu0 %v2796
    %2830 = vmatpush1.msra.mxu0 %v2795
    %2831 = vmatprep.subr.mxu0 0.0
    %2832 = vmatpush1.msra.mxu0 0.0
    %2833 = vmatprep.subr.mxu0 0.0
    %2834 = vmatpush1.msra.mxu0 0.0
    %2835 = vmatprep.subr.mxu0 0.0
    %2836 = vmatpush1.msra.mxu0 0.0
    %2837 = vmatprep.subr.mxu0 0.0
    %2838 = vmatpush1.msra.mxu0 0.0
    %2839 = vmatprep.subr.mxu0 0.0
    %2840 = vmatpush1.msra.mxu0 0.0
    %2841 = vmatprep.subr.mxu0 0.0
    %2842 = vmatpush1.msra.mxu0 0.0
    %2843 = vmatprep.subr.mxu0 0.0
    %2844 = vmatpush1.msra.mxu0 0.0
    %2845 = vmatprep.subr.mxu0 0.0
    %2846 = vmatpush1.msra.mxu0 0.0
    %2847 = vmatprep.subr.mxu0 0.0
    %2848 = vmatpush1.msra.mxu0 0.0
    %2849 = vmatprep.subr.mxu0 0.0
    %2850 = vmatpush1.msra.mxu0 0.0
    %2851 = vmatprep.subr.mxu0 0.0
    %2852 = vmatpush1.msra.mxu0 0.0
    %2853 = vmatprep.subr.mxu0 0.0
    %2854 = vmatpush1.msra.mxu0 0.0
    %2855 = vmatprep.subr.mxu0 0.0
    %2856 = vmatpush1.msra.mxu0 0.0
    %2857 = vmatprep.subr.mxu0 0.0
    %2858 = vmatpush1.msra.mxu0 0.0
    %2859 = vmatprep.subr.mxu0 0.0
    %2860 = vmatpush1.msra.mxu0 0.0
    %2861 = vmatprep.subr.mxu0 0.0
    %2862 = vmatpush1.msra.mxu0 0.0
    %2863 = vmatprep.mubr.f32.mxu0 0.0
    %2864 = vmatmul.mubr.f32.gmra.mrb[0].mxu0 0.0
    %v2865 = vpop.f32.mrb[0].mxu0
    %v2866 = vadd.f32 0.0, %v2865
    %v2867 = vpop.f32.mrb[0].mxu0
    %v2868 = vadd.f32 0.0, %v2867
    %2869 = vdwg.mxu0
    %2870 = vmatprep.subr.mxu0 %v2738
    %2871 = vmatpush1.msra.mxu0 %v2737
    %2872 = vmatprep.subr.mxu0 %v2742
    %2873 = vmatpush1.msra.mxu0 %v2741
    %2874 = vmatprep.subr.mxu0 %v2746
    %2875 = vmatpush1.msra.mxu0 %v2745
    %2876 = vmatprep.subr.mxu0 %v2750
    %2877 = vmatpush1.msra.mxu0 %v2749
    %2878 = vmatprep.subr.mxu0 %v2754
    %2879 = vmatpush1.msra.mxu0 %v2753
    %2880 = vmatprep.subr.mxu0 %v2758
    %2881 = vmatpush1.msra.mxu0 %v2757
    %2882 = vmatprep.subr.mxu0 %v2762
    %2883 = vmatpush1.msra.mxu0 %v2761
    %2884 = vmatprep.subr.mxu0 %v2766
    %2885 = vmatpush1.msra.mxu0 %v2765
    %2886 = vmatprep.subr.mxu0 %v2770
    %2887 = vmatpush1.msra.mxu0 %v2769
    %2888 = vmatprep.subr.mxu0 %v2774
    %2889 = vmatpush1.msra.mxu0 %v2773
    %2890 = vmatprep.subr.mxu0 %v2778
    %2891 = vmatpush1.msra.mxu0 %v2777
    %2892 = vmatprep.subr.mxu0 %v2782
    %2893 = vmatpush1.msra.mxu0 %v2781
    %2894 = vmatprep.subr.mxu0 %v2786
    %2895 = vmatpush1.msra.mxu0 %v2785
    %2896 = vmatprep.subr.mxu0 %v2790
    %2897 = vmatpush1.msra.mxu0 %v2789
    %2898 = vmatprep.subr.mxu0 %v2794
    %2899 = vmatpush1.msra.mxu0 %v2793
    %2900 = vmatprep.subr.mxu0 %v2798
    %2901 = vmatpush1.msra.mxu0 %v2797
    %2902 = vmatprep.subr.mxu0 0.0
    %2903 = vmatpush1.msra.mxu0 0.0
    %2904 = vmatprep.subr.mxu0 0.0
    %2905 = vmatpush1.msra.mxu0 0.0
    %2906 = vmatprep.subr.mxu0 0.0
    %2907 = vmatpush1.msra.mxu0 0.0
    %2908 = vmatprep.subr.mxu0 0.0
    %2909 = vmatpush1.msra.mxu0 0.0
    %2910 = vmatprep.subr.mxu0 0.0
    %2911 = vmatpush1.msra.mxu0 0.0
    %2912 = vmatprep.subr.mxu0 0.0
    %2913 = vmatpush1.msra.mxu0 0.0
    %2914 = vmatprep.subr.mxu0 0.0
    %2915 = vmatpush1.msra.mxu0 0.0
    %2916 = vmatprep.subr.mxu0 0.0
    %2917 = vmatpush1.msra.mxu0 0.0
    %2918 = vmatprep.subr.mxu0 0.0
    %2919 = vmatpush1.msra.mxu0 0.0
    %2920 = vmatprep.subr.mxu0 0.0
    %2921 = vmatpush1.msra.mxu0 0.0
    %2922 = vmatprep.subr.mxu0 0.0
    %2923 = vmatpush1.msra.mxu0 0.0
    %2924 = vmatprep.subr.mxu0 0.0
    %2925 = vmatpush1.msra.mxu0 0.0
    %2926 = vmatprep.subr.mxu0 0.0
    %2927 = vmatpush1.msra.mxu0 0.0
    %2928 = vmatprep.subr.mxu0 0.0
    %2929 = vmatpush1.msra.mxu0 0.0
    %2930 = vmatprep.subr.mxu0 0.0
    %2931 = vmatpush1.msra.mxu0 0.0
    %2932 = vmatprep.subr.mxu0 0.0
    %2933 = vmatpush1.msra.mxu0 0.0
    %2934 = vmatprep.mubr.f32.mxu0 0.0
    %2935 = vmatmul.mubr.f32.gmra.mrb[0].mxu0 0.0
    %v2936 = vpop.f32.mrb[0].mxu0
    %v2937 = vadd.f32 0.0, %v2936
    %v2938 = vpop.f32.mrb[0].mxu0
    %v2939 = vadd.f32 0.0, %v2938
    %2940 = vdwg.mxu0
    %v2941 = vadd.f32 %v2731, %v2866
    %v2942 = vadd.f32 %v2732, %v2868
    %v2943 = vadd.f32 %v2733, %v2937
    %v2944 = vadd.f32 %v2734, %v2939
    %v2945 = vxor.u32 %v2941, 2147483648
    %v2946 = vxor.u32 %v2942, 2147483648
    %v2947 = vxor.u32 %v2943, 2147483648
    %v2948 = vmul.f32 %v2945, 1.442695
    %v2949 = vpow.pop %v2948
    %v2950 = vmul.f32 %v2946, 1.442695
    %v2951 = vpow.pop %v2950
    %v2952 = vmul.f32 %v2947, 1.442695
    %v2953 = vpow.pop %v2952
    %v2954 = vadd.f32 %v2949, 1.0
    %v2955 = vadd.f32 %v2951, 1.0
    %v2956 = vadd.f32 %v2953, 1.0
    %v2957 = vrcp.pop %v2954
    %v2958 = vmul.f32 1.0, %v2957
    %v2959 = vrcp.pop %v2955
    %v2960 = vmul.f32 1.0, %v2959
    %v2961 = vrcp.pop %v2956
    %v2962 = vmul.f32 1.0, %v2961
    %v2963 = vtanh.pop %v2944
    %v2964 = vmul.f32 %v2960, 0.0
    %v2965 = vmul.f32 %v2958, %v2963
    %v2966 = vadd.f32 %v2964, %v2965
    %v2967 = vtanh.pop %v2966
    %v2968 = vmul.f32 %v2962, %v2967
    %2969 = vst [vmem:[#allocation4] sm:$0xff] %v2968
    %v2970 = vld [vmem:[#allocation2 + $0x20] sm:$0xff]
    %v2971 = vld [vmem:[#allocation2 + $0x28] sm:$0xff]
    %v2972 = vld [vmem:[#allocation2 + $0x30] sm:$0xff]
    %v2973 = vld [vmem:[#allocation2 + $0x38] sm:$0xff]
    %v2974 = vld [vmem:[#allocation13] sm:$0xff]
    %v2975 = vld [vmem:[#allocation13 + $0x8] sm:$0xff]
    %v2976 = vld [vmem:[#allocation13 + $0x10] sm:$0xff]
    %v2977 = vld [vmem:[#allocation13 + $0x18] sm:$0xff]
    %v2978 = vld [vmem:[#allocation13 + $0x20] sm:$0xff]
    %v2979 = vld [vmem:[#allocation13 + $0x28] sm:$0xff]
    %v2980 = vld [vmem:[#allocation13 + $0x30] sm:$0xff]
    %v2981 = vld [vmem:[#allocation13 + $0x38] sm:$0xff]
    %v2982 = vld [vmem:[#allocation13 + $0x40] sm:$0xff]
    %v2983 = vld [vmem:[#allocation13 + $0x48] sm:$0xff]
    %v2984 = vld [vmem:[#allocation13 + $0x50] sm:$0xff]
    %v2985 = vld [vmem:[#allocation13 + $0x58] sm:$0xff]
    %v2986 = vld [vmem:[#allocation13 + $0x60] sm:$0xff]
    %v2987 = vld [vmem:[#allocation13 + $0x68] sm:$0xff]
    %v2988 = vld [vmem:[#allocation13 + $0x70] sm:$0xff]
    %v2989 = vld [vmem:[#allocation13 + $0x78] sm:$0xff]
    %v2990 = vld [vmem:[#allocation13 + $0x80] sm:$0xff]
    %v2991 = vld [vmem:[#allocation13 + $0x88] sm:$0xff]
    %v2992 = vld [vmem:[#allocation13 + $0x90] sm:$0xff]
    %v2993 = vld [vmem:[#allocation13 + $0x98] sm:$0xff]
    %v2994 = vld [vmem:[#allocation13 + $0xa0] sm:$0xff]
    %v2995 = vld [vmem:[#allocation13 + $0xa8] sm:$0xff]
    %v2996 = vld [vmem:[#allocation13 + $0xb0] sm:$0xff]
    %v2997 = vld [vmem:[#allocation13 + $0xb8] sm:$0xff]
    %v2998 = vld [vmem:[#allocation13 + $0xc0] sm:$0xff]
    %v2999 = vld [vmem:[#allocation13 + $0xc8] sm:$0xff]
    %v3000 = vld [vmem:[#allocation13 + $0xd0] sm:$0xff]
    %v3001 = vld [vmem:[#allocation13 + $0xd8] sm:$0xff]
    %v3002 = vld [vmem:[#allocation13 + $0xe0] sm:$0xff]
    %v3003 = vld [vmem:[#allocation13 + $0xe8] sm:$0xff]
    %v3004 = vld [vmem:[#allocation13 + $0xf0] sm:$0xff]
    %v3005 = vld [vmem:[#allocation13 + $0xf8] sm:$0xff]
    %v3006 = vld [vmem:[#allocation13 + $0x100] sm:$0xff]
    %v3007 = vld [vmem:[#allocation13 + $0x108] sm:$0xff]
    %v3008 = vld [vmem:[#allocation13 + $0x110] sm:$0xff]
    %v3009 = vld [vmem:[#allocation13 + $0x118] sm:$0xff]
    %v3010 = vld [vmem:[#allocation13 + $0x120] sm:$0xff]
    %v3011 = vld [vmem:[#allocation13 + $0x128] sm:$0xff]
    %v3012 = vld [vmem:[#allocation13 + $0x130] sm:$0xff]
    %v3013 = vld [vmem:[#allocation13 + $0x138] sm:$0xff]
    %v3014 = vld [vmem:[#allocation13 + $0x140] sm:$0xff]
    %v3015 = vld [vmem:[#allocation13 + $0x148] sm:$0xff]
    %v3016 = vld [vmem:[#allocation13 + $0x150] sm:$0xff]
    %v3017 = vld [vmem:[#allocation13 + $0x158] sm:$0xff]
    %v3018 = vld [vmem:[#allocation13 + $0x160] sm:$0xff]
    %v3019 = vld [vmem:[#allocation13 + $0x168] sm:$0xff]
    %v3020 = vld [vmem:[#allocation13 + $0x170] sm:$0xff]
    %v3021 = vld [vmem:[#allocation13 + $0x178] sm:$0xff]
    %v3022 = vld [vmem:[#allocation13 + $0x180] sm:$0xff]
    %v3023 = vld [vmem:[#allocation13 + $0x188] sm:$0xff]
    %v3024 = vld [vmem:[#allocation13 + $0x190] sm:$0xff]
    %v3025 = vld [vmem:[#allocation13 + $0x198] sm:$0xff]
    %v3026 = vld [vmem:[#allocation13 + $0x1a0] sm:$0xff]
    %v3027 = vld [vmem:[#allocation13 + $0x1a8] sm:$0xff]
    %v3028 = vld [vmem:[#allocation13 + $0x1b0] sm:$0xff]
    %v3029 = vld [vmem:[#allocation13 + $0x1b8] sm:$0xff]
    %v3030 = vld [vmem:[#allocation13 + $0x1c0] sm:$0xff]
    %v3031 = vld [vmem:[#allocation13 + $0x1c8] sm:$0xff]
    %v3032 = vld [vmem:[#allocation13 + $0x1d0] sm:$0xff]
    %v3033 = vld [vmem:[#allocation13 + $0x1d8] sm:$0xff]
    %v3034 = vld [vmem:[#allocation13 + $0x1e0] sm:$0xff]
    %v3035 = vld [vmem:[#allocation13 + $0x1e8] sm:$0xff]
    %v3036 = vld [vmem:[#allocation13 + $0x1f0] sm:$0xff]
    %v3037 = vld [vmem:[#allocation13 + $0x1f8] sm:$0xff]
    %3038 = vmatprep.subr.mxu0 %v2975
    %3039 = vmatpush1.msra.mxu0 %v2974
    %3040 = vmatprep.subr.mxu0 %v2979
    %3041 = vmatpush1.msra.mxu0 %v2978
    %3042 = vmatprep.subr.mxu0 %v2983
    %3043 = vmatpush1.msra.mxu0 %v2982
    %3044 = vmatprep.subr.mxu0 %v2987
    %3045 = vmatpush1.msra.mxu0 %v2986
    %3046 = vmatprep.subr.mxu0 %v2991
    %3047 = vmatpush1.msra.mxu0 %v2990
    %3048 = vmatprep.subr.mxu0 %v2995
    %3049 = vmatpush1.msra.mxu0 %v2994
    %3050 = vmatprep.subr.mxu0 %v2999
    %3051 = vmatpush1.msra.mxu0 %v2998
    %3052 = vmatprep.subr.mxu0 %v3003
    %3053 = vmatpush1.msra.mxu0 %v3002
    %3054 = vmatprep.subr.mxu0 %v3007
    %3055 = vmatpush1.msra.mxu0 %v3006
    %3056 = vmatprep.subr.mxu0 %v3011
    %3057 = vmatpush1.msra.mxu0 %v3010
    %3058 = vmatprep.subr.mxu0 %v3015
    %3059 = vmatpush1.msra.mxu0 %v3014
    %3060 = vmatprep.subr.mxu0 %v3019
    %3061 = vmatpush1.msra.mxu0 %v3018
    %3062 = vmatprep.subr.mxu0 %v3023
    %3063 = vmatpush1.msra.mxu0 %v3022
    %3064 = vmatprep.subr.mxu0 %v3027
    %3065 = vmatpush1.msra.mxu0 %v3026
    %3066 = vmatprep.subr.mxu0 %v3031
    %3067 = vmatpush1.msra.mxu0 %v3030
    %3068 = vmatprep.subr.mxu0 %v3035
    %3069 = vmatpush1.msra.mxu0 %v3034
    %3070 = vmatprep.subr.mxu0 0.0
    %3071 = vmatpush1.msra.mxu0 0.0
    %3072 = vmatprep.subr.mxu0 0.0
    %3073 = vmatpush1.msra.mxu0 0.0
    %3074 = vmatprep.subr.mxu0 0.0
    %3075 = vmatpush1.msra.mxu0 0.0
    %3076 = vmatprep.subr.mxu0 0.0
    %3077 = vmatpush1.msra.mxu0 0.0
    %3078 = vmatprep.subr.mxu0 0.0
    %3079 = vmatpush1.msra.mxu0 0.0
    %3080 = vmatprep.subr.mxu0 0.0
    %3081 = vmatpush1.msra.mxu0 0.0
    %3082 = vmatprep.subr.mxu0 0.0
    %3083 = vmatpush1.msra.mxu0 0.0
    %3084 = vmatprep.subr.mxu0 0.0
    %3085 = vmatpush1.msra.mxu0 0.0
    %3086 = vmatprep.subr.mxu0 0.0
    %3087 = vmatpush1.msra.mxu0 0.0
    %3088 = vmatprep.subr.mxu0 0.0
    %3089 = vmatpush1.msra.mxu0 0.0
    %3090 = vmatprep.subr.mxu0 0.0
    %3091 = vmatpush1.msra.mxu0 0.0
    %3092 = vmatprep.subr.mxu0 0.0
    %3093 = vmatpush1.msra.mxu0 0.0
    %3094 = vmatprep.subr.mxu0 0.0
    %3095 = vmatpush1.msra.mxu0 0.0
    %3096 = vmatprep.subr.mxu0 0.0
    %3097 = vmatpush1.msra.mxu0 0.0
    %3098 = vmatprep.subr.mxu0 0.0
    %3099 = vmatpush1.msra.mxu0 0.0
    %3100 = vmatprep.subr.mxu0 0.0
    %3101 = vmatpush1.msra.mxu0 0.0
    %3102 = vmatprep.mubr.f32.mxu0 0.0
    %3103 = vmatmul.mubr.f32.gmra.mrb[0].mxu0 %v2968
    %v3104 = vpop.f32.mrb[0].mxu0
    %v3105 = vadd.f32 0.0, %v3104
    %v3106 = vpop.f32.mrb[0].mxu0
    %v3107 = vadd.f32 0.0, %v3106
    %3108 = vdwg.mxu0
    %3109 = vmatprep.subr.mxu0 %v2977
    %3110 = vmatpush1.msra.mxu0 %v2976
    %3111 = vmatprep.subr.mxu0 %v2981
    %3112 = vmatpush1.msra.mxu0 %v2980
    %3113 = vmatprep.subr.mxu0 %v2985
    %3114 = vmatpush1.msra.mxu0 %v2984
    %3115 = vmatprep.subr.mxu0 %v2989
    %3116 = vmatpush1.msra.mxu0 %v2988
    %3117 = vmatprep.subr.mxu0 %v2993
    %3118 = vmatpush1.msra.mxu0 %v2992
    %3119 = vmatprep.subr.mxu0 %v2997
    %3120 = vmatpush1.msra.mxu0 %v2996
    %3121 = vmatprep.subr.mxu0 %v3001
    %3122 = vmatpush1.msra.mxu0 %v3000
    %3123 = vmatprep.subr.mxu0 %v3005
    %3124 = vmatpush1.msra.mxu0 %v3004
    %3125 = vmatprep.subr.mxu0 %v3009
    %3126 = vmatpush1.msra.mxu0 %v3008
    %3127 = vmatprep.subr.mxu0 %v3013
    %3128 = vmatpush1.msra.mxu0 %v3012
    %3129 = vmatprep.subr.mxu0 %v3017
    %3130 = vmatpush1.msra.mxu0 %v3016
    %3131 = vmatprep.subr.mxu0 %v3021
    %3132 = vmatpush1.msra.mxu0 %v3020
    %3133 = vmatprep.subr.mxu0 %v3025
    %3134 = vmatpush1.msra.mxu0 %v3024
    %3135 = vmatprep.subr.mxu0 %v3029
    %3136 = vmatpush1.msra.mxu0 %v3028
    %3137 = vmatprep.subr.mxu0 %v3033
    %3138 = vmatpush1.msra.mxu0 %v3032
    %3139 = vmatprep.subr.mxu0 %v3037
    %3140 = vmatpush1.msra.mxu0 %v3036
    %3141 = vmatprep.subr.mxu0 0.0
    %3142 = vmatpush1.msra.mxu0 0.0
    %3143 = vmatprep.subr.mxu0 0.0
    %3144 = vmatpush1.msra.mxu0 0.0
    %3145 = vmatprep.subr.mxu0 0.0
    %3146 = vmatpush1.msra.mxu0 0.0
    %3147 = vmatprep.subr.mxu0 0.0
    %3148 = vmatpush1.msra.mxu0 0.0
    %3149 = vmatprep.subr.mxu0 0.0
    %3150 = vmatpush1.msra.mxu0 0.0
    %3151 = vmatprep.subr.mxu0 0.0
    %3152 = vmatpush1.msra.mxu0 0.0
    %3153 = vmatprep.subr.mxu0 0.0
    %3154 = vmatpush1.msra.mxu0 0.0
    %3155 = vmatprep.subr.mxu0 0.0
    %3156 = vmatpush1.msra.mxu0 0.0
    %3157 = vmatprep.subr.mxu0 0.0
    %3158 = vmatpush1.msra.mxu0 0.0
    %3159 = vmatprep.subr.mxu0 0.0
    %3160 = vmatpush1.msra.mxu0 0.0
    %3161 = vmatprep.subr.mxu0 0.0
    %3162 = vmatpush1.msra.mxu0 0.0
    %3163 = vmatprep.subr.mxu0 0.0
    %3164 = vmatpush1.msra.mxu0 0.0
    %3165 = vmatprep.subr.mxu0 0.0
    %3166 = vmatpush1.msra.mxu0 0.0
    %3167 = vmatprep.subr.mxu0 0.0
    %3168 = vmatpush1.msra.mxu0 0.0
    %3169 = vmatprep.subr.mxu0 0.0
    %3170 = vmatpush1.msra.mxu0 0.0
    %3171 = vmatprep.subr.mxu0 0.0
    %3172 = vmatpush1.msra.mxu0 0.0
    %3173 = vmatprep.mubr.f32.mxu0 0.0
    %3174 = vmatmul.mubr.f32.gmra.mrb[0].mxu0 %v2968
    %v3175 = vpop.f32.mrb[0].mxu0
    %v3176 = vadd.f32 0.0, %v3175
    %v3177 = vpop.f32.mrb[0].mxu0
    %v3178 = vadd.f32 0.0, %v3177
    %3179 = vdwg.mxu0
    %v3180 = vadd.f32 %v2970, %v3105
    %v3181 = vadd.f32 %v2971, %v3107
    %v3182 = vadd.f32 %v2972, %v3176
    %v3183 = vadd.f32 %v2973, %v3178
    %v3184 = vxor.u32 %v3180, 2147483648
    %v3185 = vxor.u32 %v3181, 2147483648
    %v3186 = vxor.u32 %v3182, 2147483648
    %v3187 = vmul.f32 %v3184, 1.442695
    %v3188 = vpow.pop %v3187
    %v3189 = vmul.f32 %v3185, 1.442695
    %v3190 = vpow.pop %v3189
    %v3191 = vmul.f32 %v3186, 1.442695
    %v3192 = vpow.pop %v3191
    %v3193 = vadd.f32 %v3188, 1.0
    %v3194 = vadd.f32 %v3190, 1.0
    %v3195 = vadd.f32 %v3192, 1.0
    %v3196 = vrcp.pop %v3193
    %v3197 = vmul.f32 1.0, %v3196
    %v3198 = vrcp.pop %v3194
    %v3199 = vmul.f32 1.0, %v3198
    %v3200 = vrcp.pop %v3195
    %v3201 = vmul.f32 1.0, %v3200
    %v3202 = vtanh.pop %v3183
    %v3203 = vmul.f32 %v3199, %v2966
    %v3204 = vmul.f32 %v3197, %v3202
    %v3205 = vadd.f32 %v3203, %v3204
    %v3206 = vtanh.pop %v3205
    %v3207 = vmul.f32 %v3201, %v3206
    %3208 = vst [vmem:[#allocation4 + $0x8] sm:$0xff] %v3207
    %v3209 = vld [vmem:[#allocation2 + $0x40] sm:$0xff]
    %v3210 = vld [vmem:[#allocation2 + $0x48] sm:$0xff]
    %v3211 = vld [vmem:[#allocation2 + $0x50] sm:$0xff]
    %v3212 = vld [vmem:[#allocation2 + $0x58] sm:$0xff]
    %v3213 = vld [vmem:[#allocation13] sm:$0xff]
    %v3214 = vld [vmem:[#allocation13 + $0x8] sm:$0xff]
    %v3215 = vld [vmem:[#allocation13 + $0x10] sm:$0xff]
    %v3216 = vld [vmem:[#allocation13 + $0x18] sm:$0xff]
    %v3217 = vld [vmem:[#allocation13 + $0x20] sm:$0xff]
    %v3218 = vld [vmem:[#allocation13 + $0x28] sm:$0xff]
    %v3219 = vld [vmem:[#allocation13 + $0x30] sm:$0xff]
    %v3220 = vld [vmem:[#allocation13 + $0x38] sm:$0xff]
    %v3221 = vld [vmem:[#allocation13 + $0x40] sm:$0xff]
    %v3222 = vld [vmem:[#allocation13 + $0x48] sm:$0xff]
    %v3223 = vld [vmem:[#allocation13 + $0x50] sm:$0xff]
    %v3224 = vld [vmem:[#allocation13 + $0x58] sm:$0xff]
    %v3225 = vld [vmem:[#allocation13 + $0x60] sm:$0xff]
    %v3226 = vld [vmem:[#allocation13 + $0x68] sm:$0xff]
    %v3227 = vld [vmem:[#allocation13 + $0x70] sm:$0xff]
    %v3228 = vld [vmem:[#allocation13 + $0x78] sm:$0xff]
    %v3229 = vld [vmem:[#allocation13 + $0x80] sm:$0xff]
    %v3230 = vld [vmem:[#allocation13 + $0x88] sm:$0xff]
    %v3231 = vld [vmem:[#allocation13 + $0x90] sm:$0xff]
    %v3232 = vld [vmem:[#allocation13 + $0x98] sm:$0xff]
    %v3233 = vld [vmem:[#allocation13 + $0xa0] sm:$0xff]
    %v3234 = vld [vmem:[#allocation13 + $0xa8] sm:$0xff]
    %v3235 = vld [vmem:[#allocation13 + $0xb0] sm:$0xff]
    %v3236 = vld [vmem:[#allocation13 + $0xb8] sm:$0xff]
    %v3237 = vld [vmem:[#allocation13 + $0xc0] sm:$0xff]
    %v3238 = vld [vmem:[#allocation13 + $0xc8] sm:$0xff]
    %v3239 = vld [vmem:[#allocation13 + $0xd0] sm:$0xff]
    %v3240 = vld [vmem:[#allocation13 + $0xd8] sm:$0xff]
    %v3241 = vld [vmem:[#allocation13 + $0xe0] sm:$0xff]
    %v3242 = vld [vmem:[#allocation13 + $0xe8] sm:$0xff]
    %v3243 = vld [vmem:[#allocation13 + $0xf0] sm:$0xff]
    %v3244 = vld [vmem:[#allocation13 + $0xf8] sm:$0xff]
    %v3245 = vld [vmem:[#allocation13 + $0x100] sm:$0xff]
    %v3246 = vld [vmem:[#allocation13 + $0x108] sm:$0xff]
    %v3247 = vld [vmem:[#allocation13 + $0x110] sm:$0xff]
    %v3248 = vld [vmem:[#allocation13 + $0x118] sm:$0xff]
    %v3249 = vld [vmem:[#allocation13 + $0x120] sm:$0xff]
    %v3250 = vld [vmem:[#allocation13 + $0x128] sm:$0xff]
    %v3251 = vld [vmem:[#allocation13 + $0x130] sm:$0xff]
    %v3252 = vld [vmem:[#allocation13 + $0x138] sm:$0xff]
    %v3253 = vld [vmem:[#allocation13 + $0x140] sm:$0xff]
    %v3254 = vld [vmem:[#allocation13 + $0x148] sm:$0xff]
    %v3255 = vld [vmem:[#allocation13 + $0x150] sm:$0xff]
    %v3256 = vld [vmem:[#allocation13 + $0x158] sm:$0xff]
    %v3257 = vld [vmem:[#allocation13 + $0x160] sm:$0xff]
    %v3258 = vld [vmem:[#allocation13 + $0x168] sm:$0xff]
    %v3259 = vld [vmem:[#allocation13 + $0x170] sm:$0xff]
    %v3260 = vld [vmem:[#allocation13 + $0x178] sm:$0xff]
    %v3261 = vld [vmem:[#allocation13 + $0x180] sm:$0xff]
    %v3262 = vld [vmem:[#allocation13 + $0x188] sm:$0xff]
    %v3263 = vld [vmem:[#allocation13 + $0x190] sm:$0xff]
    %v3264 = vld [vmem:[#allocation13 + $0x198] sm:$0xff]
    %v3265 = vld [vmem:[#allocation13 + $0x1a0] sm:$0xff]
    %v3266 = vld [vmem:[#allocation13 + $0x1a8] sm:$0xff]
    %v3267 = vld [vmem:[#allocation13 + $0x1b0] sm:$0xff]
    %v3268 = vld [vmem:[#allocation13 + $0x1b8] sm:$0xff]
    %v3269 = vld [vmem:[#allocation13 + $0x1c0] sm:$0xff]
    %v3270 = vld [vmem:[#allocation13 + $0x1c8] sm:$0xff]
    %v3271 = vld [vmem:[#allocation13 + $0x1d0] sm:$0xff]
    %v3272 = vld [vmem:[#allocation13 + $0x1d8] sm:$0xff]
    %v3273 = vld [vmem:[#allocation13 + $0x1e0] sm:$0xff]
    %v3274 = vld [vmem:[#allocation13 + $0x1e8] sm:$0xff]
    %v3275 = vld [vmem:[#allocation13 + $0x1f0] sm:$0xff]
    %v3276 = vld [vmem:[#allocation13 + $0x1f8] sm:$0xff]
    %3277 = vmatprep.subr.mxu0 %v3214
    %3278 = vmatpush1.msra.mxu0 %v3213
    %3279 = vmatprep.subr.mxu0 %v3218
    %3280 = vmatpush1.msra.mxu0 %v3217
    %3281 = vmatprep.subr.mxu0 %v3222
    %3282 = vmatpush1.msra.mxu0 %v3221
    %3283 = vmatprep.subr.mxu0 %v3226
    %3284 = vmatpush1.msra.mxu0 %v3225
    %3285 = vmatprep.subr.mxu0 %v3230
    %3286 = vmatpush1.msra.mxu0 %v3229
    %3287 = vmatprep.subr.mxu0 %v3234
    %3288 = vmatpush1.msra.mxu0 %v3233
    %3289 = vmatprep.subr.mxu0 %v3238
    %3290 = vmatpush1.msra.mxu0 %v3237
    %3291 = vmatprep.subr.mxu0 %v3242
    %3292 = vmatpush1.msra.mxu0 %v3241
    %3293 = vmatprep.subr.mxu0 %v3246
    %3294 = vmatpush1.msra.mxu0 %v3245
    %3295 = vmatprep.subr.mxu0 %v3250
    %3296 = vmatpush1.msra.mxu0 %v3249
    %3297 = vmatprep.subr.mxu0 %v3254
    %3298 = vmatpush1.msra.mxu0 %v3253
    %3299 = vmatprep.subr.mxu0 %v3258
    %3300 = vmatpush1.msra.mxu0 %v3257
    %3301 = vmatprep.subr.mxu0 %v3262
    %3302 = vmatpush1.msra.mxu0 %v3261
    %3303 = vmatprep.subr.mxu0 %v3266
    %3304 = vmatpush1.msra.mxu0 %v3265
    %3305 = vmatprep.subr.mxu0 %v3270
    %3306 = vmatpush1.msra.mxu0 %v3269
    %3307 = vmatprep.subr.mxu0 %v3274
    %3308 = vmatpush1.msra.mxu0 %v3273
    %3309 = vmatprep.subr.mxu0 0.0
    %3310 = vmatpush1.msra.mxu0 0.0
    %3311 = vmatprep.subr.mxu0 0.0
    %3312 = vmatpush1.msra.mxu0 0.0
    %3313 = vmatprep.subr.mxu0 0.0
    %3314 = vmatpush1.msra.mxu0 0.0
    %3315 = vmatprep.subr.mxu0 0.0
    %3316 = vmatpush1.msra.mxu0 0.0
    %3317 = vmatprep.subr.mxu0 0.0
    %3318 = vmatpush1.msra.mxu0 0.0
    %3319 = vmatprep.subr.mxu0 0.0
    %3320 = vmatpush1.msra.mxu0 0.0
    %3321 = vmatprep.subr.mxu0 0.0
    %3322 = vmatpush1.msra.mxu0 0.0
    %3323 = vmatprep.subr.mxu0 0.0
    %3324 = vmatpush1.msra.mxu0 0.0
    %3325 = vmatprep.subr.mxu0 0.0
    %3326 = vmatpush1.msra.mxu0 0.0
    %3327 = vmatprep.subr.mxu0 0.0
    %3328 = vmatpush1.msra.mxu0 0.0
    %3329 = vmatprep.subr.mxu0 0.0
    %3330 = vmatpush1.msra.mxu0 0.0
    %3331 = vmatprep.subr.mxu0 0.0
    %3332 = vmatpush1.msra.mxu0 0.0
    %3333 = vmatprep.subr.mxu0 0.0
    %3334 = vmatpush1.msra.mxu0 0.0
    %3335 = vmatprep.subr.mxu0 0.0
    %3336 = vmatpush1.msra.mxu0 0.0
    %3337 = vmatprep.subr.mxu0 0.0
    %3338 = vmatpush1.msra.mxu0 0.0
    %3339 = vmatprep.subr.mxu0 0.0
    %3340 = vmatpush1.msra.mxu0 0.0
    %3341 = vmatprep.mubr.f32.mxu0 0.0
    %3342 = vmatmul.mubr.f32.gmra.mrb[0].mxu0 %v3207
    %v3343 = vpop.f32.mrb[0].mxu0
    %v3344 = vadd.f32 0.0, %v3343
    %v3345 = vpop.f32.mrb[0].mxu0
    %v3346 = vadd.f32 0.0, %v3345
    %3347 = vdwg.mxu0
    %3348 = vmatprep.subr.mxu0 %v3216
    %3349 = vmatpush1.msra.mxu0 %v3215
    %3350 = vmatprep.subr.mxu0 %v3220
    %3351 = vmatpush1.msra.mxu0 %v3219
    %3352 = vmatprep.subr.mxu0 %v3224
    %3353 = vmatpush1.msra.mxu0 %v3223
    %3354 = vmatprep.subr.mxu0 %v3228
    %3355 = vmatpush1.msra.mxu0 %v3227
    %3356 = vmatprep.subr.mxu0 %v3232
    %3357 = vmatpush1.msra.mxu0 %v3231
    %3358 = vmatprep.subr.mxu0 %v3236
    %3359 = vmatpush1.msra.mxu0 %v3235
    %3360 = vmatprep.subr.mxu0 %v3240
    %3361 = vmatpush1.msra.mxu0 %v3239
    %3362 = vmatprep.subr.mxu0 %v3244
    %3363 = vmatpush1.msra.mxu0 %v3243
    %3364 = vmatprep.subr.mxu0 %v3248
    %3365 = vmatpush1.msra.mxu0 %v3247
    %3366 = vmatprep.subr.mxu0 %v3252
    %3367 = vmatpush1.msra.mxu0 %v3251
    %3368 = vmatprep.subr.mxu0 %v3256
    %3369 = vmatpush1.msra.mxu0 %v3255
    %3370 = vmatprep.subr.mxu0 %v3260
    %3371 = vmatpush1.msra.mxu0 %v3259
    %3372 = vmatprep.subr.mxu0 %v3264
    %3373 = vmatpush1.msra.mxu0 %v3263
    %3374 = vmatprep.subr.mxu0 %v3268
    %3375 = vmatpush1.msra.mxu0 %v3267
    %3376 = vmatprep.subr.mxu0 %v3272
    %3377 = vmatpush1.msra.mxu0 %v3271
    %3378 = vmatprep.subr.mxu0 %v3276
    %3379 = vmatpush1.msra.mxu0 %v3275
    %3380 = vmatprep.subr.mxu0 0.0
    %3381 = vmatpush1.msra.mxu0 0.0
    %3382 = vmatprep.subr.mxu0 0.0
    %3383 = vmatpush1.msra.mxu0 0.0
    %3384 = vmatprep.subr.mxu0 0.0
    %3385 = vmatpush1.msra.mxu0 0.0
    %3386 = vmatprep.subr.mxu0 0.0
    %3387 = vmatpush1.msra.mxu0 0.0
    %3388 = vmatprep.subr.mxu0 0.0
    %3389 = vmatpush1.msra.mxu0 0.0
    %3390 = vmatprep.subr.mxu0 0.0
    %3391 = vmatpush1.msra.mxu0 0.0
    %3392 = vmatprep.subr.mxu0 0.0
    %3393 = vmatpush1.msra.mxu0 0.0
    %3394 = vmatprep.subr.mxu0 0.0
    %3395 = vmatpush1.msra.mxu0 0.0
    %3396 = vmatprep.subr.mxu0 0.0
    %3397 = vmatpush1.msra.mxu0 0.0
    %3398 = vmatprep.subr.mxu0 0.0
    %3399 = vmatpush1.msra.mxu0 0.0
    %3400 = vmatprep.subr.mxu0 0.0
    %3401 = vmatpush1.msra.mxu0 0.0
    %3402 = vmatprep.subr.mxu0 0.0
    %3403 = vmatpush1.msra.mxu0 0.0
    %3404 = vmatprep.subr.mxu0 0.0
    %3405 = vmatpush1.msra.mxu0 0.0
    %3406 = vmatprep.subr.mxu0 0.0
    %3407 = vmatpush1.msra.mxu0 0.0
    %3408 = vmatprep.subr.mxu0 0.0
    %3409 = vmatpush1.msra.mxu0 0.0
    %3410 = vmatprep.subr.mxu0 0.0
    %3411 = vmatpush1.msra.mxu0 0.0
    %3412 = vmatprep.mubr.f32.mxu0 0.0
    %3413 = vmatmul.mubr.f32.gmra.mrb[0].mxu0 %v3207
    %v3414 = vpop.f32.mrb[0].mxu0
    %v3415 = vadd.f32 0.0, %v3414
    %v3416 = vpop.f32.mrb[0].mxu0
    %v3417 = vadd.f32 0.0, %v3416
    %3418 = vdwg.mxu0
    %v3419 = vadd.f32 %v3209, %v3344
    %v3420 = vadd.f32 %v3210, %v3346
    %v3421 = vadd.f32 %v3211, %v3415
    %v3422 = vadd.f32 %v3212, %v3417
    %v3423 = vxor.u32 %v3419, 2147483648
    %v3424 = vxor.u32 %v3420, 2147483648
    %v3425 = vxor.u32 %v3421, 2147483648
    %v3426 = vmul.f32 %v3423, 1.442695
    %v3427 = vpow.pop %v3426
    %v3428 = vmul.f32 %v3424, 1.442695
    %v3429 = vpow.pop %v3428
    %v3430 = vmul.f32 %v3425, 1.442695
    %v3431 = vpow.pop %v3430
    %v3432 = vadd.f32 %v3427, 1.0
    %v3433 = vadd.f32 %v3429, 1.0
    %v3434 = vadd.f32 %v3431, 1.0
    %v3435 = vrcp.pop %v3432
    %v3436 = vmul.f32 1.0, %v3435
    %v3437 = vrcp.pop %v3433
    %v3438 = vmul.f32 1.0, %v3437
    %v3439 = vrcp.pop %v3434
    %v3440 = vmul.f32 1.0, %v3439
    %v3441 = vtanh.pop %v3422
    %v3442 = vmul.f32 %v3438, %v3205
    %v3443 = vmul.f32 %v3436, %v3441
    %v3444 = vadd.f32 %v3442, %v3443
    %v3445 = vtanh.pop %v3444
    %v3446 = vmul.f32 %v3440, %v3445
    %3447 = vst [vmem:[#allocation4 + $0x10] sm:$0xff] %v3446
    %v3448 = vld [vmem:[#allocation2 + $0x60] sm:$0xff]
    %v3449 = vld [vmem:[#allocation2 + $0x68] sm:$0xff]
    %v3450 = vld [vmem:[#allocation2 + $0x70] sm:$0xff]
    %v3451 = vld [vmem:[#allocation2 + $0x78] sm:$0xff]
    %v3452 = vld [vmem:[#allocation13] sm:$0xff]
    %v3453 = vld [vmem:[#allocation13 + $0x8] sm:$0xff]
    %v3454 = vld [vmem:[#allocation13 + $0x10] sm:$0xff]
    %v3455 = vld [vmem:[#allocation13 + $0x18] sm:$0xff]
    %v3456 = vld [vmem:[#allocation13 + $0x20] sm:$0xff]
    %v3457 = vld [vmem:[#allocation13 + $0x28] sm:$0xff]
    %v3458 = vld [vmem:[#allocation13 + $0x30] sm:$0xff]
    %v3459 = vld [vmem:[#allocation13 + $0x38] sm:$0xff]
    %v3460 = vld [vmem:[#allocation13 + $0x40] sm:$0xff]
    %v3461 = vld [vmem:[#allocation13 + $0x48] sm:$0xff]
    %v3462 = vld [vmem:[#allocation13 + $0x50] sm:$0xff]
    %v3463 = vld [vmem:[#allocation13 + $0x58] sm:$0xff]
    %v3464 = vld [vmem:[#allocation13 + $0x60] sm:$0xff]
    %v3465 = vld [vmem:[#allocation13 + $0x68] sm:$0xff]
    %v3466 = vld [vmem:[#allocation13 + $0x70] sm:$0xff]
    %v3467 = vld [vmem:[#allocation13 + $0x78] sm:$0xff]
    %v3468 = vld [vmem:[#allocation13 + $0x80] sm:$0xff]
    %v3469 = vld [vmem:[#allocation13 + $0x88] sm:$0xff]
    %v3470 = vld [vmem:[#allocation13 + $0x90] sm:$0xff]
    %v3471 = vld [vmem:[#allocation13 + $0x98] sm:$0xff]
    %v3472 = vld [vmem:[#allocation13 + $0xa0] sm:$0xff]
    %v3473 = vld [vmem:[#allocation13 + $0xa8] sm:$0xff]
    %v3474 = vld [vmem:[#allocation13 + $0xb0] sm:$0xff]
    %v3475 = vld [vmem:[#allocation13 + $0xb8] sm:$0xff]
    %v3476 = vld [vmem:[#allocation13 + $0xc0] sm:$0xff]
    %v3477 = vld [vmem:[#allocation13 + $0xc8] sm:$0xff]
    %v3478 = vld [vmem:[#allocation13 + $0xd0] sm:$0xff]
    %v3479 = vld [vmem:[#allocation13 + $0xd8] sm:$0xff]
    %v3480 = vld [vmem:[#allocation13 + $0xe0] sm:$0xff]
    %v3481 = vld [vmem:[#allocation13 + $0xe8] sm:$0xff]
    %v3482 = vld [vmem:[#allocation13 + $0xf0] sm:$0xff]
    %v3483 = vld [vmem:[#allocation13 + $0xf8] sm:$0xff]
    %v3484 = vld [vmem:[#allocation13 + $0x100] sm:$0xff]
    %v3485 = vld [vmem:[#allocation13 + $0x108] sm:$0xff]
    %v3486 = vld [vmem:[#allocation13 + $0x110] sm:$0xff]
    %v3487 = vld [vmem:[#allocation13 + $0x118] sm:$0xff]
    %v3488 = vld [vmem:[#allocation13 + $0x120] sm:$0xff]
    %v3489 = vld [vmem:[#allocation13 + $0x128] sm:$0xff]
    %v3490 = vld [vmem:[#allocation13 + $0x130] sm:$0xff]
    %v3491 = vld [vmem:[#allocation13 + $0x138] sm:$0xff]
    %v3492 = vld [vmem:[#allocation13 + $0x140] sm:$0xff]
    %v3493 = vld [vmem:[#allocation13 + $0x148] sm:$0xff]
    %v3494 = vld [vmem:[#allocation13 + $0x150] sm:$0xff]
    %v3495 = vld [vmem:[#allocation13 + $0x158] sm:$0xff]
    %v3496 = vld [vmem:[#allocation13 + $0x160] sm:$0xff]
    %v3497 = vld [vmem:[#allocation13 + $0x168] sm:$0xff]
    %v3498 = vld [vmem:[#allocation13 + $0x170] sm:$0xff]
    %v3499 = vld [vmem:[#allocation13 + $0x178] sm:$0xff]
    %v3500 = vld [vmem:[#allocation13 + $0x180] sm:$0xff]
    %v3501 = vld [vmem:[#allocation13 + $0x188] sm:$0xff]
    %v3502 = vld [vmem:[#allocation13 + $0x190] sm:$0xff]
    %v3503 = vld [vmem:[#allocation13 + $0x198] sm:$0xff]
    %v3504 = vld [vmem:[#allocation13 + $0x1a0] sm:$0xff]
    %v3505 = vld [vmem:[#allocation13 + $0x1a8] sm:$0xff]
    %v3506 = vld [vmem:[#allocation13 + $0x1b0] sm:$0xff]
    %v3507 = vld [vmem:[#allocation13 + $0x1b8] sm:$0xff]
    %v3508 = vld [vmem:[#allocation13 + $0x1c0] sm:$0xff]
    %v3509 = vld [vmem:[#allocation13 + $0x1c8] sm:$0xff]
    %v3510 = vld [vmem:[#allocation13 + $0x1d0] sm:$0xff]
    %v3511 = vld [vmem:[#allocation13 + $0x1d8] sm:$0xff]
    %v3512 = vld [vmem:[#allocation13 + $0x1e0] sm:$0xff]
    %v3513 = vld [vmem:[#allocation13 + $0x1e8] sm:$0xff]
    %v3514 = vld [vmem:[#allocation13 + $0x1f0] sm:$0xff]
    %v3515 = vld [vmem:[#allocation13 + $0x1f8] sm:$0xff]
    %3516 = vmatprep.subr.mxu0 %v3453
    %3517 = vmatpush1.msra.mxu0 %v3452
    %3518 = vmatprep.subr.mxu0 %v3457
    %3519 = vmatpush1.msra.mxu0 %v3456
    %3520 = vmatprep.subr.mxu0 %v3461
    %3521 = vmatpush1.msra.mxu0 %v3460
    %3522 = vmatprep.subr.mxu0 %v3465
    %3523 = vmatpush1.msra.mxu0 %v3464
    %3524 = vmatprep.subr.mxu0 %v3469
    %3525 = vmatpush1.msra.mxu0 %v3468
    %3526 = vmatprep.subr.mxu0 %v3473
    %3527 = vmatpush1.msra.mxu0 %v3472
    %3528 = vmatprep.subr.mxu0 %v3477
    %3529 = vmatpush1.msra.mxu0 %v3476
    %3530 = vmatprep.subr.mxu0 %v3481
    %3531 = vmatpush1.msra.mxu0 %v3480
    %3532 = vmatprep.subr.mxu0 %v3485
    %3533 = vmatpush1.msra.mxu0 %v3484
    %3534 = vmatprep.subr.mxu0 %v3489
    %3535 = vmatpush1.msra.mxu0 %v3488
    %3536 = vmatprep.subr.mxu0 %v3493
    %3537 = vmatpush1.msra.mxu0 %v3492
    %3538 = vmatprep.subr.mxu0 %v3497
    %3539 = vmatpush1.msra.mxu0 %v3496
    %3540 = vmatprep.subr.mxu0 %v3501
    %3541 = vmatpush1.msra.mxu0 %v3500
    %3542 = vmatprep.subr.mxu0 %v3505
    %3543 = vmatpush1.msra.mxu0 %v3504
    %3544 = vmatprep.subr.mxu0 %v3509
    %3545 = vmatpush1.msra.mxu0 %v3508
    %3546 = vmatprep.subr.mxu0 %v3513
    %3547 = vmatpush1.msra.mxu0 %v3512
    %3548 = vmatprep.subr.mxu0 0.0
    %3549 = vmatpush1.msra.mxu0 0.0
    %3550 = vmatprep.subr.mxu0 0.0
    %3551 = vmatpush1.msra.mxu0 0.0
    %3552 = vmatprep.subr.mxu0 0.0
    %3553 = vmatpush1.msra.mxu0 0.0
    %3554 = vmatprep.subr.mxu0 0.0
    %3555 = vmatpush1.msra.mxu0 0.0
    %3556 = vmatprep.subr.mxu0 0.0
    %3557 = vmatpush1.msra.mxu0 0.0
    %3558 = vmatprep.subr.mxu0 0.0
    %3559 = vmatpush1.msra.mxu0 0.0
    %3560 = vmatprep.subr.mxu0 0.0
    %3561 = vmatpush1.msra.mxu0 0.0
    %3562 = vmatprep.subr.mxu0 0.0
    %3563 = vmatpush1.msra.mxu0 0.0
    %3564 = vmatprep.subr.mxu0 0.0
    %3565 = vmatpush1.msra.mxu0 0.0
    %3566 = vmatprep.subr.mxu0 0.0
    %3567 = vmatpush1.msra.mxu0 0.0
    %3568 = vmatprep.subr.mxu0 0.0
    %3569 = vmatpush1.msra.mxu0 0.0
    %3570 = vmatprep.subr.mxu0 0.0
    %3571 = vmatpush1.msra.mxu0 0.0
    %3572 = vmatprep.subr.mxu0 0.0
    %3573 = vmatpush1.msra.mxu0 0.0
    %3574 = vmatprep.subr.mxu0 0.0
    %3575 = vmatpush1.msra.mxu0 0.0
    %3576 = vmatprep.subr.mxu0 0.0
    %3577 = vmatpush1.msra.mxu0 0.0
    %3578 = vmatprep.subr.mxu0 0.0
    %3579 = vmatpush1.msra.mxu0 0.0
    %3580 = vmatprep.mubr.f32.mxu0 0.0
    %3581 = vmatmul.mubr.f32.gmra.mrb[0].mxu0 %v3446
    %v3582 = vpop.f32.mrb[0].mxu0
    %v3583 = vadd.f32 0.0, %v3582
    %v3584 = vpop.f32.mrb[0].mxu0
    %v3585 = vadd.f32 0.0, %v3584
    %3586 = vdwg.mxu0
    %3587 = vmatprep.subr.mxu0 %v3455
    %3588 = vmatpush1.msra.mxu0 %v3454
    %3589 = vmatprep.subr.mxu0 %v3459
    %3590 = vmatpush1.msra.mxu0 %v3458
    %3591 = vmatprep.subr.mxu0 %v3463
    %3592 = vmatpush1.msra.mxu0 %v3462
    %3593 = vmatprep.subr.mxu0 %v3467
    %3594 = vmatpush1.msra.mxu0 %v3466
    %3595 = vmatprep.subr.mxu0 %v3471
    %3596 = vmatpush1.msra.mxu0 %v3470
    %3597 = vmatprep.subr.mxu0 %v3475
    %3598 = vmatpush1.msra.mxu0 %v3474
    %3599 = vmatprep.subr.mxu0 %v3479
    %3600 = vmatpush1.msra.mxu0 %v3478
    %3601 = vmatprep.subr.mxu0 %v3483
    %3602 = vmatpush1.msra.mxu0 %v3482
    %3603 = vmatprep.subr.mxu0 %v3487
    %3604 = vmatpush1.msra.mxu0 %v3486
    %3605 = vmatprep.subr.mxu0 %v3491
    %3606 = vmatpush1.msra.mxu0 %v3490
    %3607 = vmatprep.subr.mxu0 %v3495
    %3608 = vmatpush1.msra.mxu0 %v3494
    %3609 = vmatprep.subr.mxu0 %v3499
    %3610 = vmatpush1.msra.mxu0 %v3498
    %3611 = vmatprep.subr.mxu0 %v3503
    %3612 = vmatpush1.msra.mxu0 %v3502
    %3613 = vmatprep.subr.mxu0 %v3507
    %3614 = vmatpush1.msra.mxu0 %v3506
    %3615 = vmatprep.subr.mxu0 %v3511
    %3616 = vmatpush1.msra.mxu0 %v3510
    %3617 = vmatprep.subr.mxu0 %v3515
    %3618 = vmatpush1.msra.mxu0 %v3514
    %3619 = vmatprep.subr.mxu0 0.0
    %3620 = vmatpush1.msra.mxu0 0.0
    %3621 = vmatprep.subr.mxu0 0.0
    %3622 = vmatpush1.msra.mxu0 0.0
    %3623 = vmatprep.subr.mxu0 0.0
    %3624 = vmatpush1.msra.mxu0 0.0
    %3625 = vmatprep.subr.mxu0 0.0
    %3626 = vmatpush1.msra.mxu0 0.0
    %3627 = vmatprep.subr.mxu0 0.0
    %3628 = vmatpush1.msra.mxu0 0.0
    %3629 = vmatprep.subr.mxu0 0.0
    %3630 = vmatpush1.msra.mxu0 0.0
    %3631 = vmatprep.subr.mxu0 0.0
    %3632 = vmatpush1.msra.mxu0 0.0
    %3633 = vmatprep.subr.mxu0 0.0
    %3634 = vmatpush1.msra.mxu0 0.0
    %3635 = vmatprep.subr.mxu0 0.0
    %3636 = vmatpush1.msra.mxu0 0.0
    %3637 = vmatprep.subr.mxu0 0.0
    %3638 = vmatpush1.msra.mxu0 0.0
    %3639 = vmatprep.subr.mxu0 0.0
    %3640 = vmatpush1.msra.mxu0 0.0
    %3641 = vmatprep.subr.mxu0 0.0
    %3642 = vmatpush1.msra.mxu0 0.0
    %3643 = vmatprep.subr.mxu0 0.0
    %3644 = vmatpush1.msra.mxu0 0.0
    %3645 = vmatprep.subr.mxu0 0.0
    %3646 = vmatpush1.msra.mxu0 0.0
    %3647 = vmatprep.subr.mxu0 0.0
    %3648 = vmatpush1.msra.mxu0 0.0
    %3649 = vmatprep.subr.mxu0 0.0
    %3650 = vmatpush1.msra.mxu0 0.0
    %3651 = vmatprep.mubr.f32.mxu0 0.0
    %3652 = vmatmul.mubr.f32.gmra.mrb[0].mxu0 %v3446
    %v3653 = vpop.f32.mrb[0].mxu0
    %v3654 = vadd.f32 0.0, %v3653
    %v3655 = vpop.f32.mrb[0].mxu0
    %v3656 = vadd.f32 0.0, %v3655
    %3657 = vdwg.mxu0
    %v3658 = vadd.f32 %v3448, %v3583
    %v3659 = vadd.f32 %v3449, %v3585
    %v3660 = vadd.f32 %v3450, %v3654
    %v3661 = vadd.f32 %v3451, %v3656
    %v3662 = vxor.u32 %v3658, 2147483648
    %v3663 = vxor.u32 %v3659, 2147483648
    %v3664 = vxor.u32 %v3660, 2147483648
    %v3665 = vmul.f32 %v3662, 1.442695
    %v3666 = vpow.pop %v3665
    %v3667 = vmul.f32 %v3663, 1.442695
    %v3668 = vpow.pop %v3667
    %v3669 = vmul.f32 %v3664, 1.442695
    %v3670 = vpow.pop %v3669
    %v3671 = vadd.f32 %v3666, 1.0
    %v3672 = vadd.f32 %v3668, 1.0
    %v3673 = vadd.f32 %v3670, 1.0
    %v3674 = vrcp.pop %v3671
    %v3675 = vmul.f32 1.0, %v3674
    %v3676 = vrcp.pop %v3672
    %v3677 = vmul.f32 1.0, %v3676
    %v3678 = vrcp.pop %v3673
    %v3679 = vmul.f32 1.0, %v3678
    %v3680 = vtanh.pop %v3661
    %v3681 = vmul.f32 %v3677, %v3444
    %v3682 = vmul.f32 %v3675, %v3680
    %v3683 = vadd.f32 %v3681, %v3682
    %v3684 = vtanh.pop %v3683
    %v3685 = vmul.f32 %v3679, %v3684
    %3686 = vst [vmem:[#allocation4 + $0x18] sm:$0xff] %v3685
    %v3687 = vld [vmem:[#allocation2 + $0x80] sm:$0xff]
    %v3688 = vld [vmem:[#allocation2 + $0x88] sm:$0xff]
    %v3689 = vld [vmem:[#allocation2 + $0x90] sm:$0xff]
    %v3690 = vld [vmem:[#allocation2 + $0x98] sm:$0xff]
    %v3691 = vld [vmem:[#allocation13] sm:$0xff]
    %v3692 = vld [vmem:[#allocation13 + $0x8] sm:$0xff]
    %v3693 = vld [vmem:[#allocation13 + $0x10] sm:$0xff]
    %v3694 = vld [vmem:[#allocation13 + $0x18] sm:$0xff]
    %v3695 = vld [vmem:[#allocation13 + $0x20] sm:$0xff]
    %v3696 = vld [vmem:[#allocation13 + $0x28] sm:$0xff]
    %v3697 = vld [vmem:[#allocation13 + $0x30] sm:$0xff]
    %v3698 = vld [vmem:[#allocation13 + $0x38] sm:$0xff]
    %v3699 = vld [vmem:[#allocation13 + $0x40] sm:$0xff]
    %v3700 = vld [vmem:[#allocation13 + $0x48] sm:$0xff]
    %v3701 = vld [vmem:[#allocation13 + $0x50] sm:$0xff]
    %v3702 = vld [vmem:[#allocation13 + $0x58] sm:$0xff]
    %v3703 = vld [vmem:[#allocation13 + $0x60] sm:$0xff]
    %v3704 = vld [vmem:[#allocation13 + $0x68] sm:$0xff]
    %v3705 = vld [vmem:[#allocation13 + $0x70] sm:$0xff]
    %v3706 = vld [vmem:[#allocation13 + $0x78] sm:$0xff]
    %v3707 = vld [vmem:[#allocation13 + $0x80] sm:$0xff]
    %v3708 = vld [vmem:[#allocation13 + $0x88] sm:$0xff]
    %v3709 = vld [vmem:[#allocation13 + $0x90] sm:$0xff]
    %v3710 = vld [vmem:[#allocation13 + $0x98] sm:$0xff]
    %v3711 = vld [vmem:[#allocation13 + $0xa0] sm:$0xff]
    %v3712 = vld [vmem:[#allocation13 + $0xa8] sm:$0xff]
    %v3713 = vld [vmem:[#allocation13 + $0xb0] sm:$0xff]
    %v3714 = vld [vmem:[#allocation13 + $0xb8] sm:$0xff]
    %v3715 = vld [vmem:[#allocation13 + $0xc0] sm:$0xff]
    %v3716 = vld [vmem:[#allocation13 + $0xc8] sm:$0xff]
    %v3717 = vld [vmem:[#allocation13 + $0xd0] sm:$0xff]
    %v3718 = vld [vmem:[#allocation13 + $0xd8] sm:$0xff]
    %v3719 = vld [vmem:[#allocation13 + $0xe0] sm:$0xff]
    %v3720 = vld [vmem:[#allocation13 + $0xe8] sm:$0xff]
    %v3721 = vld [vmem:[#allocation13 + $0xf0] sm:$0xff]
    %v3722 = vld [vmem:[#allocation13 + $0xf8] sm:$0xff]
    %v3723 = vld [vmem:[#allocation13 + $0x100] sm:$0xff]
    %v3724 = vld [vmem:[#allocation13 + $0x108] sm:$0xff]
    %v3725 = vld [vmem:[#allocation13 + $0x110] sm:$0xff]
    %v3726 = vld [vmem:[#allocation13 + $0x118] sm:$0xff]
    %v3727 = vld [vmem:[#allocation13 + $0x120] sm:$0xff]
    %v3728 = vld [vmem:[#allocation13 + $0x128] sm:$0xff]
    %v3729 = vld [vmem:[#allocation13 + $0x130] sm:$0xff]
    %v3730 = vld [vmem:[#allocation13 + $0x138] sm:$0xff]
    %v3731 = vld [vmem:[#allocation13 + $0x140] sm:$0xff]
    %v3732 = vld [vmem:[#allocation13 + $0x148] sm:$0xff]
    %v3733 = vld [vmem:[#allocation13 + $0x150] sm:$0xff]
    %v3734 = vld [vmem:[#allocation13 + $0x158] sm:$0xff]
    %v3735 = vld [vmem:[#allocation13 + $0x160] sm:$0xff]
    %v3736 = vld [vmem:[#allocation13 + $0x168] sm:$0xff]
    %v3737 = vld [vmem:[#allocation13 + $0x170] sm:$0xff]
    %v3738 = vld [vmem:[#allocation13 + $0x178] sm:$0xff]
    %v3739 = vld [vmem:[#allocation13 + $0x180] sm:$0xff]
    %v3740 = vld [vmem:[#allocation13 + $0x188] sm:$0xff]
    %v3741 = vld [vmem:[#allocation13 + $0x190] sm:$0xff]
    %v3742 = vld [vmem:[#allocation13 + $0x198] sm:$0xff]
    %v3743 = vld [vmem:[#allocation13 + $0x1a0] sm:$0xff]
    %v3744 = vld [vmem:[#allocation13 + $0x1a8] sm:$0xff]
    %v3745 = vld [vmem:[#allocation13 + $0x1b0] sm:$0xff]
    %v3746 = vld [vmem:[#allocation13 + $0x1b8] sm:$0xff]
    %v3747 = vld [vmem:[#allocation13 + $0x1c0] sm:$0xff]
    %v3748 = vld [vmem:[#allocation13 + $0x1c8] sm:$0xff]
    %v3749 = vld [vmem:[#allocation13 + $0x1d0] sm:$0xff]
    %v3750 = vld [vmem:[#allocation13 + $0x1d8] sm:$0xff]
    %v3751 = vld [vmem:[#allocation13 + $0x1e0] sm:$0xff]
    %v3752 = vld [vmem:[#allocation13 + $0x1e8] sm:$0xff]
    %v3753 = vld [vmem:[#allocation13 + $0x1f0] sm:$0xff]
    %v3754 = vld [vmem:[#allocation13 + $0x1f8] sm:$0xff]
    %3755 = vmatprep.subr.mxu0 %v3692
    %3756 = vmatpush1.msra.mxu0 %v3691
    %3757 = vmatprep.subr.mxu0 %v3696
    %3758 = vmatpush1.msra.mxu0 %v3695
    %3759 = vmatprep.subr.mxu0 %v3700
    %3760 = vmatpush1.msra.mxu0 %v3699
    %3761 = vmatprep.subr.mxu0 %v3704
    %3762 = vmatpush1.msra.mxu0 %v3703
    %3763 = vmatprep.subr.mxu0 %v3708
    %3764 = vmatpush1.msra.mxu0 %v3707
    %3765 = vmatprep.subr.mxu0 %v3712
    %3766 = vmatpush1.msra.mxu0 %v3711
    %3767 = vmatprep.subr.mxu0 %v3716
    %3768 = vmatpush1.msra.mxu0 %v3715
    %3769 = vmatprep.subr.mxu0 %v3720
    %3770 = vmatpush1.msra.mxu0 %v3719
    %3771 = vmatprep.subr.mxu0 %v3724
    %3772 = vmatpush1.msra.mxu0 %v3723
    %3773 = vmatprep.subr.mxu0 %v3728
    %3774 = vmatpush1.msra.mxu0 %v3727
    %3775 = vmatprep.subr.mxu0 %v3732
    %3776 = vmatpush1.msra.mxu0 %v3731
    %3777 = vmatprep.subr.mxu0 %v3736
    %3778 = vmatpush1.msra.mxu0 %v3735
    %3779 = vmatprep.subr.mxu0 %v3740
    %3780 = vmatpush1.msra.mxu0 %v3739
    %3781 = vmatprep.subr.mxu0 %v3744
    %3782 = vmatpush1.msra.mxu0 %v3743
    %3783 = vmatprep.subr.mxu0 %v3748
    %3784 = vmatpush1.msra.mxu0 %v3747
    %3785 = vmatprep.subr.mxu0 %v3752
    %3786 = vmatpush1.msra.mxu0 %v3751
    %3787 = vmatprep.subr.mxu0 0.0
    %3788 = vmatpush1.msra.mxu0 0.0
    %3789 = vmatprep.subr.mxu0 0.0
    %3790 = vmatpush1.msra.mxu0 0.0
    %3791 = vmatprep.subr.mxu0 0.0
    %3792 = vmatpush1.msra.mxu0 0.0
    %3793 = vmatprep.subr.mxu0 0.0
    %3794 = vmatpush1.msra.mxu0 0.0
    %3795 = vmatprep.subr.mxu0 0.0
    %3796 = vmatpush1.msra.mxu0 0.0
    %3797 = vmatprep.subr.mxu0 0.0
    %3798 = vmatpush1.msra.mxu0 0.0
    %3799 = vmatprep.subr.mxu0 0.0
    %3800 = vmatpush1.msra.mxu0 0.0
    %3801 = vmatprep.subr.mxu0 0.0
    %3802 = vmatpush1.msra.mxu0 0.0
    %3803 = vmatprep.subr.mxu0 0.0
    %3804 = vmatpush1.msra.mxu0 0.0
    %3805 = vmatprep.subr.mxu0 0.0
    %3806 = vmatpush1.msra.mxu0 0.0
    %3807 = vmatprep.subr.mxu0 0.0
    %3808 = vmatpush1.msra.mxu0 0.0
    %3809 = vmatprep.subr.mxu0 0.0
    %3810 = vmatpush1.msra.mxu0 0.0
    %3811 = vmatprep.subr.mxu0 0.0
    %3812 = vmatpush1.msra.mxu0 0.0
    %3813 = vmatprep.subr.mxu0 0.0
    %3814 = vmatpush1.msra.mxu0 0.0
    %3815 = vmatprep.subr.mxu0 0.0
    %3816 = vmatpush1.msra.mxu0 0.0
    %3817 = vmatprep.subr.mxu0 0.0
    %3818 = vmatpush1.msra.mxu0 0.0
    %3819 = vmatprep.mubr.f32.mxu0 0.0
    %3820 = vmatmul.mubr.f32.gmra.mrb[0].mxu0 %v3685
    %v3821 = vpop.f32.mrb[0].mxu0
    %v3822 = vadd.f32 0.0, %v3821
    %v3823 = vpop.f32.mrb[0].mxu0
    %v3824 = vadd.f32 0.0, %v3823
    %3825 = vdwg.mxu0
    %3826 = vmatprep.subr.mxu0 %v3694
    %3827 = vmatpush1.msra.mxu0 %v3693
    %3828 = vmatprep.subr.mxu0 %v3698
    %3829 = vmatpush1.msra.mxu0 %v3697
    %3830 = vmatprep.subr.mxu0 %v3702
    %3831 = vmatpush1.msra.mxu0 %v3701
    %3832 = vmatprep.subr.mxu0 %v3706
    %3833 = vmatpush1.msra.mxu0 %v3705
    %3834 = vmatprep.subr.mxu0 %v3710
    %3835 = vmatpush1.msra.mxu0 %v3709
    %3836 = vmatprep.subr.mxu0 %v3714
    %3837 = vmatpush1.msra.mxu0 %v3713
    %3838 = vmatprep.subr.mxu0 %v3718
    %3839 = vmatpush1.msra.mxu0 %v3717
    %3840 = vmatprep.subr.mxu0 %v3722
    %3841 = vmatpush1.msra.mxu0 %v3721
    %3842 = vmatprep.subr.mxu0 %v3726
    %3843 = vmatpush1.msra.mxu0 %v3725
    %3844 = vmatprep.subr.mxu0 %v3730
    %3845 = vmatpush1.msra.mxu0 %v3729
    %3846 = vmatprep.subr.mxu0 %v3734
    %3847 = vmatpush1.msra.mxu0 %v3733
    %3848 = vmatprep.subr.mxu0 %v3738
    %3849 = vmatpush1.msra.mxu0 %v3737
    %3850 = vmatprep.subr.mxu0 %v3742
    %3851 = vmatpush1.msra.mxu0 %v3741
    %3852 = vmatprep.subr.mxu0 %v3746
    %3853 = vmatpush1.msra.mxu0 %v3745
    %3854 = vmatprep.subr.mxu0 %v3750
    %3855 = vmatpush1.msra.mxu0 %v3749
    %3856 = vmatprep.subr.mxu0 %v3754
    %3857 = vmatpush1.msra.mxu0 %v3753
    %3858 = vmatprep.subr.mxu0 0.0
    %3859 = vmatpush1.msra.mxu0 0.0
    %3860 = vmatprep.subr.mxu0 0.0
    %3861 = vmatpush1.msra.mxu0 0.0
    %3862 = vmatprep.subr.mxu0 0.0
    %3863 = vmatpush1.msra.mxu0 0.0
    %3864 = vmatprep.subr.mxu0 0.0
    %3865 = vmatpush1.msra.mxu0 0.0
    %3866 = vmatprep.subr.mxu0 0.0
    %3867 = vmatpush1.msra.mxu0 0.0
    %3868 = vmatprep.subr.mxu0 0.0
    %3869 = vmatpush1.msra.mxu0 0.0
    %3870 = vmatprep.subr.mxu0 0.0
    %3871 = vmatpush1.msra.mxu0 0.0
    %3872 = vmatprep.subr.mxu0 0.0
    %3873 = vmatpush1.msra.mxu0 0.0
    %3874 = vmatprep.subr.mxu0 0.0
    %3875 = vmatpush1.msra.mxu0 0.0
    %3876 = vmatprep.subr.mxu0 0.0
    %3877 = vmatpush1.msra.mxu0 0.0
    %3878 = vmatprep.subr.mxu0 0.0
    %3879 = vmatpush1.msra.mxu0 0.0
    %3880 = vmatprep.subr.mxu0 0.0
    %3881 = vmatpush1.msra.mxu0 0.0
    %3882 = vmatprep.subr.mxu0 0.0
    %3883 = vmatpush1.msra.mxu0 0.0
    %3884 = vmatprep.subr.mxu0 0.0
    %3885 = vmatpush1.msra.mxu0 0.0
    %3886 = vmatprep.subr.mxu0 0.0
    %3887 = vmatpush1.msra.mxu0 0.0
    %3888 = vmatprep.subr.mxu0 0.0
    %3889 = vmatpush1.msra.mxu0 0.0
    %3890 = vmatprep.mubr.f32.mxu0 0.0
    %3891 = vmatmul.mubr.f32.gmra.mrb[0].mxu0 %v3685
    %v3892 = vpop.f32.mrb[0].mxu0
    %v3893 = vadd.f32 0.0, %v3892
    %v3894 = vpop.f32.mrb[0].mxu0
    %v3895 = vadd.f32 0.0, %v3894
    %3896 = vdwg.mxu0
    %v3897 = vadd.f32 %v3687, %v3822
    %v3898 = vadd.f32 %v3688, %v3824
    %v3899 = vadd.f32 %v3689, %v3893
    %v3900 = vadd.f32 %v3690, %v3895
    %v3901 = vxor.u32 %v3897, 2147483648
    %v3902 = vxor.u32 %v3898, 2147483648
    %v3903 = vxor.u32 %v3899, 2147483648
    %v3904 = vmul.f32 %v3901, 1.442695
    %v3905 = vpow.pop %v3904
    %v3906 = vmul.f32 %v3902, 1.442695
    %v3907 = vpow.pop %v3906
    %v3908 = vmul.f32 %v3903, 1.442695
    %v3909 = vpow.pop %v3908
    %v3910 = vadd.f32 %v3905, 1.0
    %v3911 = vadd.f32 %v3907, 1.0
    %v3912 = vadd.f32 %v3909, 1.0
    %v3913 = vrcp.pop %v3910
    %v3914 = vmul.f32 1.0, %v3913
    %v3915 = vrcp.pop %v3911
    %v3916 = vmul.f32 1.0, %v3915
    %v3917 = vrcp.pop %v3912
    %v3918 = vmul.f32 1.0, %v3917
    %v3919 = vtanh.pop %v3900
    %v3920 = vmul.f32 %v3916, %v3683
    %v3921 = vmul.f32 %v3914, %v3919
    %v3922 = vadd.f32 %v3920, %v3921
    %v3923 = vtanh.pop %v3922
    %v3924 = vmul.f32 %v3918, %v3923
    %3925 = vst [vmem:[#allocation4 + $0x20] sm:$0xff] %v3924
    %v3926 = vld [vmem:[#allocation2 + $0xa0] sm:$0xff]
    %v3927 = vld [vmem:[#allocation2 + $0xa8] sm:$0xff]
    %v3928 = vld [vmem:[#allocation2 + $0xb0] sm:$0xff]
    %v3929 = vld [vmem:[#allocation2 + $0xb8] sm:$0xff]
    %v3930 = vld [vmem:[#allocation13] sm:$0xff]
    %v3931 = vld [vmem:[#allocation13 + $0x8] sm:$0xff]
    %v3932 = vld [vmem:[#allocation13 + $0x10] sm:$0xff]
    %v3933 = vld [vmem:[#allocation13 + $0x18] sm:$0xff]
    %v3934 = vld [vmem:[#allocation13 + $0x20] sm:$0xff]
    %v3935 = vld [vmem:[#allocation13 + $0x28] sm:$0xff]
    %v3936 = vld [vmem:[#allocation13 + $0x30] sm:$0xff]
    %v3937 = vld [vmem:[#allocation13 + $0x38] sm:$0xff]
    %v3938 = vld [vmem:[#allocation13 + $0x40] sm:$0xff]
    %v3939 = vld [vmem:[#allocation13 + $0x48] sm:$0xff]
    %v3940 = vld [vmem:[#allocation13 + $0x50] sm:$0xff]
    %v3941 = vld [vmem:[#allocation13 + $0x58] sm:$0xff]
    %v3942 = vld [vmem:[#allocation13 + $0x60] sm:$0xff]
    %v3943 = vld [vmem:[#allocation13 + $0x68] sm:$0xff]
    %v3944 = vld [vmem:[#allocation13 + $0x70] sm:$0xff]
    %v3945 = vld [vmem:[#allocation13 + $0x78] sm:$0xff]
    %v3946 = vld [vmem:[#allocation13 + $0x80] sm:$0xff]
    %v3947 = vld [vmem:[#allocation13 + $0x88] sm:$0xff]
    %v3948 = vld [vmem:[#allocation13 + $0x90] sm:$0xff]
    %v3949 = vld [vmem:[#allocation13 + $0x98] sm:$0xff]
    %v3950 = vld [vmem:[#allocation13 + $0xa0] sm:$0xff]
    %v3951 = vld [vmem:[#allocation13 + $0xa8] sm:$0xff]
    %v3952 = vld [vmem:[#allocation13 + $0xb0] sm:$0xff]
    %v3953 = vld [vmem:[#allocation13 + $0xb8] sm:$0xff]
    %v3954 = vld [vmem:[#allocation13 + $0xc0] sm:$0xff]
    %v3955 = vld [vmem:[#allocation13 + $0xc8] sm:$0xff]
    %v3956 = vld [vmem:[#allocation13 + $0xd0] sm:$0xff]
    %v3957 = vld [vmem:[#allocation13 + $0xd8] sm:$0xff]
    %v3958 = vld [vmem:[#allocation13 + $0xe0] sm:$0xff]
    %v3959 = vld [vmem:[#allocation13 + $0xe8] sm:$0xff]
    %v3960 = vld [vmem:[#allocation13 + $0xf0] sm:$0xff]
    %v3961 = vld [vmem:[#allocation13 + $0xf8] sm:$0xff]
    %v3962 = vld [vmem:[#allocation13 + $0x100] sm:$0xff]
    %v3963 = vld [vmem:[#allocation13 + $0x108] sm:$0xff]
    %v3964 = vld [vmem:[#allocation13 + $0x110] sm:$0xff]
    %v3965 = vld [vmem:[#allocation13 + $0x118] sm:$0xff]
    %v3966 = vld [vmem:[#allocation13 + $0x120] sm:$0xff]
    %v3967 = vld [vmem:[#allocation13 + $0x128] sm:$0xff]
    %v3968 = vld [vmem:[#allocation13 + $0x130] sm:$0xff]
    %v3969 = vld [vmem:[#allocation13 + $0x138] sm:$0xff]
    %v3970 = vld [vmem:[#allocation13 + $0x140] sm:$0xff]
    %v3971 = vld [vmem:[#allocation13 + $0x148] sm:$0xff]
    %v3972 = vld [vmem:[#allocation13 + $0x150] sm:$0xff]
    %v3973 = vld [vmem:[#allocation13 + $0x158] sm:$0xff]
    %v3974 = vld [vmem:[#allocation13 + $0x160] sm:$0xff]
    %v3975 = vld [vmem:[#allocation13 + $0x168] sm:$0xff]
    %v3976 = vld [vmem:[#allocation13 + $0x170] sm:$0xff]
    %v3977 = vld [vmem:[#allocation13 + $0x178] sm:$0xff]
    %v3978 = vld [vmem:[#allocation13 + $0x180] sm:$0xff]
    %v3979 = vld [vmem:[#allocation13 + $0x188] sm:$0xff]
    %v3980 = vld [vmem:[#allocation13 + $0x190] sm:$0xff]
    %v3981 = vld [vmem:[#allocation13 + $0x198] sm:$0xff]
    %v3982 = vld [vmem:[#allocation13 + $0x1a0] sm:$0xff]
    %v3983 = vld [vmem:[#allocation13 + $0x1a8] sm:$0xff]
    %v3984 = vld [vmem:[#allocation13 + $0x1b0] sm:$0xff]
    %v3985 = vld [vmem:[#allocation13 + $0x1b8] sm:$0xff]
    %v3986 = vld [vmem:[#allocation13 + $0x1c0] sm:$0xff]
    %v3987 = vld [vmem:[#allocation13 + $0x1c8] sm:$0xff]
    %v3988 = vld [vmem:[#allocation13 + $0x1d0] sm:$0xff]
    %v3989 = vld [vmem:[#allocation13 + $0x1d8] sm:$0xff]
    %v3990 = vld [vmem:[#allocation13 + $0x1e0] sm:$0xff]
    %v3991 = vld [vmem:[#allocation13 + $0x1e8] sm:$0xff]
    %v3992 = vld [vmem:[#allocation13 + $0x1f0] sm:$0xff]
    %v3993 = vld [vmem:[#allocation13 + $0x1f8] sm:$0xff]
    %3994 = vmatprep.subr.mxu0 %v3931
    %3995 = vmatpush1.msra.mxu0 %v3930
    %3996 = vmatprep.subr.mxu0 %v3935
    %3997 = vmatpush1.msra.mxu0 %v3934
    %3998 = vmatprep.subr.mxu0 %v3939
    %3999 = vmatpush1.msra.mxu0 %v3938
    %4000 = vmatprep.subr.mxu0 %v3943
    %4001 = vmatpush1.msra.mxu0 %v3942
    %4002 = vmatprep.subr.mxu0 %v3947
    %4003 = vmatpush1.msra.mxu0 %v3946
    %4004 = vmatprep.subr.mxu0 %v3951
    %4005 = vmatpush1.msra.mxu0 %v3950
    %4006 = vmatprep.subr.mxu0 %v3955
    %4007 = vmatpush1.msra.mxu0 %v3954
    %4008 = vmatprep.subr.mxu0 %v3959
    %4009 = vmatpush1.msra.mxu0 %v3958
    %4010 = vmatprep.subr.mxu0 %v3963
    %4011 = vmatpush1.msra.mxu0 %v3962
    %4012 = vmatprep.subr.mxu0 %v3967
    %4013 = vmatpush1.msra.mxu0 %v3966
    %4014 = vmatprep.subr.mxu0 %v3971
    %4015 = vmatpush1.msra.mxu0 %v3970
    %4016 = vmatprep.subr.mxu0 %v3975
    %4017 = vmatpush1.msra.mxu0 %v3974
    %4018 = vmatprep.subr.mxu0 %v3979
    %4019 = vmatpush1.msra.mxu0 %v3978
    %4020 = vmatprep.subr.mxu0 %v3983
    %4021 = vmatpush1.msra.mxu0 %v3982
    %4022 = vmatprep.subr.mxu0 %v3987
    %4023 = vmatpush1.msra.mxu0 %v3986
    %4024 = vmatprep.subr.mxu0 %v3991
    %4025 = vmatpush1.msra.mxu0 %v3990
    %4026 = vmatprep.subr.mxu0 0.0
    %4027 = vmatpush1.msra.mxu0 0.0
    %4028 = vmatprep.subr.mxu0 0.0
    %4029 = vmatpush1.msra.mxu0 0.0
    %4030 = vmatprep.subr.mxu0 0.0
    %4031 = vmatpush1.msra.mxu0 0.0
    %4032 = vmatprep.subr.mxu0 0.0
    %4033 = vmatpush1.msra.mxu0 0.0
    %4034 = vmatprep.subr.mxu0 0.0
    %4035 = vmatpush1.msra.mxu0 0.0
    %4036 = vmatprep.subr.mxu0 0.0
    %4037 = vmatpush1.msra.mxu0 0.0
    %4038 = vmatprep.subr.mxu0 0.0
    %4039 = vmatpush1.msra.mxu0 0.0
    %4040 = vmatprep.subr.mxu0 0.0
    %4041 = vmatpush1.msra.mxu0 0.0
    %4042 = vmatprep.subr.mxu0 0.0
    %4043 = vmatpush1.msra.mxu0 0.0
    %4044 = vmatprep.subr.mxu0 0.0
    %4045 = vmatpush1.msra.mxu0 0.0
    %4046 = vmatprep.subr.mxu0 0.0
    %4047 = vmatpush1.msra.mxu0 0.0
    %4048 = vmatprep.subr.mxu0 0.0
    %4049 = vmatpush1.msra.mxu0 0.0
    %4050 = vmatprep.subr.mxu0 0.0
    %4051 = vmatpush1.msra.mxu0 0.0
    %4052 = vmatprep.subr.mxu0 0.0
    %4053 = vmatpush1.msra.mxu0 0.0
    %4054 = vmatprep.subr.mxu0 0.0
    %4055 = vmatpush1.msra.mxu0 0.0
    %4056 = vmatprep.subr.mxu0 0.0
    %4057 = vmatpush1.msra.mxu0 0.0
    %4058 = vmatprep.mubr.f32.mxu0 0.0
    %4059 = vmatmul.mubr.f32.gmra.mrb[0].mxu0 %v3924
    %v4060 = vpop.f32.mrb[0].mxu0
    %v4061 = vadd.f32 0.0, %v4060
    %v4062 = vpop.f32.mrb[0].mxu0
    %v4063 = vadd.f32 0.0, %v4062
    %4064 = vdwg.mxu0
    %4065 = vmatprep.subr.mxu0 %v3933
    %4066 = vmatpush1.msra.mxu0 %v3932
    %4067 = vmatprep.subr.mxu0 %v3937
    %4068 = vmatpush1.msra.mxu0 %v3936
    %4069 = vmatprep.subr.mxu0 %v3941
    %4070 = vmatpush1.msra.mxu0 %v3940
    %4071 = vmatprep.subr.mxu0 %v3945
    %4072 = vmatpush1.msra.mxu0 %v3944
    %4073 = vmatprep.subr.mxu0 %v3949
    %4074 = vmatpush1.msra.mxu0 %v3948
    %4075 = vmatprep.subr.mxu0 %v3953
    %4076 = vmatpush1.msra.mxu0 %v3952
    %4077 = vmatprep.subr.mxu0 %v3957
    %4078 = vmatpush1.msra.mxu0 %v3956
    %4079 = vmatprep.subr.mxu0 %v3961
    %4080 = vmatpush1.msra.mxu0 %v3960
    %4081 = vmatprep.subr.mxu0 %v3965
    %4082 = vmatpush1.msra.mxu0 %v3964
    %4083 = vmatprep.subr.mxu0 %v3969
    %4084 = vmatpush1.msra.mxu0 %v3968
    %4085 = vmatprep.subr.mxu0 %v3973
    %4086 = vmatpush1.msra.mxu0 %v3972
    %4087 = vmatprep.subr.mxu0 %v3977
    %4088 = vmatpush1.msra.mxu0 %v3976
    %4089 = vmatprep.subr.mxu0 %v3981
    %4090 = vmatpush1.msra.mxu0 %v3980
    %4091 = vmatprep.subr.mxu0 %v3985
    %4092 = vmatpush1.msra.mxu0 %v3984
    %4093 = vmatprep.subr.mxu0 %v3989
    %4094 = vmatpush1.msra.mxu0 %v3988
    %4095 = vmatprep.subr.mxu0 %v3993
    %4096 = vmatpush1.msra.mxu0 %v3992
    %4097 = vmatprep.subr.mxu0 0.0
    %4098 = vmatpush1.msra.mxu0 0.0
    %4099 = vmatprep.subr.mxu0 0.0
    %4100 = vmatpush1.msra.mxu0 0.0
    %4101 = vmatprep.subr.mxu0 0.0
    %4102 = vmatpush1.msra.mxu0 0.0
    %4103 = vmatprep.subr.mxu0 0.0
    %4104 = vmatpush1.msra.mxu0 0.0
    %4105 = vmatprep.subr.mxu0 0.0
    %4106 = vmatpush1.msra.mxu0 0.0
    %4107 = vmatprep.subr.mxu0 0.0
    %4108 = vmatpush1.msra.mxu0 0.0
    %4109 = vmatprep.subr.mxu0 0.0
    %4110 = vmatpush1.msra.mxu0 0.0
    %4111 = vmatprep.subr.mxu0 0.0
    %4112 = vmatpush1.msra.mxu0 0.0
    %4113 = vmatprep.subr.mxu0 0.0
    %4114 = vmatpush1.msra.mxu0 0.0
    %4115 = vmatprep.subr.mxu0 0.0
    %4116 = vmatpush1.msra.mxu0 0.0
    %4117 = vmatprep.subr.mxu0 0.0
    %4118 = vmatpush1.msra.mxu0 0.0
    %4119 = vmatprep.subr.mxu0 0.0
    %4120 = vmatpush1.msra.mxu0 0.0
    %4121 = vmatprep.subr.mxu0 0.0
    %4122 = vmatpush1.msra.mxu0 0.0
    %4123 = vmatprep.subr.mxu0 0.0
    %4124 = vmatpush1.msra.mxu0 0.0
    %4125 = vmatprep.subr.mxu0 0.0
    %4126 = vmatpush1.msra.mxu0 0.0
    %4127 = vmatprep.subr.mxu0 0.0
    %4128 = vmatpush1.msra.mxu0 0.0
    %4129 = vmatprep.mubr.f32.mxu0 0.0
    %4130 = vmatmul.mubr.f32.gmra.mrb[0].mxu0 %v3924
    %v4131 = vpop.f32.mrb[0].mxu0
    %v4132 = vadd.f32 0.0, %v4131
    %v4133 = vpop.f32.mrb[0].mxu0
    %v4134 = vadd.f32 0.0, %v4133
    %4135 = vdwg.mxu0
    %v4136 = vadd.f32 %v3926, %v4061
    %v4137 = vadd.f32 %v3927, %v4063
    %v4138 = vadd.f32 %v3928, %v4132
    %v4139 = vadd.f32 %v3929, %v4134
    %v4140 = vxor.u32 %v4136, 2147483648
    %v4141 = vxor.u32 %v4137, 2147483648
    %v4142 = vxor.u32 %v4138, 2147483648
    %v4143 = vmul.f32 %v4140, 1.442695
    %v4144 = vpow.pop %v4143
    %v4145 = vmul.f32 %v4141, 1.442695
    %v4146 = vpow.pop %v4145
    %v4147 = vmul.f32 %v4142, 1.442695
    %v4148 = vpow.pop %v4147
    %v4149 = vadd.f32 %v4144, 1.0
    %v4150 = vadd.f32 %v4146, 1.0
    %v4151 = vadd.f32 %v4148, 1.0
    %v4152 = vrcp.pop %v4149
    %v4153 = vmul.f32 1.0, %v4152
    %v4154 = vrcp.pop %v4150
    %v4155 = vmul.f32 1.0, %v4154
    %v4156 = vrcp.pop %v4151
    %v4157 = vmul.f32 1.0, %v4156
    %v4158 = vtanh.pop %v4139
    %v4159 = vmul.f32 %v4155, %v3922
    %v4160 = vmul.f32 %v4153, %v4158
    %v4161 = vadd.f32 %v4159, %v4160
    %v4162 = vtanh.pop %v4161
    %v4163 = vmul.f32 %v4157, %v4162
    %4164 = vst [vmem:[#allocation4 + $0x28] sm:$0xff] %v4163
    %v4165 = vld [vmem:[#allocation2 + $0xc0] sm:$0xff]
    %v4166 = vld [vmem:[#allocation2 + $0xc8] sm:$0xff]
    %v4167 = vld [vmem:[#allocation2 + $0xd0] sm:$0xff]
    %v4168 = vld [vmem:[#allocation2 + $0xd8] sm:$0xff]
    %v4169 = vld [vmem:[#allocation13] sm:$0xff]
    %v4170 = vld [vmem:[#allocation13 + $0x8] sm:$0xff]
    %v4171 = vld [vmem:[#allocation13 + $0x10] sm:$0xff]
    %v4172 = vld [vmem:[#allocation13 + $0x18] sm:$0xff]
    %v4173 = vld [vmem:[#allocation13 + $0x20] sm:$0xff]
    %v4174 = vld [vmem:[#allocation13 + $0x28] sm:$0xff]
    %v4175 = vld [vmem:[#allocation13 + $0x30] sm:$0xff]
    %v4176 = vld [vmem:[#allocation13 + $0x38] sm:$0xff]
    %v4177 = vld [vmem:[#allocation13 + $0x40] sm:$0xff]
    %v4178 = vld [vmem:[#allocation13 + $0x48] sm:$0xff]
    %v4179 = vld [vmem:[#allocation13 + $0x50] sm:$0xff]
    %v4180 = vld [vmem:[#allocation13 + $0x58] sm:$0xff]
    %v4181 = vld [vmem:[#allocation13 + $0x60] sm:$0xff]
    %v4182 = vld [vmem:[#allocation13 + $0x68] sm:$0xff]
    %v4183 = vld [vmem:[#allocation13 + $0x70] sm:$0xff]
    %v4184 = vld [vmem:[#allocation13 + $0x78] sm:$0xff]
    %v4185 = vld [vmem:[#allocation13 + $0x80] sm:$0xff]
    %v4186 = vld [vmem:[#allocation13 + $0x88] sm:$0xff]
    %v4187 = vld [vmem:[#allocation13 + $0x90] sm:$0xff]
    %v4188 = vld [vmem:[#allocation13 + $0x98] sm:$0xff]
    %v4189 = vld [vmem:[#allocation13 + $0xa0] sm:$0xff]
    %v4190 = vld [vmem:[#allocation13 + $0xa8] sm:$0xff]
    %v4191 = vld [vmem:[#allocation13 + $0xb0] sm:$0xff]
    %v4192 = vld [vmem:[#allocation13 + $0xb8] sm:$0xff]
    %v4193 = vld [vmem:[#allocation13 + $0xc0] sm:$0xff]
    %v4194 = vld [vmem:[#allocation13 + $0xc8] sm:$0xff]
    %v4195 = vld [vmem:[#allocation13 + $0xd0] sm:$0xff]
    %v4196 = vld [vmem:[#allocation13 + $0xd8] sm:$0xff]
    %v4197 = vld [vmem:[#allocation13 + $0xe0] sm:$0xff]
    %v4198 = vld [vmem:[#allocation13 + $0xe8] sm:$0xff]
    %v4199 = vld [vmem:[#allocation13 + $0xf0] sm:$0xff]
    %v4200 = vld [vmem:[#allocation13 + $0xf8] sm:$0xff]
    %v4201 = vld [vmem:[#allocation13 + $0x100] sm:$0xff]
    %v4202 = vld [vmem:[#allocation13 + $0x108] sm:$0xff]
    %v4203 = vld [vmem:[#allocation13 + $0x110] sm:$0xff]
    %v4204 = vld [vmem:[#allocation13 + $0x118] sm:$0xff]
    %v4205 = vld [vmem:[#allocation13 + $0x120] sm:$0xff]
    %v4206 = vld [vmem:[#allocation13 + $0x128] sm:$0xff]
    %v4207 = vld [vmem:[#allocation13 + $0x130] sm:$0xff]
    %v4208 = vld [vmem:[#allocation13 + $0x138] sm:$0xff]
    %v4209 = vld [vmem:[#allocation13 + $0x140] sm:$0xff]
    %v4210 = vld [vmem:[#allocation13 + $0x148] sm:$0xff]
    %v4211 = vld [vmem:[#allocation13 + $0x150] sm:$0xff]
    %v4212 = vld [vmem:[#allocation13 + $0x158] sm:$0xff]
    %v4213 = vld [vmem:[#allocation13 + $0x160] sm:$0xff]
    %v4214 = vld [vmem:[#allocation13 + $0x168] sm:$0xff]
    %v4215 = vld [vmem:[#allocation13 + $0x170] sm:$0xff]
    %v4216 = vld [vmem:[#allocation13 + $0x178] sm:$0xff]
    %v4217 = vld [vmem:[#allocation13 + $0x180] sm:$0xff]
    %v4218 = vld [vmem:[#allocation13 + $0x188] sm:$0xff]
    %v4219 = vld [vmem:[#allocation13 + $0x190] sm:$0xff]
    %v4220 = vld [vmem:[#allocation13 + $0x198] sm:$0xff]
    %v4221 = vld [vmem:[#allocation13 + $0x1a0] sm:$0xff]
    %v4222 = vld [vmem:[#allocation13 + $0x1a8] sm:$0xff]
    %v4223 = vld [vmem:[#allocation13 + $0x1b0] sm:$0xff]
    %v4224 = vld [vmem:[#allocation13 + $0x1b8] sm:$0xff]
    %v4225 = vld [vmem:[#allocation13 + $0x1c0] sm:$0xff]
    %v4226 = vld [vmem:[#allocation13 + $0x1c8] sm:$0xff]
    %v4227 = vld [vmem:[#allocation13 + $0x1d0] sm:$0xff]
    %v4228 = vld [vmem:[#allocation13 + $0x1d8] sm:$0xff]
    %v4229 = vld [vmem:[#allocation13 + $0x1e0] sm:$0xff]
    %v4230 = vld [vmem:[#allocation13 + $0x1e8] sm:$0xff]
    %v4231 = vld [vmem:[#allocation13 + $0x1f0] sm:$0xff]
    %v4232 = vld [vmem:[#allocation13 + $0x1f8] sm:$0xff]
    %4233 = vmatprep.subr.mxu0 %v4170
    %4234 = vmatpush1.msra.mxu0 %v4169
    %4235 = vmatprep.subr.mxu0 %v4174
    %4236 = vmatpush1.msra.mxu0 %v4173
    %4237 = vmatprep.subr.mxu0 %v4178
    %4238 = vmatpush1.msra.mxu0 %v4177
    %4239 = vmatprep.subr.mxu0 %v4182
    %4240 = vmatpush1.msra.mxu0 %v4181
    %4241 = vmatprep.subr.mxu0 %v4186
    %4242 = vmatpush1.msra.mxu0 %v4185
    %4243 = vmatprep.subr.mxu0 %v4190
    %4244 = vmatpush1.msra.mxu0 %v4189
    %4245 = vmatprep.subr.mxu0 %v4194
    %4246 = vmatpush1.msra.mxu0 %v4193
    %4247 = vmatprep.subr.mxu0 %v4198
    %4248 = vmatpush1.msra.mxu0 %v4197
    %4249 = vmatprep.subr.mxu0 %v4202
    %4250 = vmatpush1.msra.mxu0 %v4201
    %4251 = vmatprep.subr.mxu0 %v4206
    %4252 = vmatpush1.msra.mxu0 %v4205
    %4253 = vmatprep.subr.mxu0 %v4210
    %4254 = vmatpush1.msra.mxu0 %v4209
    %4255 = vmatprep.subr.mxu0 %v4214
    %4256 = vmatpush1.msra.mxu0 %v4213
    %4257 = vmatprep.subr.mxu0 %v4218
    %4258 = vmatpush1.msra.mxu0 %v4217
    %4259 = vmatprep.subr.mxu0 %v4222
    %4260 = vmatpush1.msra.mxu0 %v4221
    %4261 = vmatprep.subr.mxu0 %v4226
    %4262 = vmatpush1.msra.mxu0 %v4225
    %4263 = vmatprep.subr.mxu0 %v4230
    %4264 = vmatpush1.msra.mxu0 %v4229
    %4265 = vmatprep.subr.mxu0 0.0
    %4266 = vmatpush1.msra.mxu0 0.0
    %4267 = vmatprep.subr.mxu0 0.0
    %4268 = vmatpush1.msra.mxu0 0.0
    %4269 = vmatprep.subr.mxu0 0.0
    %4270 = vmatpush1.msra.mxu0 0.0
    %4271 = vmatprep.subr.mxu0 0.0
    %4272 = vmatpush1.msra.mxu0 0.0
    %4273 = vmatprep.subr.mxu0 0.0
    %4274 = vmatpush1.msra.mxu0 0.0
    %4275 = vmatprep.subr.mxu0 0.0
    %4276 = vmatpush1.msra.mxu0 0.0
    %4277 = vmatprep.subr.mxu0 0.0
    %4278 = vmatpush1.msra.mxu0 0.0
    %4279 = vmatprep.subr.mxu0 0.0
    %4280 = vmatpush1.msra.mxu0 0.0
    %4281 = vmatprep.subr.mxu0 0.0
    %4282 = vmatpush1.msra.mxu0 0.0
    %4283 = vmatprep.subr.mxu0 0.0
    %4284 = vmatpush1.msra.mxu0 0.0
    %4285 = vmatprep.subr.mxu0 0.0
    %4286 = vmatpush1.msra.mxu0 0.0
    %4287 = vmatprep.subr.mxu0 0.0
    %4288 = vmatpush1.msra.mxu0 0.0
    %4289 = vmatprep.subr.mxu0 0.0
    %4290 = vmatpush1.msra.mxu0 0.0
    %4291 = vmatprep.subr.mxu0 0.0
    %4292 = vmatpush1.msra.mxu0 0.0
    %4293 = vmatprep.subr.mxu0 0.0
    %4294 = vmatpush1.msra.mxu0 0.0
    %4295 = vmatprep.subr.mxu0 0.0
    %4296 = vmatpush1.msra.mxu0 0.0
    %4297 = vmatprep.mubr.f32.mxu0 0.0
    %4298 = vmatmul.mubr.f32.gmra.mrb[0].mxu0 %v4163
    %v4299 = vpop.f32.mrb[0].mxu0
    %v4300 = vadd.f32 0.0, %v4299
    %v4301 = vpop.f32.mrb[0].mxu0
    %v4302 = vadd.f32 0.0, %v4301
    %4303 = vdwg.mxu0
    %4304 = vmatprep.subr.mxu0 %v4172
    %4305 = vmatpush1.msra.mxu0 %v4171
    %4306 = vmatprep.subr.mxu0 %v4176
    %4307 = vmatpush1.msra.mxu0 %v4175
    %4308 = vmatprep.subr.mxu0 %v4180
    %4309 = vmatpush1.msra.mxu0 %v4179
    %4310 = vmatprep.subr.mxu0 %v4184
    %4311 = vmatpush1.msra.mxu0 %v4183
    %4312 = vmatprep.subr.mxu0 %v4188
    %4313 = vmatpush1.msra.mxu0 %v4187
    %4314 = vmatprep.subr.mxu0 %v4192
    %4315 = vmatpush1.msra.mxu0 %v4191
    %4316 = vmatprep.subr.mxu0 %v4196
    %4317 = vmatpush1.msra.mxu0 %v4195
    %4318 = vmatprep.subr.mxu0 %v4200
    %4319 = vmatpush1.msra.mxu0 %v4199
    %4320 = vmatprep.subr.mxu0 %v4204
    %4321 = vmatpush1.msra.mxu0 %v4203
    %4322 = vmatprep.subr.mxu0 %v4208
    %4323 = vmatpush1.msra.mxu0 %v4207
    %4324 = vmatprep.subr.mxu0 %v4212
    %4325 = vmatpush1.msra.mxu0 %v4211
    %4326 = vmatprep.subr.mxu0 %v4216
    %4327 = vmatpush1.msra.mxu0 %v4215
    %4328 = vmatprep.subr.mxu0 %v4220
    %4329 = vmatpush1.msra.mxu0 %v4219
    %4330 = vmatprep.subr.mxu0 %v4224
    %4331 = vmatpush1.msra.mxu0 %v4223
    %4332 = vmatprep.subr.mxu0 %v4228
    %4333 = vmatpush1.msra.mxu0 %v4227
    %4334 = vmatprep.subr.mxu0 %v4232
    %4335 = vmatpush1.msra.mxu0 %v4231
    %4336 = vmatprep.subr.mxu0 0.0
    %4337 = vmatpush1.msra.mxu0 0.0
    %4338 = vmatprep.subr.mxu0 0.0
    %4339 = vmatpush1.msra.mxu0 0.0
    %4340 = vmatprep.subr.mxu0 0.0
    %4341 = vmatpush1.msra.mxu0 0.0
    %4342 = vmatprep.subr.mxu0 0.0
    %4343 = vmatpush1.msra.mxu0 0.0
    %4344 = vmatprep.subr.mxu0 0.0
    %4345 = vmatpush1.msra.mxu0 0.0
    %4346 = vmatprep.subr.mxu0 0.0
    %4347 = vmatpush1.msra.mxu0 0.0
    %4348 = vmatprep.subr.mxu0 0.0
    %4349 = vmatpush1.msra.mxu0 0.0
    %4350 = vmatprep.subr.mxu0 0.0
    %4351 = vmatpush1.msra.mxu0 0.0
    %4352 = vmatprep.subr.mxu0 0.0
    %4353 = vmatpush1.msra.mxu0 0.0
    %4354 = vmatprep.subr.mxu0 0.0
    %4355 = vmatpush1.msra.mxu0 0.0
    %4356 = vmatprep.subr.mxu0 0.0
    %4357 = vmatpush1.msra.mxu0 0.0
    %4358 = vmatprep.subr.mxu0 0.0
    %4359 = vmatpush1.msra.mxu0 0.0
    %4360 = vmatprep.subr.mxu0 0.0
    %4361 = vmatpush1.msra.mxu0 0.0
    %4362 = vmatprep.subr.mxu0 0.0
    %4363 = vmatpush1.msra.mxu0 0.0
    %4364 = vmatprep.subr.mxu0 0.0
    %4365 = vmatpush1.msra.mxu0 0.0
    %4366 = vmatprep.subr.mxu0 0.0
    %4367 = vmatpush1.msra.mxu0 0.0
    %4368 = vmatprep.mubr.f32.mxu0 0.0
    %4369 = vmatmul.mubr.f32.gmra.mrb[0].mxu0 %v4163
    %v4370 = vpop.f32.mrb[0].mxu0
    %v4371 = vadd.f32 0.0, %v4370
    %v4372 = vpop.f32.mrb[0].mxu0
    %v4373 = vadd.f32 0.0, %v4372
    %4374 = vdwg.mxu0
    %v4375 = vadd.f32 %v4165, %v4300
    %v4376 = vadd.f32 %v4166, %v4302
    %v4377 = vadd.f32 %v4167, %v4371
    %v4378 = vadd.f32 %v4168, %v4373
    %v4379 = vxor.u32 %v4375, 2147483648
    %v4380 = vxor.u32 %v4376, 2147483648
    %v4381 = vxor.u32 %v4377, 2147483648
    %v4382 = vmul.f32 %v4379, 1.442695
    %v4383 = vpow.pop %v4382
    %v4384 = vmul.f32 %v4380, 1.442695
    %v4385 = vpow.pop %v4384
    %v4386 = vmul.f32 %v4381, 1.442695
    %v4387 = vpow.pop %v4386
    %v4388 = vadd.f32 %v4383, 1.0
    %v4389 = vadd.f32 %v4385, 1.0
    %v4390 = vadd.f32 %v4387, 1.0
    %v4391 = vrcp.pop %v4388
    %v4392 = vmul.f32 1.0, %v4391
    %v4393 = vrcp.pop %v4389
    %v4394 = vmul.f32 1.0, %v4393
    %v4395 = vrcp.pop %v4390
    %v4396 = vmul.f32 1.0, %v4395
    %v4397 = vtanh.pop %v4378
    %v4398 = vmul.f32 %v4394, %v4161
    %v4399 = vmul.f32 %v4392, %v4397
    %v4400 = vadd.f32 %v4398, %v4399
    %v4401 = vtanh.pop %v4400
    %v4402 = vmul.f32 %v4396, %v4401
    %4403 = vst [vmem:[#allocation4 + $0x30] sm:$0xff] %v4402
    %v4404 = vld [vmem:[#allocation2 + $0xe0] sm:$0xff]
    %v4405 = vld [vmem:[#allocation2 + $0xe8] sm:$0xff]
    %v4406 = vld [vmem:[#allocation2 + $0xf0] sm:$0xff]
    %v4407 = vld [vmem:[#allocation2 + $0xf8] sm:$0xff]
    %v4408 = vld [vmem:[#allocation13] sm:$0xff]
    %v4409 = vld [vmem:[#allocation13 + $0x8] sm:$0xff]
    %v4410 = vld [vmem:[#allocation13 + $0x10] sm:$0xff]
    %v4411 = vld [vmem:[#allocation13 + $0x18] sm:$0xff]
    %v4412 = vld [vmem:[#allocation13 + $0x20] sm:$0xff]
    %v4413 = vld [vmem:[#allocation13 + $0x28] sm:$0xff]
    %v4414 = vld [vmem:[#allocation13 + $0x30] sm:$0xff]
    %v4415 = vld [vmem:[#allocation13 + $0x38] sm:$0xff]
    %v4416 = vld [vmem:[#allocation13 + $0x40] sm:$0xff]
    %v4417 = vld [vmem:[#allocation13 + $0x48] sm:$0xff]
    %v4418 = vld [vmem:[#allocation13 + $0x50] sm:$0xff]
    %v4419 = vld [vmem:[#allocation13 + $0x58] sm:$0xff]
    %v4420 = vld [vmem:[#allocation13 + $0x60] sm:$0xff]
    %v4421 = vld [vmem:[#allocation13 + $0x68] sm:$0xff]
    %v4422 = vld [vmem:[#allocation13 + $0x70] sm:$0xff]
    %v4423 = vld [vmem:[#allocation13 + $0x78] sm:$0xff]
    %v4424 = vld [vmem:[#allocation13 + $0x80] sm:$0xff]
    %v4425 = vld [vmem:[#allocation13 + $0x88] sm:$0xff]
    %v4426 = vld [vmem:[#allocation13 + $0x90] sm:$0xff]
    %v4427 = vld [vmem:[#allocation13 + $0x98] sm:$0xff]
    %v4428 = vld [vmem:[#allocation13 + $0xa0] sm:$0xff]
    %v4429 = vld [vmem:[#allocation13 + $0xa8] sm:$0xff]
    %v4430 = vld [vmem:[#allocation13 + $0xb0] sm:$0xff]
    %v4431 = vld [vmem:[#allocation13 + $0xb8] sm:$0xff]
    %v4432 = vld [vmem:[#allocation13 + $0xc0] sm:$0xff]
    %v4433 = vld [vmem:[#allocation13 + $0xc8] sm:$0xff]
    %v4434 = vld [vmem:[#allocation13 + $0xd0] sm:$0xff]
    %v4435 = vld [vmem:[#allocation13 + $0xd8] sm:$0xff]
    %v4436 = vld [vmem:[#allocation13 + $0xe0] sm:$0xff]
    %v4437 = vld [vmem:[#allocation13 + $0xe8] sm:$0xff]
    %v4438 = vld [vmem:[#allocation13 + $0xf0] sm:$0xff]
    %v4439 = vld [vmem:[#allocation13 + $0xf8] sm:$0xff]
    %v4440 = vld [vmem:[#allocation13 + $0x100] sm:$0xff]
    %v4441 = vld [vmem:[#allocation13 + $0x108] sm:$0xff]
    %v4442 = vld [vmem:[#allocation13 + $0x110] sm:$0xff]
    %v4443 = vld [vmem:[#allocation13 + $0x118] sm:$0xff]
    %v4444 = vld [vmem:[#allocation13 + $0x120] sm:$0xff]
    %v4445 = vld [vmem:[#allocation13 + $0x128] sm:$0xff]
    %v4446 = vld [vmem:[#allocation13 + $0x130] sm:$0xff]
    %v4447 = vld [vmem:[#allocation13 + $0x138] sm:$0xff]
    %v4448 = vld [vmem:[#allocation13 + $0x140] sm:$0xff]
    %v4449 = vld [vmem:[#allocation13 + $0x148] sm:$0xff]
    %v4450 = vld [vmem:[#allocation13 + $0x150] sm:$0xff]
    %v4451 = vld [vmem:[#allocation13 + $0x158] sm:$0xff]
    %v4452 = vld [vmem:[#allocation13 + $0x160] sm:$0xff]
    %v4453 = vld [vmem:[#allocation13 + $0x168] sm:$0xff]
    %v4454 = vld [vmem:[#allocation13 + $0x170] sm:$0xff]
    %v4455 = vld [vmem:[#allocation13 + $0x178] sm:$0xff]
    %v4456 = vld [vmem:[#allocation13 + $0x180] sm:$0xff]
    %v4457 = vld [vmem:[#allocation13 + $0x188] sm:$0xff]
    %v4458 = vld [vmem:[#allocation13 + $0x190] sm:$0xff]
    %v4459 = vld [vmem:[#allocation13 + $0x198] sm:$0xff]
    %v4460 = vld [vmem:[#allocation13 + $0x1a0] sm:$0xff]
    %v4461 = vld [vmem:[#allocation13 + $0x1a8] sm:$0xff]
    %v4462 = vld [vmem:[#allocation13 + $0x1b0] sm:$0xff]
    %v4463 = vld [vmem:[#allocation13 + $0x1b8] sm:$0xff]
    %v4464 = vld [vmem:[#allocation13 + $0x1c0] sm:$0xff]
    %v4465 = vld [vmem:[#allocation13 + $0x1c8] sm:$0xff]
    %v4466 = vld [vmem:[#allocation13 + $0x1d0] sm:$0xff]
    %v4467 = vld [vmem:[#allocation13 + $0x1d8] sm:$0xff]
    %v4468 = vld [vmem:[#allocation13 + $0x1e0] sm:$0xff]
    %v4469 = vld [vmem:[#allocation13 + $0x1e8] sm:$0xff]
    %v4470 = vld [vmem:[#allocation13 + $0x1f0] sm:$0xff]
    %v4471 = vld [vmem:[#allocation13 + $0x1f8] sm:$0xff]
    %4472 = vmatprep.subr.mxu0 %v4409
    %4473 = vmatpush1.msra.mxu0 %v4408
    %4474 = vmatprep.subr.mxu0 %v4413
    %4475 = vmatpush1.msra.mxu0 %v4412
    %4476 = vmatprep.subr.mxu0 %v4417
    %4477 = vmatpush1.msra.mxu0 %v4416
    %4478 = vmatprep.subr.mxu0 %v4421
    %4479 = vmatpush1.msra.mxu0 %v4420
    %4480 = vmatprep.subr.mxu0 %v4425
    %4481 = vmatpush1.msra.mxu0 %v4424
    %4482 = vmatprep.subr.mxu0 %v4429
    %4483 = vmatpush1.msra.mxu0 %v4428
    %4484 = vmatprep.subr.mxu0 %v4433
    %4485 = vmatpush1.msra.mxu0 %v4432
    %4486 = vmatprep.subr.mxu0 %v4437
    %4487 = vmatpush1.msra.mxu0 %v4436
    %4488 = vmatprep.subr.mxu0 %v4441
    %4489 = vmatpush1.msra.mxu0 %v4440
    %4490 = vmatprep.subr.mxu0 %v4445
    %4491 = vmatpush1.msra.mxu0 %v4444
    %4492 = vmatprep.subr.mxu0 %v4449
    %4493 = vmatpush1.msra.mxu0 %v4448
    %4494 = vmatprep.subr.mxu0 %v4453
    %4495 = vmatpush1.msra.mxu0 %v4452
    %4496 = vmatprep.subr.mxu0 %v4457
    %4497 = vmatpush1.msra.mxu0 %v4456
    %4498 = vmatprep.subr.mxu0 %v4461
    %4499 = vmatpush1.msra.mxu0 %v4460
    %4500 = vmatprep.subr.mxu0 %v4465
    %4501 = vmatpush1.msra.mxu0 %v4464
    %4502 = vmatprep.subr.mxu0 %v4469
    %4503 = vmatpush1.msra.mxu0 %v4468
    %4504 = vmatprep.subr.mxu0 0.0
    %4505 = vmatpush1.msra.mxu0 0.0
    %4506 = vmatprep.subr.mxu0 0.0
    %4507 = vmatpush1.msra.mxu0 0.0
    %4508 = vmatprep.subr.mxu0 0.0
    %4509 = vmatpush1.msra.mxu0 0.0
    %4510 = vmatprep.subr.mxu0 0.0
    %4511 = vmatpush1.msra.mxu0 0.0
    %4512 = vmatprep.subr.mxu0 0.0
    %4513 = vmatpush1.msra.mxu0 0.0
    %4514 = vmatprep.subr.mxu0 0.0
    %4515 = vmatpush1.msra.mxu0 0.0
    %4516 = vmatprep.subr.mxu0 0.0
    %4517 = vmatpush1.msra.mxu0 0.0
    %4518 = vmatprep.subr.mxu0 0.0
    %4519 = vmatpush1.msra.mxu0 0.0
    %4520 = vmatprep.subr.mxu0 0.0
    %4521 = vmatpush1.msra.mxu0 0.0
    %4522 = vmatprep.subr.mxu0 0.0
    %4523 = vmatpush1.msra.mxu0 0.0
    %4524 = vmatprep.subr.mxu0 0.0
    %4525 = vmatpush1.msra.mxu0 0.0
    %4526 = vmatprep.subr.mxu0 0.0
    %4527 = vmatpush1.msra.mxu0 0.0
    %4528 = vmatprep.subr.mxu0 0.0
    %4529 = vmatpush1.msra.mxu0 0.0
    %4530 = vmatprep.subr.mxu0 0.0
    %4531 = vmatpush1.msra.mxu0 0.0
    %4532 = vmatprep.subr.mxu0 0.0
    %4533 = vmatpush1.msra.mxu0 0.0
    %4534 = vmatprep.subr.mxu0 0.0
    %4535 = vmatpush1.msra.mxu0 0.0
    %4536 = vmatprep.mubr.f32.mxu0 0.0
    %4537 = vmatmul.mubr.f32.gmra.mrb[0].mxu0 %v4402
    %v4538 = vpop.f32.mrb[0].mxu0
    %v4539 = vadd.f32 0.0, %v4538
    %v4540 = vpop.f32.mrb[0].mxu0
    %v4541 = vadd.f32 0.0, %v4540
    %4542 = vdwg.mxu0
    %4543 = vmatprep.subr.mxu0 %v4411
    %4544 = vmatpush1.msra.mxu0 %v4410
    %4545 = vmatprep.subr.mxu0 %v4415
    %4546 = vmatpush1.msra.mxu0 %v4414
    %4547 = vmatprep.subr.mxu0 %v4419
    %4548 = vmatpush1.msra.mxu0 %v4418
    %4549 = vmatprep.subr.mxu0 %v4423
    %4550 = vmatpush1.msra.mxu0 %v4422
    %4551 = vmatprep.subr.mxu0 %v4427
    %4552 = vmatpush1.msra.mxu0 %v4426
    %4553 = vmatprep.subr.mxu0 %v4431
    %4554 = vmatpush1.msra.mxu0 %v4430
    %4555 = vmatprep.subr.mxu0 %v4435
    %4556 = vmatpush1.msra.mxu0 %v4434
    %4557 = vmatprep.subr.mxu0 %v4439
    %4558 = vmatpush1.msra.mxu0 %v4438
    %4559 = vmatprep.subr.mxu0 %v4443
    %4560 = vmatpush1.msra.mxu0 %v4442
    %4561 = vmatprep.subr.mxu0 %v4447
    %4562 = vmatpush1.msra.mxu0 %v4446
    %4563 = vmatprep.subr.mxu0 %v4451
    %4564 = vmatpush1.msra.mxu0 %v4450
    %4565 = vmatprep.subr.mxu0 %v4455
    %4566 = vmatpush1.msra.mxu0 %v4454
    %4567 = vmatprep.subr.mxu0 %v4459
    %4568 = vmatpush1.msra.mxu0 %v4458
    %4569 = vmatprep.subr.mxu0 %v4463
    %4570 = vmatpush1.msra.mxu0 %v4462
    %4571 = vmatprep.subr.mxu0 %v4467
    %4572 = vmatpush1.msra.mxu0 %v4466
    %4573 = vmatprep.subr.mxu0 %v4471
    %4574 = vmatpush1.msra.mxu0 %v4470
    %4575 = vmatprep.subr.mxu0 0.0
    %4576 = vmatpush1.msra.mxu0 0.0
    %4577 = vmatprep.subr.mxu0 0.0
    %4578 = vmatpush1.msra.mxu0 0.0
    %4579 = vmatprep.subr.mxu0 0.0
    %4580 = vmatpush1.msra.mxu0 0.0
    %4581 = vmatprep.subr.mxu0 0.0
    %4582 = vmatpush1.msra.mxu0 0.0
    %4583 = vmatprep.subr.mxu0 0.0
    %4584 = vmatpush1.msra.mxu0 0.0
    %4585 = vmatprep.subr.mxu0 0.0
    %4586 = vmatpush1.msra.mxu0 0.0
    %4587 = vmatprep.subr.mxu0 0.0
    %4588 = vmatpush1.msra.mxu0 0.0
    %4589 = vmatprep.subr.mxu0 0.0
    %4590 = vmatpush1.msra.mxu0 0.0
    %4591 = vmatprep.subr.mxu0 0.0
    %4592 = vmatpush1.msra.mxu0 0.0
    %4593 = vmatprep.subr.mxu0 0.0
    %4594 = vmatpush1.msra.mxu0 0.0
    %4595 = vmatprep.subr.mxu0 0.0
    %4596 = vmatpush1.msra.mxu0 0.0
    %4597 = vmatprep.subr.mxu0 0.0
    %4598 = vmatpush1.msra.mxu0 0.0
    %4599 = vmatprep.subr.mxu0 0.0
    %4600 = vmatpush1.msra.mxu0 0.0
    %4601 = vmatprep.subr.mxu0 0.0
    %4602 = vmatpush1.msra.mxu0 0.0
    %4603 = vmatprep.subr.mxu0 0.0
    %4604 = vmatpush1.msra.mxu0 0.0
    %4605 = vmatprep.subr.mxu0 0.0
    %4606 = vmatpush1.msra.mxu0 0.0
    %4607 = vmatprep.mubr.f32.mxu0 0.0
    %4608 = vmatmul.mubr.f32.gmra.mrb[0].mxu0 %v4402
    %v4609 = vpop.f32.mrb[0].mxu0
    %v4610 = vadd.f32 0.0, %v4609
    %v4611 = vpop.f32.mrb[0].mxu0
    %v4612 = vadd.f32 0.0, %v4611
    %4613 = vdwg.mxu0
    %v4614 = vadd.f32 %v4404, %v4539
    %v4615 = vadd.f32 %v4405, %v4541
    %v4616 = vadd.f32 %v4406, %v4610
    %v4617 = vadd.f32 %v4407, %v4612
    %v4618 = vxor.u32 %v4614, 2147483648
    %v4619 = vxor.u32 %v4615, 2147483648
    %v4620 = vxor.u32 %v4616, 2147483648
    %v4621 = vmul.f32 %v4618, 1.442695
    %v4622 = vpow.pop %v4621
    %v4623 = vmul.f32 %v4619, 1.442695
    %v4624 = vpow.pop %v4623
    %v4625 = vmul.f32 %v4620, 1.442695
    %v4626 = vpow.pop %v4625
    %v4627 = vadd.f32 %v4622, 1.0
    %v4628 = vadd.f32 %v4624, 1.0
    %v4629 = vadd.f32 %v4626, 1.0
    %v4630 = vrcp.pop %v4627
    %v4631 = vmul.f32 1.0, %v4630
    %v4632 = vrcp.pop %v4628
    %v4633 = vmul.f32 1.0, %v4632
    %v4634 = vrcp.pop %v4629
    %v4635 = vmul.f32 1.0, %v4634
    %v4636 = vtanh.pop %v4617
    %v4637 = vmul.f32 %v4633, %v4400
    %v4638 = vmul.f32 %v4631, %v4636
    %v4639 = vadd.f32 %v4637, %v4638
    %v4640 = vtanh.pop %v4639
    %v4641 = vmul.f32 %v4635, %v4640
    %4642 = vst [vmem:[#allocation4 + $0x38] sm:$0xff] %v4641
    %v4643 = vld [vmem:[#allocation4] sm:$0xff]
    %v4644 = vld [vmem:[#allocation4 + $0x8] sm:$0xff]
    %v4645 = vld [vmem:[#allocation4 + $0x10] sm:$0xff]
    %v4646 = vld [vmem:[#allocation4 + $0x18] sm:$0xff]
    %v4647 = vld [vmem:[#allocation4 + $0x20] sm:$0xff]
    %v4648 = vld [vmem:[#allocation4 + $0x28] sm:$0xff]
    %v4649 = vld [vmem:[#allocation4 + $0x30] sm:$0xff]
    %v4650 = vld [vmem:[#allocation4 + $0x38] sm:$0xff]
    %v4651 = vld [vmem:[#allocation14] sm:$0xff]
    %v4652 = vld [vmem:[#allocation14 + $0x8] sm:$0xff]
    %v4653 = vld [vmem:[#allocation14 + $0x10] sm:$0xff]
    %v4654 = vld [vmem:[#allocation14 + $0x18] sm:$0xff]
    %v4655 = vld [vmem:[#allocation14 + $0x20] sm:$0xff]
    %v4656 = vld [vmem:[#allocation14 + $0x28] sm:$0xff]
    %v4657 = vld [vmem:[#allocation14 + $0x30] sm:$0xff]
    %v4658 = vld [vmem:[#allocation14 + $0x38] sm:$0xff]
    %v4659 = vld [vmem:[#allocation14 + $0x40] sm:$0xff]
    %v4660 = vld [vmem:[#allocation14 + $0x48] sm:$0xff]
    %v4661 = vld [vmem:[#allocation14 + $0x50] sm:$0xff]
    %v4662 = vld [vmem:[#allocation14 + $0x58] sm:$0xff]
    %v4663 = vld [vmem:[#allocation14 + $0x60] sm:$0xff]
    %v4664 = vld [vmem:[#allocation14 + $0x68] sm:$0xff]
    %v4665 = vld [vmem:[#allocation14 + $0x70] sm:$0xff]
    %v4666 = vld [vmem:[#allocation14 + $0x78] sm:$0xff]
    %v4667 = vld [vmem:[%s8] sm:$0x1]
    %v4669 = vlaneseq
    %v4670 = vshrl.u32 %v4669, 7
    %v4671 = vsub.s32 0, %v4670
    %v4672 = vrot.slane %v4667, %v4671
    %4674 = vmatprep.subr.mxu0 0.0
    %4675 = vmatpush1.msra.mxu0 %v4651
    %4676 = vmatprep.subr.mxu0 0.0
    %4677 = vmatpush1.msra.mxu0 %v4652
    %4678 = vmatprep.subr.mxu0 0.0
    %4679 = vmatpush1.msra.mxu0 %v4653
    %4680 = vmatprep.subr.mxu0 0.0
    %4681 = vmatpush1.msra.mxu0 %v4654
    %4682 = vmatprep.subr.mxu0 0.0
    %4683 = vmatpush1.msra.mxu0 %v4655
    %4684 = vmatprep.subr.mxu0 0.0
    %4685 = vmatpush1.msra.mxu0 %v4656
    %4686 = vmatprep.subr.mxu0 0.0
    %4687 = vmatpush1.msra.mxu0 %v4657
    %4688 = vmatprep.subr.mxu0 0.0
    %4689 = vmatpush1.msra.mxu0 %v4658
    %4690 = vmatprep.subr.mxu0 0.0
    %4691 = vmatpush1.msra.mxu0 %v4659
    %4692 = vmatprep.subr.mxu0 0.0
    %4693 = vmatpush1.msra.mxu0 %v4660
    %4694 = vmatprep.subr.mxu0 0.0
    %4695 = vmatpush1.msra.mxu0 %v4661
    %4696 = vmatprep.subr.mxu0 0.0
    %4697 = vmatpush1.msra.mxu0 %v4662
    %4698 = vmatprep.subr.mxu0 0.0
    %4699 = vmatpush1.msra.mxu0 %v4663
    %4700 = vmatprep.subr.mxu0 0.0
    %4701 = vmatpush1.msra.mxu0 %v4664
    %4702 = vmatprep.subr.mxu0 0.0
    %4703 = vmatpush1.msra.mxu0 %v4665
    %4704 = vmatprep.subr.mxu0 0.0
    %4705 = vmatpush1.msra.mxu0 %v4666
    %4706 = vmatprep.subr.mxu0 0.0
    %4707 = vmatpush1.msra.mxu0 0.0
    %4708 = vmatprep.subr.mxu0 0.0
    %4709 = vmatpush1.msra.mxu0 0.0
    %4710 = vmatprep.subr.mxu0 0.0
    %4711 = vmatpush1.msra.mxu0 0.0
    %4712 = vmatprep.subr.mxu0 0.0
    %4713 = vmatpush1.msra.mxu0 0.0
    %4714 = vmatprep.subr.mxu0 0.0
    %4715 = vmatpush1.msra.mxu0 0.0
    %4716 = vmatprep.subr.mxu0 0.0
    %4717 = vmatpush1.msra.mxu0 0.0
    %4718 = vmatprep.subr.mxu0 0.0
    %4719 = vmatpush1.msra.mxu0 0.0
    %4720 = vmatprep.subr.mxu0 0.0
    %4721 = vmatpush1.msra.mxu0 0.0
    %4722 = vmatprep.subr.mxu0 0.0
    %4723 = vmatpush1.msra.mxu0 0.0
    %4724 = vmatprep.subr.mxu0 0.0
    %4725 = vmatpush1.msra.mxu0 0.0
    %4726 = vmatprep.subr.mxu0 0.0
    %4727 = vmatpush1.msra.mxu0 0.0
    %4728 = vmatprep.subr.mxu0 0.0
    %4729 = vmatpush1.msra.mxu0 0.0
    %4730 = vmatprep.subr.mxu0 0.0
    %4731 = vmatpush1.msra.mxu0 0.0
    %4732 = vmatprep.subr.mxu0 0.0
    %4733 = vmatpush1.msra.mxu0 0.0
    %4734 = vmatprep.subr.mxu0 0.0
    %4735 = vmatpush1.msra.mxu0 0.0
    %4736 = vmatprep.subr.mxu0 0.0
    %4737 = vmatpush1.msra.mxu0 0.0
    %4738 = vmatprep.mubr.f32.mxu0 0.0
    %4739 = vmatmul.mubr.f32.gmra.mrb[0].mxu0 %v4643
    %v4740 = vpop.f32.mrb[0].mxu0
    %v4741 = vadd.f32 %v4672, %v4740
    %v4742 = vpop.f32.mrb[0].mxu0
    %4743 = vmatprep.mubr.f32.mxu0 0.0
    %4744 = vmatmul.mubr.f32.gmra.mrb[0].mxu0 %v4644
    %v4745 = vpop.f32.mrb[0].mxu0
    %v4746 = vadd.f32 %v4672, %v4745
    %v4747 = vpop.f32.mrb[0].mxu0
    %4748 = vmatprep.mubr.f32.mxu0 0.0
    %4749 = vmatmul.mubr.f32.gmra.mrb[0].mxu0 %v4645
    %v4750 = vpop.f32.mrb[0].mxu0
    %v4751 = vadd.f32 %v4672, %v4750
    %v4752 = vpop.f32.mrb[0].mxu0
    %4753 = vmatprep.mubr.f32.mxu0 0.0
    %4754 = vmatmul.mubr.f32.gmra.mrb[0].mxu0 %v4646
    %v4755 = vpop.f32.mrb[0].mxu0
    %v4756 = vadd.f32 %v4672, %v4755
    %v4757 = vpop.f32.mrb[0].mxu0
    %4758 = vmatprep.mubr.f32.mxu0 0.0
    %4759 = vmatmul.mubr.f32.gmra.mrb[0].mxu0 %v4647
    %v4760 = vpop.f32.mrb[0].mxu0
    %v4761 = vadd.f32 %v4672, %v4760
    %v4762 = vpop.f32.mrb[0].mxu0
    %4763 = vmatprep.mubr.f32.mxu0 0.0
    %4764 = vmatmul.mubr.f32.gmra.mrb[0].mxu0 %v4648
    %v4765 = vpop.f32.mrb[0].mxu0
    %v4766 = vadd.f32 %v4672, %v4765
    %v4767 = vpop.f32.mrb[0].mxu0
    %4768 = vmatprep.mubr.f32.mxu0 0.0
    %4769 = vmatmul.mubr.f32.gmra.mrb[0].mxu0 %v4649
    %v4770 = vpop.f32.mrb[0].mxu0
    %v4771 = vadd.f32 %v4672, %v4770
    %v4772 = vpop.f32.mrb[0].mxu0
    %4773 = vmatprep.mubr.f32.mxu0 0.0
    %4774 = vmatmul.mubr.f32.gmra.mrb[0].mxu0 %v4650
    %v4775 = vpop.f32.mrb[0].mxu0
    %v4776 = vadd.f32 %v4672, %v4775
    %v4777 = vpop.f32.mrb[0].mxu0
    %4778 = vdwg.mxu0
    %4779 = vst [vmem:[#allocation16] sm:$0xff] %v4741
    %4780 = vst [vmem:[#allocation16 + $0x8] sm:$0xff] %v4746
    %4781 = vst [vmem:[#allocation16 + $0x10] sm:$0xff] %v4751
    %4782 = vst [vmem:[#allocation16 + $0x18] sm:$0xff] %v4756
    %4783 = vst [vmem:[#allocation16 + $0x20] sm:$0xff] %v4761
    %4784 = vst [vmem:[#allocation16 + $0x28] sm:$0xff] %v4766
    %4785 = vst [vmem:[#allocation16 + $0x30] sm:$0xff] %v4771
    %4786 = vst [vmem:[#allocation16 + $0x38] sm:$0xff] %v4776
    // Predicated region
    $region62: #{tpu_custom_call.1} parent=1 // pred_check
      _
    $region63: #{tpu_custom_call.1} parent=1 // pred_check_branch
      %4788 = sbr.rel (0) target = $region65
    $region64: #{tpu_custom_call.1} parent=1 // pred_region
      %s4790 = ssub.s32 1024, 1024
      %4791 = vsyncadd [#allocation7], %s4790
      %s4792 = sshll.u32 [#allocation16], 4
      %s4793 = int_to_ptr.vmem [resolvable:$true] %s4792
      %4798 = dma.vmem_to_hbm [thread:$0]  %s4793, 1024, %s9, [#allocation7], 128, 128, 8
    $region65: #{tpu_custom_call.1} parent=1 // pred_fallthru
      _
    // Predicated region
    $region66: #{tpu_custom_call.1} parent=1 // pred_check
      _
    $region67: #{tpu_custom_call.1} parent=1 // pred_check_branch
      %4800 = sbr.rel (0) target = $region69
    $region68: #{tpu_custom_call.1} parent=1 // pred_region
      %4801 = dma.done [#allocation7], 1024
    $region69: #{tpu_custom_call.1} parent=1 // pred_fallthru
      _
    %4802 = vsyncpa [#allocation6], 1
    %4803 = vsyncpa [#allocation9], 1
    %4804 = vsyncpa [#allocation12], 1
    %4805 = vsyncpa [#allocation15], 1
    %4806 = vsyncpa [#allocation7], 1

</llo_original>
